<compile_context>
chip_gen: v6e
topology: v6e:2x2x1
jax: 0.10.0
libtpu: 0.0.40
codegen_flags: <defaults>
</compile_context>

<pallas_src>
import functools
import math

import jax
import jax.numpy as jnp
from jax.experimental import pallas as pl
from jax.experimental.pallas import tpu as pltpu


# ---------------------------------------------------------------------------
# Fused AttentionBlock kernel (one batch element per grid step)
# ---------------------------------------------------------------------------

def _attention_block_kernel(x_ref, wqkv_ref, bqkv_ref, wproj_ref, bproj_ref,
                            o_ref, *, num_heads):
    """Fused AttentionBlock forward for one batch element.

    x_ref    : (1, T, C)  f32   activations, spatial flattened, channels last
    wqkv_ref : (C, 3C)    bf16  qkv 1x1-conv weight (matmul form, i.e. W^T)
    bqkv_ref : (1, 3C)    f32   qkv bias
    wproj_ref: (C, C)     bf16  proj_out 1x1-conv weight (matmul form)
    bproj_ref: (1, C)     f32   proj_out bias
    o_ref    : (1, T, C)  f32   x + proj_out(attention(qkv(x)))
    """
    x = x_ref[0]                                   # (T, C) f32
    C = x.shape[-1]
    ch = C // num_heads
    scale = ch ** -0.25                            # 1 / sqrt(sqrt(ch))

    # qkv projection (1x1 conv == per-position matmul over channels).
    qkv = jnp.dot(x.astype(jnp.bfloat16), wqkv_ref[...],
                  preferred_element_type=jnp.float32) + bqkv_ref[...]   # (T, 3C) f32

    # Per-head attention.  The PyTorch reshape (b, 3C, T) -> (b*nh, 3*ch, T)
    # places head h's q|k|v contiguously at channel block [3*ch*h : 3*ch*(h+1)].
    head_outs = []
    for h in range(num_heads):
        base = 3 * ch * h
        q = (qkv[:, base:base + ch] * scale).astype(jnp.bfloat16)           # (T, ch)
        k = (qkv[:, base + ch:base + 2 * ch] * scale).astype(jnp.bfloat16)  # (T, ch)
        v = qkv[:, base + 2 * ch:base + 3 * ch].astype(jnp.bfloat16)        # (T, ch)

        # scores[t, s] = sum_c q[t, c] * k[s, c]   (contract last dim of both)
        s = jax.lax.dot_general(q, k, (((1,), (1,)), ((), ())),
                                preferred_element_type=jnp.float32)         # (T, T) f32

        # softmax over the key axis, in f32 (matches reference weight.float()).
        m = jnp.max(s, axis=-1, keepdims=True)
        p = jnp.exp(s - m)
        p = p * pl.reciprocal(jnp.sum(p, axis=-1, keepdims=True), approx=True)

        head_outs.append(jnp.dot(p.astype(jnp.bfloat16), v,
                                 preferred_element_type=jnp.float32))       # (T, ch) f32

    attn = head_outs[0] if num_heads == 1 else jnp.concatenate(head_outs, axis=-1)

    # Output projection + residual add (f32).
    proj = jnp.dot(attn.astype(jnp.bfloat16), wproj_ref[...],
                   preferred_element_type=jnp.float32) + bproj_ref[...]     # (T, C)
    o_ref[0] = x + proj


# ---------------------------------------------------------------------------
# Wrapper: layout glue (NC* -> (T, C) channels-last) + pallas_call
# ---------------------------------------------------------------------------

def attention_block(x, params, *, num_heads=1):
    """x: (b, c, *spatial) f32 -> (b, c, *spatial) f32."""
    b, c = x.shape[0], x.shape[1]
    spatial = x.shape[2:]
    T = math.prod(spatial)
    assert c % num_heads == 0

    # (b, c, *spatial) -> (b, T, c): channels on the lane dim for lane-dense IO.
    x_tc = jnp.transpose(x.reshape(b, c, T), (0, 2, 1)).astype(jnp.float32)

    kernel = functools.partial(_attention_block_kernel, num_heads=num_heads)
    out_tc = pl.pallas_call(
        kernel,
        out_shape=jax.ShapeDtypeStruct((b, T, c), jnp.float32),
        grid=(b,),
        in_specs=[
            pl.BlockSpec((1, T, c), lambda n: (n, 0, 0)),     # x
            pl.BlockSpec((c, 3 * c), lambda n: (0, 0)),       # wqkv (resident)
            pl.BlockSpec((1, 3 * c), lambda n: (0, 0)),       # bqkv
            pl.BlockSpec((c, c), lambda n: (0, 0)),           # wproj
            pl.BlockSpec((1, c), lambda n: (0, 0)),           # bproj
        ],
        out_specs=pl.BlockSpec((1, T, c), lambda n: (n, 0, 0)),
        compiler_params=pltpu.CompilerParams(
            dimension_semantics=("parallel",)),
    )(x_tc, params["wqkv"], params["bqkv"], params["wproj"], params["bproj"])

    return jnp.transpose(out_tc, (0, 2, 1)).reshape(b, c, *spatial)


# ---------------------------------------------------------------------------
# Parameter init (deterministic, synthetic)
# ---------------------------------------------------------------------------

def init_params(key, channels):
    c = channels
    k1, k2, k3, k4 = jax.random.split(key, 4)
    wqkv = (jax.random.normal(k1, (c, 3 * c), jnp.float32)
            / math.sqrt(c)).astype(jnp.bfloat16)
    bqkv = 0.01 * jax.random.normal(k2, (1, 3 * c), jnp.float32)
    # NOTE: the reference zero-inits proj_out (zero_module), which would make
    # the block an exact identity at construction time.  Random weights here
    # exercise the same forward graph; set them to zeros to reproduce the
    # init-time behavior exactly.
    wproj = (jax.random.normal(k3, (c, c), jnp.float32)
             / math.sqrt(c)).astype(jnp.bfloat16)
    bproj = 0.01 * jax.random.normal(k4, (1, c), jnp.float32)
    return {"wqkv": wqkv, "bqkv": bqkv, "wproj": wproj, "bproj": bproj}


# ---------------------------------------------------------------------------
# main
# ---------------------------------------------------------------------------

if __name__ == "__main__":
    key = jax.random.PRNGKey(0)
    kx, kp = jax.random.split(key)

    # Small but lane-dense shapes: C=128 channels, 16x16 spatial -> T=256.
    b, c, h, w = 2, 128, 16, 16
    num_heads = 2

    x = jax.random.normal(kx, (b, c, h, w), jnp.float32)
    params = init_params(kp, c)

    # use_checkpoint / checkpoint() is a training-time memory optimization and
    # is a no-op for the forward pass -> omitted.
    fwd = jax.jit(lambda img: attention_block(img, params, num_heads=num_heads))
    out = fwd(x)
    out = jax.block_until_ready(out)

    assert out.shape == (b, c, h, w), out.shape
    assert bool(jnp.all(jnp.isfinite(out)))
    print("KERNEL_OK")
</pallas_src>

<mosaic_0001>
module attributes {stable_mosaic.version = 11 : i64} {
  func.func @_attention_block_kernel(%arg0: i32, %arg1: memref<1x256x128xf32, #tpu.memory_space<vmem>>, %arg2: memref<128x384xbf16, #tpu.memory_space<vmem>>, %arg3: memref<1x384xf32, #tpu.memory_space<vmem>>, %arg4: memref<128x128xbf16, #tpu.memory_space<vmem>>, %arg5: memref<1x128xf32, #tpu.memory_space<vmem>>, %arg6: memref<1x256x128xf32, #tpu.memory_space<vmem>>) attributes {dimension_semantics = [#tpu.dimension_semantics<parallel>], iteration_bounds = array<i64: 2>, scalar_prefetch = 0 : i64, scratch_operands = 0 : i64, tpu.core_type = #tpu.core_type<tc>, window_params = [{transform_indices = @transform_0, window_bounds = array<i64: 1, 256, 128>}, {pipeline_mode = #tpu.pipeline_mode<synchronous>, transform_indices = @transform_1, window_bounds = array<i64: 128, 384>}, {pipeline_mode = #tpu.pipeline_mode<synchronous>, transform_indices = @transform_2, window_bounds = array<i64: 1, 384>}, {pipeline_mode = #tpu.pipeline_mode<synchronous>, transform_indices = @transform_3, window_bounds = array<i64: 128, 128>}, {pipeline_mode = #tpu.pipeline_mode<synchronous>, transform_indices = @transform_4, window_bounds = array<i64: 1, 128>}, {transform_indices = @transform_5, window_bounds = array<i64: 1, 256, 128>}]} {
    %c0 = arith.constant 0 : index
    %c0_0 = arith.constant 0 : index
    %c0_1 = arith.constant 0 : index
    %0 = vector.load %arg1[%c0, %c0_0, %c0_1] : memref<1x256x128xf32, #tpu.memory_space<vmem>>, vector<1x256x128xf32>
    %1 = vector.shape_cast %0 : vector<1x256x128xf32> to vector<256x128xf32>
    %2 = arith.truncf %1 : vector<256x128xf32> to vector<256x128xbf16>
    %c0_2 = arith.constant 0 : index
    %c0_3 = arith.constant 0 : index
    %3 = vector.load %arg2[%c0_2, %c0_3] : memref<128x384xbf16, #tpu.memory_space<vmem>>, vector<128x384xbf16>
    %cst = arith.constant dense<0.000000e+00> : vector<256x384xf32>
    %4 = tpu.matmul %2, %3, %cst {dimension_numbers = #tpu.dot_dimension_numbers<[1], [0], [0], [1], [0, 0, 1, 1], [], []>} : vector<256x128xbf16>, vector<128x384xbf16>, vector<256x384xf32> -> vector<256x384xf32>
    %c0_4 = arith.constant 0 : index
    %c0_5 = arith.constant 0 : index
    %5 = vector.load %arg3[%c0_4, %c0_5] : memref<1x384xf32, #tpu.memory_space<vmem>>, vector<1x384xf32>
    %6 = vector.broadcast %5 : vector<1x384xf32> to vector<256x384xf32>
    %7 = arith.addf %4, %6 : vector<256x384xf32>
    %8 = vector.extract_strided_slice %7 {offsets = [0, 0], sizes = [256, 64], strides = [1, 1]} : vector<256x384xf32> to vector<256x64xf32>
    %cst_6 = arith.constant 0.353553385 : f32
    %9 = vector.broadcast %cst_6 : f32 to vector<256x64xf32>
    %10 = arith.mulf %8, %9 : vector<256x64xf32>
    %11 = arith.truncf %10 : vector<256x64xf32> to vector<256x64xbf16>
    %12 = vector.extract_strided_slice %7 {offsets = [0, 64], sizes = [256, 64], strides = [1, 1]} : vector<256x384xf32> to vector<256x64xf32>
    %cst_7 = arith.constant 0.353553385 : f32
    %13 = vector.broadcast %cst_7 : f32 to vector<256x64xf32>
    %14 = arith.mulf %12, %13 : vector<256x64xf32>
    %15 = arith.truncf %14 : vector<256x64xf32> to vector<256x64xbf16>
    %16 = vector.extract_strided_slice %7 {offsets = [0, 128], sizes = [256, 64], strides = [1, 1]} : vector<256x384xf32> to vector<256x64xf32>
    %17 = arith.truncf %16 : vector<256x64xf32> to vector<256x64xbf16>
    %cst_8 = arith.constant dense<0.000000e+00> : vector<256x256xf32>
    %18 = tpu.matmul %11, %15, %cst_8 {dimension_numbers = #tpu.dot_dimension_numbers<[1], [1], [0], [0], [0, 0, 1, 0], [], []>} : vector<256x64xbf16>, vector<256x64xbf16>, vector<256x256xf32> -> vector<256x256xf32>
    %cst_9 = arith.constant dense<0xFF800000> : vector<256xf32>
    %19 = vector.multi_reduction <maximumf>, %18, %cst_9 [1] : vector<256x256xf32> to vector<256xf32>
    %20 = vector.shape_cast %19 : vector<256xf32> to vector<256x1xf32>
    %21 = vector.broadcast %20 : vector<256x1xf32> to vector<256x256xf32>
    %22 = arith.subf %18, %21 : vector<256x256xf32>
    %23 = math.exp %22 : vector<256x256xf32>
    %cst_10 = arith.constant dense<0.000000e+00> : vector<256xf32>
    %24 = vector.multi_reduction <add>, %23, %cst_10 [1] : vector<256x256xf32> to vector<256xf32>
    %25 = vector.shape_cast %24 : vector<256xf32> to vector<256x1xf32>
    %26 = tpu.reciprocal %25 {approx = true} : vector<256x1xf32> -> vector<256x1xf32>
    %27 = vector.broadcast %26 : vector<256x1xf32> to vector<256x256xf32>
    %28 = arith.mulf %23, %27 : vector<256x256xf32>
    %29 = arith.truncf %28 : vector<256x256xf32> to vector<256x256xbf16>
    %cst_11 = arith.constant dense<0.000000e+00> : vector<256x64xf32>
    %30 = tpu.matmul %29, %17, %cst_11 {dimension_numbers = #tpu.dot_dimension_numbers<[1], [0], [0], [1], [0, 0, 1, 1], [], []>} : vector<256x256xbf16>, vector<256x64xbf16>, vector<256x64xf32> -> vector<256x64xf32>
    %31 = vector.extract_strided_slice %7 {offsets = [0, 192], sizes = [256, 64], strides = [1, 1]} : vector<256x384xf32> to vector<256x64xf32>
    %cst_12 = arith.constant 0.353553385 : f32
    %32 = vector.broadcast %cst_12 : f32 to vector<256x64xf32>
    %33 = arith.mulf %31, %32 : vector<256x64xf32>
    %34 = arith.truncf %33 : vector<256x64xf32> to vector<256x64xbf16>
    %35 = vector.extract_strided_slice %7 {offsets = [0, 256], sizes = [256, 64], strides = [1, 1]} : vector<256x384xf32> to vector<256x64xf32>
    %cst_13 = arith.constant 0.353553385 : f32
    %36 = vector.broadcast %cst_13 : f32 to vector<256x64xf32>
    %37 = arith.mulf %35, %36 : vector<256x64xf32>
    %38 = arith.truncf %37 : vector<256x64xf32> to vector<256x64xbf16>
    %39 = vector.extract_strided_slice %7 {offsets = [0, 320], sizes = [256, 64], strides = [1, 1]} : vector<256x384xf32> to vector<256x64xf32>
    %40 = arith.truncf %39 : vector<256x64xf32> to vector<256x64xbf16>
    %cst_14 = arith.constant dense<0.000000e+00> : vector<256x256xf32>
    %41 = tpu.matmul %34, %38, %cst_14 {dimension_numbers = #tpu.dot_dimension_numbers<[1], [1], [0], [0], [0, 0, 1, 0], [], []>} : vector<256x64xbf16>, vector<256x64xbf16>, vector<256x256xf32> -> vector<256x256xf32>
    %cst_15 = arith.constant dense<0xFF800000> : vector<256xf32>
    %42 = vector.multi_reduction <maximumf>, %41, %cst_15 [1] : vector<256x256xf32> to vector<256xf32>
    %43 = vector.shape_cast %42 : vector<256xf32> to vector<256x1xf32>
    %44 = vector.broadcast %43 : vector<256x1xf32> to vector<256x256xf32>
    %45 = arith.subf %41, %44 : vector<256x256xf32>
    %46 = math.exp %45 : vector<256x256xf32>
    %cst_16 = arith.constant dense<0.000000e+00> : vector<256xf32>
    %47 = vector.multi_reduction <add>, %46, %cst_16 [1] : vector<256x256xf32> to vector<256xf32>
    %48 = vector.shape_cast %47 : vector<256xf32> to vector<256x1xf32>
    %49 = tpu.reciprocal %48 {approx = true} : vector<256x1xf32> -> vector<256x1xf32>
    %50 = vector.broadcast %49 : vector<256x1xf32> to vector<256x256xf32>
    %51 = arith.mulf %46, %50 : vector<256x256xf32>
    %52 = arith.truncf %51 : vector<256x256xf32> to vector<256x256xbf16>
    %cst_17 = arith.constant dense<0.000000e+00> : vector<256x64xf32>
    %53 = tpu.matmul %52, %40, %cst_17 {dimension_numbers = #tpu.dot_dimension_numbers<[1], [0], [0], [1], [0, 0, 1, 1], [], []>} : vector<256x256xbf16>, vector<256x64xbf16>, vector<256x64xf32> -> vector<256x64xf32>
    %54 = tpu.concatenate %30, %53 in 1 : vector<256x64xf32>, vector<256x64xf32> -> vector<256x128xf32>
    %55 = arith.truncf %54 : vector<256x128xf32> to vector<256x128xbf16>
    %c0_18 = arith.constant 0 : index
    %c0_19 = arith.constant 0 : index
    %56 = vector.load %arg4[%c0_18, %c0_19] : memref<128x128xbf16, #tpu.memory_space<vmem>>, vector<128x128xbf16>
    %cst_20 = arith.constant dense<0.000000e+00> : vector<256x128xf32>
    %57 = tpu.matmul %55, %56, %cst_20 {dimension_numbers = #tpu.dot_dimension_numbers<[1], [0], [0], [1], [0, 0, 1, 1], [], []>} : vector<256x128xbf16>, vector<128x128xbf16>, vector<256x128xf32> -> vector<256x128xf32>
    %c0_21 = arith.constant 0 : index
    %c0_22 = arith.constant 0 : index
    %58 = vector.load %arg5[%c0_21, %c0_22] : memref<1x128xf32, #tpu.memory_space<vmem>>, vector<1x128xf32>
    %59 = vector.broadcast %58 : vector<1x128xf32> to vector<256x128xf32>
    %60 = arith.addf %57, %59 : vector<256x128xf32>
    %61 = arith.addf %1, %60 : vector<256x128xf32>
    %c0_23 = arith.constant 0 : index
    %c0_24 = arith.constant 0 : index
    %c0_25 = arith.constant 0 : index
    %62 = vector.load %arg6[%c0_23, %c0_24, %c0_25] : memref<1x256x128xf32, #tpu.memory_space<vmem>>, vector<1x256x128xf32>
    %63 = vector.shape_cast %62 : vector<1x256x128xf32> to vector<256x128xf32>
    %64 = vector.shape_cast %61 : vector<256x128xf32> to vector<1x256x128xf32>
    tpu.vector_store %arg6[%c0_23, %c0_24, %c0_25], %64 {strides = array<i32>} : memref<1x256x128xf32, #tpu.memory_space<vmem>>, vector<1x256x128xf32>,
    return
  }
  func.func @transform_0(%arg0: i32) -> (i32, i32, i32) {
    %c0_i32 = arith.constant 0 : i32
    %c0_i32_0 = arith.constant 0 : i32
    %c0_i32_1 = arith.constant 0 : i32
    return %arg0, %c0_i32, %c0_i32_0 : i32, i32, i32
  }
  func.func @transform_1(%arg0: i32) -> (i32, i32) {
    %c0_i32 = arith.constant 0 : i32
    %c0_i32_0 = arith.constant 0 : i32
    %c0_i32_1 = arith.constant 0 : i32
    return %c0_i32, %c0_i32_0 : i32, i32
  }
  func.func @transform_2(%arg0: i32) -> (i32, i32) {
    %c0_i32 = arith.constant 0 : i32
    %c0_i32_0 = arith.constant 0 : i32
    %c0_i32_1 = arith.constant 0 : i32
    return %c0_i32, %c0_i32_0 : i32, i32
  }
  func.func @transform_3(%arg0: i32) -> (i32, i32) {
    %c0_i32 = arith.constant 0 : i32
    %c0_i32_0 = arith.constant 0 : i32
    %c0_i32_1 = arith.constant 0 : i32
    return %c0_i32, %c0_i32_0 : i32, i32
  }
  func.func @transform_4(%arg0: i32) -> (i32, i32) {
    %c0_i32 = arith.constant 0 : i32
    %c0_i32_0 = arith.constant 0 : i32
    %c0_i32_1 = arith.constant 0 : i32
    return %c0_i32, %c0_i32_0 : i32, i32
  }
  func.func @transform_5(%arg0: i32) -> (i32, i32, i32) {
    %c0_i32 = arith.constant 0 : i32
    %c0_i32_0 = arith.constant 0 : i32
    %c0_i32_1 = arith.constant 0 : i32
    return %arg0, %c0_i32, %c0_i32_0 : i32, i32, i32
  }
}

</mosaic_0001>

<llo_original>
// kernel: _lambda_.1
$region0: #{_lambda_.1}
  #allocation0 [shape = 'u32[]', space=smem, size = 0x4, offset = 0x4, fixed_abs, tag = 'smem constant byte address 0x4 - core index']
  #allocation1 [shape = 'u32[144,128]{1,0:T(1,128)}', space=vmem, size = 0x12000, scoped, tag = 'internal scratch']
  %s0 = inlined_call_operand.hbm [shape: f32[2,256,128], index: 0, kind: input, shape index: {}]
  %s1 = inlined_call_operand.hbm [shape: bf16[128,384], index: 1, kind: input, shape index: {}]
  %s2 = inlined_call_operand.vmem [shape: f32[1,384], index: 2, kind: input, shape index: {}]
  %s3 = inlined_call_operand.hbm [shape: bf16[128,128], index: 3, kind: input, shape index: {}]
  %s4 = inlined_call_operand.vmem [shape: f32[1,128], index: 4, kind: input, shape index: {}]
  %s5 = inlined_call_operand.hbm [shape: f32[2,256,128], index: 5, kind: output, shape index: {}]
  %s6 = sld [smem:[#allocation0]]
  $region65: #{_lambda_.1} parent=0
    _
  %s8 = ssub.s32 1, %s6
  %s9 = scalar_select 0, %s8, %s6
  $region1: #{_lambda_.1} parent=0
    #allocation2 [shape = 'u8[262144]{0}', space=vmem, size = 0x40000, scoped, tag = 'input window, operand 0']
    #allocation3 [shape = 's32[2]{0}', space=sflag, size = 0x8, scoped, tag = 'scoped memory for _lambda_.1']
    #allocation4 [shape = 's32[2]{0}', space=sflag, size = 0x8, scoped, tag = 'scoped memory for _lambda_.1']
    #allocation5 [shape = 'u8[98304]{0}', space=vmem, size = 0x18000, scoped, tag = 'input window, operand 1, single buffered']
    #allocation6 [shape = 's32[1]{0}', space=sflag, size = 0x4, scoped, tag = 'scoped memory for _lambda_.1']
    #allocation7 [shape = 'u8[32768]{0}', space=vmem, size = 0x8000, scoped, tag = 'input window, operand 3, single buffered']
    #allocation8 [shape = 'u8[262144]{0}', space=vmem, size = 0x40000, scoped, tag = 'output window, operand 0']
    %10 = vsyncpa [#allocation3], 0
    %s11 = scalar_lea.sflag [#allocation3], 1
    %12 = vsyncpa %s11, 0
    %13 = vsyncpa [#allocation6], 0
    %14 = vsyncpa [#allocation4], 0
    %s15 = scalar_lea.sflag [#allocation4], 1
    %16 = vsyncpa %s15, 0
    loop: start=0, step=1, limit=4
    $region2: #{_lambda_.1} parent=1 // loop_pre_header
      _
    $region3: #{_lambda_.1} parent=1 // loop_header
      %s18 = sphi 0, %s22
      %p19 = scmp.ge.s32.totalorder %s18, 4
      %s28 = sphi 0, %s30
      %s31 = sphi 0, %s28
      %s32 = sphi 0, %s31
      %s48 = sphi 0, %s32
      %s52 = sphi 0, %s52
      %s54 = sphi 0, %s52
      %s55 = sphi 0, %s54
      %s69 = sphi 0, %s55
      %s73 = sphi 0, %s73
      %s75 = sphi 0, %s73
      %s76 = sphi 0, %s75
      %s90 = sphi 0, %s76
      %s94 = sphi 0, %s94
      %s96 = sphi 0, %s94
      %s97 = sphi 0, %s96
      %s111 = sphi 0, %s97
      %s115 = sphi 0, %s115
      %s117 = sphi 0, %s115
      %s118 = sphi 0, %s117
      %s132 = sphi 0, %s118
      %s138 = sphi 0, %s140
      %s141 = sphi 0, %s138
      %s142 = sphi 0, %s141
      %s158 = sphi 0, %s142
    $region4: #{_lambda_.1} parent=1 // loop_header_branch
      %21 = sbr.rel (%p19) target = $region8
    $region5: #{_lambda_.1} parent=1 // loop_body
      %s23 = ssub.s32 %s18, 1
      %s24 = ssub.s32 %s18, 2
      %s25 = sadd.s32 %s18, 1
      %s26 = ssub.s32 %s18, %s25
      %p27 = scmp.eq.s32.totalorder %s26, 0
      %s29 = sadd.s32 %s28, 1
      %s30 = scalar_select %p27, %s28, %s29
      %p33 = pneg %p27
      %p34 = scmp.eq.s32.totalorder %s18, 1
      %p35 = por %p33, %p34
      %p36 = scmp.ne.s32.totalorder %s28, %s31
      %p37 = scmp.eq.s32.totalorder %s18, 0
      %p38 = por %p36, %p37
      %p39 = scmp.ne.s32.totalorder %s28, %s31
      %p40 = scmp.eq.s32.totalorder %s23, 1
      %p41 = por %p39, %p40
      %p42 = scmp.ne.s32.totalorder %s31, %s32
      %p43 = scmp.eq.s32.totalorder %s23, 0
      %p44 = por %p42, %p43
      %p45 = scmp.ne.s32.totalorder %s31, %s32
      %p46 = scmp.eq.s32.totalorder %s24, 1
      %p47 = por %p45, %p46
      %p49 = scmp.ne.s32.totalorder %s32, %s48
      %p50 = scmp.eq.s32.totalorder %s24, 0
      %p51 = por %p49, %p50
      %s53 = sadd.s32 %s52, 1
      %p56 = scmp.eq.s32.totalorder %s18, 1
      %p57 = scmp.ne.s32.totalorder %s52, %s54
      %p58 = scmp.eq.s32.totalorder %s18, 0
      %p59 = por %p57, %p58
      %p60 = scmp.ne.s32.totalorder %s52, %s54
      %p61 = scmp.eq.s32.totalorder %s23, 1
      %p62 = por %p60, %p61
      %p63 = scmp.ne.s32.totalorder %s54, %s55
      %p64 = scmp.eq.s32.totalorder %s23, 0
      %p65 = por %p63, %p64
      %p66 = scmp.ne.s32.totalorder %s54, %s55
      %p67 = scmp.eq.s32.totalorder %s24, 1
      %p68 = por %p66, %p67
      %p70 = scmp.ne.s32.totalorder %s55, %s69
      %p71 = scmp.eq.s32.totalorder %s24, 0
      %p72 = por %p70, %p71
      %s74 = sadd.s32 %s73, 1
      %p77 = scmp.eq.s32.totalorder %s18, 1
      %p78 = scmp.ne.s32.totalorder %s73, %s75
      %p79 = scmp.eq.s32.totalorder %s18, 0
      %p80 = por %p78, %p79
      %p81 = scmp.ne.s32.totalorder %s73, %s75
      %p82 = scmp.eq.s32.totalorder %s23, 1
      %p83 = por %p81, %p82
      %p84 = scmp.ne.s32.totalorder %s75, %s76
      %p85 = scmp.eq.s32.totalorder %s23, 0
      %p86 = por %p84, %p85
      %p87 = scmp.ne.s32.totalorder %s75, %s76
      %p88 = scmp.eq.s32.totalorder %s24, 1
      %p89 = por %p87, %p88
      %p91 = scmp.ne.s32.totalorder %s76, %s90
      %p92 = scmp.eq.s32.totalorder %s24, 0
      %p93 = por %p91, %p92
      %s95 = sadd.s32 %s94, 1
      %p98 = scmp.eq.s32.totalorder %s18, 1
      %p99 = scmp.ne.s32.totalorder %s94, %s96
      %p100 = scmp.eq.s32.totalorder %s18, 0
      %p101 = por %p99, %p100
      %p102 = scmp.ne.s32.totalorder %s94, %s96
      %p103 = scmp.eq.s32.totalorder %s23, 1
      %p104 = por %p102, %p103
      %p105 = scmp.ne.s32.totalorder %s96, %s97
      %p106 = scmp.eq.s32.totalorder %s23, 0
      %p107 = por %p105, %p106
      %p108 = scmp.ne.s32.totalorder %s96, %s97
      %p109 = scmp.eq.s32.totalorder %s24, 1
      %p110 = por %p108, %p109
      %p112 = scmp.ne.s32.totalorder %s97, %s111
      %p113 = scmp.eq.s32.totalorder %s24, 0
      %p114 = por %p112, %p113
      %s116 = sadd.s32 %s115, 1
      %p119 = scmp.eq.s32.totalorder %s18, 1
      %p120 = scmp.ne.s32.totalorder %s115, %s117
      %p121 = scmp.eq.s32.totalorder %s18, 0
      %p122 = por %p120, %p121
      %p123 = scmp.ne.s32.totalorder %s115, %s117
      %p124 = scmp.eq.s32.totalorder %s23, 1
      %p125 = por %p123, %p124
      %p126 = scmp.ne.s32.totalorder %s117, %s118
      %p127 = scmp.eq.s32.totalorder %s23, 0
      %p128 = por %p126, %p127
      %p129 = scmp.ne.s32.totalorder %s117, %s118
      %p130 = scmp.eq.s32.totalorder %s24, 1
      %p131 = por %p129, %p130
      %p133 = scmp.ne.s32.totalorder %s118, %s132
      %p134 = scmp.eq.s32.totalorder %s24, 0
      %p135 = por %p133, %p134
      %s136 = ssub.s32 %s18, %s25
      %p137 = scmp.eq.s32.totalorder %s136, 0
      %s139 = sadd.s32 %s138, 1
      %s140 = scalar_select %p137, %s138, %s139
      %p143 = pneg %p137
      %p144 = scmp.eq.s32.totalorder %s18, 1
      %p145 = por %p143, %p144
      %p146 = scmp.ne.s32.totalorder %s138, %s141
      %p147 = scmp.eq.s32.totalorder %s18, 0
      %p148 = por %p146, %p147
      %p149 = scmp.ne.s32.totalorder %s138, %s141
      %p150 = scmp.eq.s32.totalorder %s23, 1
      %p151 = por %p149, %p150
      %p152 = scmp.ne.s32.totalorder %s141, %s142
      %p153 = scmp.eq.s32.totalorder %s23, 0
      %p154 = por %p152, %p153
      %p155 = scmp.ne.s32.totalorder %s141, %s142
      %p156 = scmp.eq.s32.totalorder %s24, 1
      %p157 = por %p155, %p156
      %p159 = scmp.ne.s32.totalorder %s142, %s158
      %p160 = scmp.eq.s32.totalorder %s24, 0
      %p161 = por %p159, %p160
      %p162 = scmp.le.s32.totalorder 1, %s18
      %p163 = scmp.lt.s32.totalorder %s18, 3
      %p164 = pnand %p162, %p163
      %p165 = pneg %p164
      // Predicated region
      $region9: #{_lambda_.1} parent=5 // pred_check
        _
      $region10: #{_lambda_.1} parent=5 // pred_check_branch
        %167 = sbr.rel (%p164) target = $region12
      $region11: #{_lambda_.1} parent=5 // pred_region
        %s168 = ssub.s32 %s18, 1
        // Predicated region
        $region13: #{_lambda_.1} parent=11 // pred_check
          %p169 = pneg %p65
        $region14: #{_lambda_.1} parent=11 // pred_check_branch
          %171 = sbr.rel (%p169) target = $region16
        $region15: #{_lambda_.1} parent=11 // pred_region
          %s173 = ssub.s32 3072, 3072
          %174 = vsyncadd [#allocation6], %s173
          %s175 = sshll.u32 [#allocation5], 4
          %s176 = int_to_ptr.vmem [resolvable:$true] %s175
          %181 = dma.hbm_to_vmem [thread:$0]  %s1, 3072, %s176, [#allocation6], 192, 192, 12
        $region16: #{_lambda_.1} parent=11 // pred_fallthru
          _
        // Predicated region
        $region17: #{_lambda_.1} parent=11 // pred_check
          %p182 = pneg %p86
        $region18: #{_lambda_.1} parent=11 // pred_check_branch
          %184 = sbr.rel (%p182) target = $region20
        $region19: #{_lambda_.1} parent=11 // pred_region
          _
        $region20: #{_lambda_.1} parent=11 // pred_fallthru
          _
        // Predicated region
        $region21: #{_lambda_.1} parent=11 // pred_check
          %p185 = pneg %p107
        $region22: #{_lambda_.1} parent=11 // pred_check_branch
          %187 = sbr.rel (%p185) target = $region24
        $region23: #{_lambda_.1} parent=11 // pred_region
          %s189 = ssub.s32 1024, 1024
          %190 = vsyncadd [#allocation6], %s189
          %s191 = sshll.u32 [#allocation7], 4
          %s192 = int_to_ptr.vmem [resolvable:$true] %s191
          %197 = dma.hbm_to_vmem [thread:$0]  %s3, 1024, %s192, [#allocation6], 64, 64, 4
        $region24: #{_lambda_.1} parent=11 // pred_fallthru
          _
        // Predicated region
        $region25: #{_lambda_.1} parent=11 // pred_check
          %p198 = pneg %p128
        $region26: #{_lambda_.1} parent=11 // pred_check_branch
          %200 = sbr.rel (%p198) target = $region28
        $region27: #{_lambda_.1} parent=11 // pred_region
          _
        $region28: #{_lambda_.1} parent=11 // pred_fallthru
          _
      $region12: #{_lambda_.1} parent=5 // pred_fallthru
        _
      %p201 = scmp.lt.s32.totalorder %s18, 2
      // Predicated region
      $region29: #{_lambda_.1} parent=5 // pred_check
        %p202 = pneg %p201
      $region30: #{_lambda_.1} parent=5 // pred_check_branch
        %204 = sbr.rel (%p202) target = $region32
      $region31: #{_lambda_.1} parent=5 // pred_region
        // Predicated region
        $region33: #{_lambda_.1} parent=31 // pred_check
          %p205 = pneg %p38
        $region34: #{_lambda_.1} parent=31 // pred_check_branch
          %207 = sbr.rel (%p205) target = $region36
        $region35: #{_lambda_.1} parent=31 // pred_region
          %s208 = sand.u32 %s28, 1
          %s209 = scalar_lea.sflag [#allocation3], %s208
          %s210 = sand.u32 %s28, 1
          %s211 = smul.addr %s210, 256
          %s212 = scalar_lea.vmem [#allocation2], %s211
          %s214 = ssub.s32 4096, 4096
          %215 = vsyncadd %s209, %s214
          %s216 = smul.addr %s18, 32
          %s217 = smul.addr %s216, 128
          %s218 = scalar_lea.hbm %s0, %s217
          %s219 = sshll.u32 %s212, 4
          %s220 = int_to_ptr.vmem [resolvable:$true] %s219
          %225 = dma.hbm_to_vmem [thread:$0]  %s218, 4096, %s220, %s209, 128, 128, 8
        $region36: #{_lambda_.1} parent=31 // pred_fallthru
          _
      $region32: #{_lambda_.1} parent=5 // pred_fallthru
        _
      %p226 = scmp.le.s32.totalorder 1, %s18
      %p227 = scmp.lt.s32.totalorder %s18, 3
      %p228 = pnand %p226, %p227
      %p229 = pneg %p228
      // Predicated region
      $region37: #{_lambda_.1} parent=5 // pred_check
        _
      $region38: #{_lambda_.1} parent=5 // pred_check_branch
        %231 = sbr.rel (%p228) target = $region40
      $region39: #{_lambda_.1} parent=5 // pred_region
        %s232 = ssub.s32 %s18, 1
        %s233 = sand.u32 %s31, 1
        %s234 = scalar_lea.sflag [#allocation3], %s233
        %s235 = sand.u32 %s31, 1
        %s236 = smul.addr %s235, 256
        %s237 = scalar_lea.vmem [#allocation2], %s236
        // Predicated region
        $region41: #{_lambda_.1} parent=39 // pred_check
          %p238 = pneg %p44
        $region42: #{_lambda_.1} parent=39 // pred_check_branch
          %240 = sbr.rel (%p238) target = $region44
        $region43: #{_lambda_.1} parent=39 // pred_region
          %241 = dma.done %s234, 4096
        $region44: #{_lambda_.1} parent=39 // pred_fallthru
          _
        // Predicated region
        $region45: #{_lambda_.1} parent=39 // pred_check
          %p242 = pneg %p65
        $region46: #{_lambda_.1} parent=39 // pred_check_branch
          %244 = sbr.rel (%p242) target = $region48
        $region47: #{_lambda_.1} parent=39 // pred_region
          %245 = dma.done [#allocation6], 3072
        $region48: #{_lambda_.1} parent=39 // pred_fallthru
          _
        // Predicated region
        $region49: #{_lambda_.1} parent=39 // pred_check
          %p246 = pneg %p107
        $region50: #{_lambda_.1} parent=39 // pred_check_branch
          %248 = sbr.rel (%p246) target = $region52
        $region51: #{_lambda_.1} parent=39 // pred_region
          %249 = dma.done [#allocation6], 1024
        $region52: #{_lambda_.1} parent=39 // pred_fallthru
          _
        %s250 = sand.u32 %s31, 1
        %s251 = scalar_lea.sflag [#allocation3], %s250
        %s252 = sand.u32 %s31, 1
        %s253 = smul.addr %s252, 256
        %s254 = scalar_lea.vmem [#allocation2], %s253
        %p255 = pneg %p44
        %p256 = pneg %p41
        %p257 = pneg %p65
        %p258 = pneg %p62
        %p259 = pneg %p86
        %p260 = pneg %p83
        %p261 = pneg %p107
        %p262 = pneg %p104
        %p263 = pneg %p128
        %p264 = pneg %p125
        %p265 = pneg %p154
        %p266 = pneg %p151
        %s267 = sand.u32 %s141, 1
        %s268 = scalar_lea.sflag [#allocation4], %s267
        %s269 = sand.u32 %s141, 1
        %s270 = smul.addr %s269, 256
        %s271 = scalar_lea.vmem [#allocation8], %s270
        %v273 = vld [vmem:[%s237] sm:$0xff]
        %v274 = vld [vmem:[%s237 + $0x8] sm:$0xff]
        %v275 = vld [vmem:[%s237 + $0x10] sm:$0xff]
        %v276 = vld [vmem:[%s237 + $0x18] sm:$0xff]
        %v277 = vld [vmem:[%s237 + $0x20] sm:$0xff]
        %v278 = vld [vmem:[%s237 + $0x28] sm:$0xff]
        %v279 = vld [vmem:[%s237 + $0x30] sm:$0xff]
        %v280 = vld [vmem:[%s237 + $0x38] sm:$0xff]
        %v281 = vld [vmem:[%s237 + $0x40] sm:$0xff]
        %v282 = vld [vmem:[%s237 + $0x48] sm:$0xff]
        %v283 = vld [vmem:[%s237 + $0x50] sm:$0xff]
        %v284 = vld [vmem:[%s237 + $0x58] sm:$0xff]
        %v285 = vld [vmem:[%s237 + $0x60] sm:$0xff]
        %v286 = vld [vmem:[%s237 + $0x68] sm:$0xff]
        %v287 = vld [vmem:[%s237 + $0x70] sm:$0xff]
        %v288 = vld [vmem:[%s237 + $0x78] sm:$0xff]
        %v289 = vld [vmem:[%s237 + $0x80] sm:$0xff]
        %v290 = vld [vmem:[%s237 + $0x88] sm:$0xff]
        %v291 = vld [vmem:[%s237 + $0x90] sm:$0xff]
        %v292 = vld [vmem:[%s237 + $0x98] sm:$0xff]
        %v293 = vld [vmem:[%s237 + $0xa0] sm:$0xff]
        %v294 = vld [vmem:[%s237 + $0xa8] sm:$0xff]
        %v295 = vld [vmem:[%s237 + $0xb0] sm:$0xff]
        %v296 = vld [vmem:[%s237 + $0xb8] sm:$0xff]
        %v297 = vld [vmem:[%s237 + $0xc0] sm:$0xff]
        %v298 = vld [vmem:[%s237 + $0xc8] sm:$0xff]
        %v299 = vld [vmem:[%s237 + $0xd0] sm:$0xff]
        %v300 = vld [vmem:[%s237 + $0xd8] sm:$0xff]
        %v301 = vld [vmem:[%s237 + $0xe0] sm:$0xff]
        %v302 = vld [vmem:[%s237 + $0xe8] sm:$0xff]
        %v303 = vld [vmem:[%s237 + $0xf0] sm:$0xff]
        %v304 = vld [vmem:[%s237 + $0xf8] sm:$0xff]
        %v305 = vpack.c.bf16 %v274, %v273
        %v306 = vpack.c.bf16 %v276, %v275
        %v307 = vpack.c.bf16 %v278, %v277
        %v308 = vpack.c.bf16 %v280, %v279
        %v309 = vpack.c.bf16 %v282, %v281
        %v310 = vpack.c.bf16 %v284, %v283
        %v311 = vpack.c.bf16 %v286, %v285
        %v312 = vpack.c.bf16 %v288, %v287
        %v313 = vpack.c.bf16 %v290, %v289
        %v314 = vpack.c.bf16 %v292, %v291
        %v315 = vpack.c.bf16 %v294, %v293
        %v316 = vpack.c.bf16 %v296, %v295
        %v317 = vpack.c.bf16 %v298, %v297
        %v318 = vpack.c.bf16 %v300, %v299
        %v319 = vpack.c.bf16 %v302, %v301
        %v320 = vpack.c.bf16 %v304, %v303
        %v321 = vld [vmem:[#allocation5] sm:$0xff]
        %v322 = vld [vmem:[#allocation5 + $0x8] sm:$0xf]
        %v323 = vld [vmem:[#allocation5 + $0xc] sm:$0xff]
        %v324 = vld [vmem:[#allocation5 + $0x14] sm:$0xf]
        %v325 = vld [vmem:[#allocation5 + $0x18] sm:$0xff]
        %v326 = vld [vmem:[#allocation5 + $0x20] sm:$0xf]
        %v327 = vld [vmem:[#allocation5 + $0x24] sm:$0xff]
        %v328 = vld [vmem:[#allocation5 + $0x2c] sm:$0xf]
        %v329 = vld [vmem:[#allocation5 + $0x30] sm:$0xff]
        %v330 = vld [vmem:[#allocation5 + $0x38] sm:$0xf]
        %v331 = vld [vmem:[#allocation5 + $0x3c] sm:$0xff]
        %v332 = vld [vmem:[#allocation5 + $0x44] sm:$0xf]
        %v333 = vld [vmem:[#allocation5 + $0x48] sm:$0xff]
        %v334 = vld [vmem:[#allocation5 + $0x50] sm:$0xf]
        %v335 = vld [vmem:[#allocation5 + $0x54] sm:$0xff]
        %v336 = vld [vmem:[#allocation5 + $0x5c] sm:$0xf]
        %v337 = vld [vmem:[#allocation5 + $0x60] sm:$0xff]
        %v338 = vld [vmem:[#allocation5 + $0x68] sm:$0xf]
        %v339 = vld [vmem:[#allocation5 + $0x6c] sm:$0xff]
        %v340 = vld [vmem:[#allocation5 + $0x74] sm:$0xf]
        %v341 = vld [vmem:[#allocation5 + $0x78] sm:$0xff]
        %v342 = vld [vmem:[#allocation5 + $0x80] sm:$0xf]
        %v343 = vld [vmem:[#allocation5 + $0x84] sm:$0xff]
        %v344 = vld [vmem:[#allocation5 + $0x8c] sm:$0xf]
        %v345 = vld [vmem:[#allocation5 + $0x90] sm:$0xff]
        %v346 = vld [vmem:[#allocation5 + $0x98] sm:$0xf]
        %v347 = vld [vmem:[#allocation5 + $0x9c] sm:$0xff]
        %v348 = vld [vmem:[#allocation5 + $0xa4] sm:$0xf]
        %v349 = vld [vmem:[#allocation5 + $0xa8] sm:$0xff]
        %v350 = vld [vmem:[#allocation5 + $0xb0] sm:$0xf]
        %v351 = vld [vmem:[#allocation5 + $0xb4] sm:$0xff]
        %v352 = vld [vmem:[#allocation5 + $0xbc] sm:$0xf]
        %v353 = vld [vmem:[%s2] sm:$0x7]
        %v355 = vlaneseq
        %v356 = vshrl.u32 %v355, 7
        %v357 = vsub.s32 0, %v356
        %v358 = vrot.slane %v353, %v357
        %v359 = vlaneseq
        %v360 = vshrl.u32 %v359, 7
        %v361 = vsub.s32 1, %v360
        %v362 = vrot.slane %v353, %v361
        %v363 = vlaneseq
        %v364 = vshrl.u32 %v363, 7
        %v365 = vsub.s32 2, %v364
        %v366 = vrot.slane %v353, %v365
        %v402 = vunpack.c.l.b16 %v321
        %v403 = vunpack.c.h.b16 %v321
        %v404 = vunpack.c.l.b16 %v322
        %v405 = vunpack.c.l.b16 %v323
        %v406 = vunpack.c.h.b16 %v323
        %v407 = vunpack.c.l.b16 %v324
        %v408 = vunpack.c.l.b16 %v325
        %v409 = vunpack.c.h.b16 %v325
        %v410 = vunpack.c.l.b16 %v326
        %v411 = vunpack.c.l.b16 %v327
        %v412 = vunpack.c.h.b16 %v327
        %v413 = vunpack.c.l.b16 %v328
        %v414 = vunpack.c.l.b16 %v329
        %v415 = vunpack.c.h.b16 %v329
        %v416 = vunpack.c.l.b16 %v330
        %v417 = vunpack.c.l.b16 %v331
        %v418 = vunpack.c.h.b16 %v331
        %v419 = vunpack.c.l.b16 %v332
        %v420 = vunpack.c.l.b16 %v333
        %v421 = vunpack.c.h.b16 %v333
        %v422 = vunpack.c.l.b16 %v334
        %v423 = vunpack.c.l.b16 %v335
        %v424 = vunpack.c.h.b16 %v335
        %v425 = vunpack.c.l.b16 %v336
        %v426 = vunpack.c.l.b16 %v337
        %v427 = vunpack.c.h.b16 %v337
        %v428 = vunpack.c.l.b16 %v338
        %v429 = vunpack.c.l.b16 %v339
        %v430 = vunpack.c.h.b16 %v339
        %v431 = vunpack.c.l.b16 %v340
        %v432 = vunpack.c.l.b16 %v341
        %v433 = vunpack.c.h.b16 %v341
        %v434 = vunpack.c.l.b16 %v342
        %v435 = vunpack.c.l.b16 %v343
        %v436 = vunpack.c.h.b16 %v343
        %v437 = vunpack.c.l.b16 %v344
        %v438 = vunpack.c.l.b16 %v345
        %v439 = vunpack.c.h.b16 %v345
        %v440 = vunpack.c.l.b16 %v346
        %v441 = vunpack.c.l.b16 %v347
        %v442 = vunpack.c.h.b16 %v347
        %v443 = vunpack.c.l.b16 %v348
        %v444 = vunpack.c.l.b16 %v349
        %v445 = vunpack.c.h.b16 %v349
        %v446 = vunpack.c.l.b16 %v350
        %v447 = vunpack.c.l.b16 %v351
        %v448 = vunpack.c.h.b16 %v351
        %v449 = vunpack.c.l.b16 %v352
        %v450 = vpack.c.b16 %v405, %v402
        %v451 = vpack.c.b16 %v406, %v403
        %v452 = vpack.c.b16 %v407, %v404
        %v453 = vpack.c.b16 %v411, %v408
        %v454 = vpack.c.b16 %v412, %v409
        %v455 = vpack.c.b16 %v413, %v410
        %v456 = vpack.c.b16 %v417, %v414
        %v457 = vpack.c.b16 %v418, %v415
        %v458 = vpack.c.b16 %v419, %v416
        %v459 = vpack.c.b16 %v423, %v420
        %v460 = vpack.c.b16 %v424, %v421
        %v461 = vpack.c.b16 %v425, %v422
        %v462 = vpack.c.b16 %v429, %v426
        %v463 = vpack.c.b16 %v430, %v427
        %v464 = vpack.c.b16 %v431, %v428
        %v465 = vpack.c.b16 %v435, %v432
        %v466 = vpack.c.b16 %v436, %v433
        %v467 = vpack.c.b16 %v437, %v434
        %v468 = vpack.c.b16 %v441, %v438
        %v469 = vpack.c.b16 %v442, %v439
        %v470 = vpack.c.b16 %v443, %v440
        %v471 = vpack.c.b16 %v447, %v444
        %v472 = vpack.c.b16 %v448, %v445
        %v473 = vpack.c.b16 %v449, %v446
        %498 = vmatprep.subr.bf16.mxu0 %v472
        %499 = vmatpush1.bf16.msra.mxu0 %v471
        %500 = vmatprep.subr.bf16.mxu0 %v469
        %501 = vmatpush1.bf16.msra.mxu0 %v468
        %502 = vmatprep.subr.bf16.mxu0 %v466
        %503 = vmatpush1.bf16.msra.mxu0 %v465
        %504 = vmatprep.subr.bf16.mxu0 %v463
        %505 = vmatpush1.bf16.msra.mxu0 %v462
        %506 = vmatprep.subr.bf16.mxu0 %v460
        %507 = vmatpush1.bf16.msra.mxu0 %v459
        %508 = vmatprep.subr.bf16.mxu0 %v457
        %509 = vmatpush1.bf16.msra.mxu0 %v456
        %510 = vmatprep.subr.bf16.mxu0 %v454
        %511 = vmatpush1.bf16.msra.mxu0 %v453
        %512 = vmatprep.subr.bf16.mxu0 %v451
        %513 = vmatpush1.bf16.msra.mxu0 %v450
        %514 = vmatprep.subr.bf16.mxu0 0
        %515 = vmatpush2.bf16.msra.mxu0 0
        %516 = vmatprep.subr.bf16.mxu0 0
        %517 = vmatpush2.bf16.msra.mxu0 0
        %518 = vmatprep.subr.bf16.mxu0 0
        %519 = vmatpush2.bf16.msra.mxu0 0
        %520 = vmatprep.subr.bf16.mxu0 0
        %521 = vmatpush2.bf16.msra.mxu0 0
        %522 = vmatprep.subr.bf16.mxu0 0
        %523 = vmatpush2.bf16.msra.mxu0 0
        %524 = vmatprep.subr.bf16.mxu0 0
        %525 = vmatpush2.bf16.msra.mxu0 0
        %526 = vmatprep.subr.bf16.mxu0 0
        %527 = vmatpush2.bf16.msra.mxu0 0
        %528 = vmatprep.subr.bf16.mxu0 0
        %529 = vmatpush2.bf16.msra.mxu0 0
        %530 = vmatprep.mubr.bf16.mxu0 0
        %531 = vmatmul.mubr.bf16.gmra.mxu0 %v305
        %v532 = vpop.f32.mrf.mxu0
        %v533 = vadd.f32 %v358, %v532
        %v534 = vpop.f32.mrf.mxu0
        %v535 = vadd.f32 %v362, %v534
        %v536 = vpop.f32.mrf.mxu0
        %v537 = vadd.f32 %v358, %v536
        %v538 = vpop.f32.mrf.mxu0
        %v539 = vadd.f32 %v362, %v538
        %540 = vmatprep.mubr.bf16.mxu0 0
        %541 = vmatmul.mubr.bf16.gmra.mxu0 %v306
        %v542 = vpop.f32.mrf.mxu0
        %v543 = vadd.f32 %v358, %v542
        %v544 = vpop.f32.mrf.mxu0
        %v545 = vadd.f32 %v362, %v544
        %v546 = vpop.f32.mrf.mxu0
        %v547 = vadd.f32 %v358, %v546
        %v548 = vpop.f32.mrf.mxu0
        %v549 = vadd.f32 %v362, %v548
        %550 = vmatprep.mubr.bf16.mxu0 0
        %551 = vmatmul.mubr.bf16.gmra.mxu0 %v307
        %v552 = vpop.f32.mrf.mxu0
        %v553 = vadd.f32 %v358, %v552
        %v554 = vpop.f32.mrf.mxu0
        %v555 = vadd.f32 %v362, %v554
        %v556 = vpop.f32.mrf.mxu0
        %v557 = vadd.f32 %v358, %v556
        %v558 = vpop.f32.mrf.mxu0
        %v559 = vadd.f32 %v362, %v558
        %560 = vmatprep.mubr.bf16.mxu0 0
        %561 = vmatmul.mubr.bf16.gmra.mxu0 %v308
        %v562 = vpop.f32.mrf.mxu0
        %v563 = vadd.f32 %v358, %v562
        %v564 = vpop.f32.mrf.mxu0
        %v565 = vadd.f32 %v362, %v564
        %v566 = vpop.f32.mrf.mxu0
        %v567 = vadd.f32 %v358, %v566
        %v568 = vpop.f32.mrf.mxu0
        %v569 = vadd.f32 %v362, %v568
        %570 = vmatprep.mubr.bf16.mxu0 0
        %571 = vmatmul.mubr.bf16.gmra.mxu0 %v309
        %v572 = vpop.f32.mrf.mxu0
        %v573 = vadd.f32 %v358, %v572
        %v574 = vpop.f32.mrf.mxu0
        %v575 = vadd.f32 %v362, %v574
        %v576 = vpop.f32.mrf.mxu0
        %v577 = vadd.f32 %v358, %v576
        %v578 = vpop.f32.mrf.mxu0
        %v579 = vadd.f32 %v362, %v578
        %580 = vmatprep.mubr.bf16.mxu0 0
        %581 = vmatmul.mubr.bf16.gmra.mxu0 %v310
        %v582 = vpop.f32.mrf.mxu0
        %v583 = vadd.f32 %v358, %v582
        %v584 = vpop.f32.mrf.mxu0
        %v585 = vadd.f32 %v362, %v584
        %v586 = vpop.f32.mrf.mxu0
        %v587 = vadd.f32 %v358, %v586
        %v588 = vpop.f32.mrf.mxu0
        %v589 = vadd.f32 %v362, %v588
        %590 = vmatprep.mubr.bf16.mxu0 0
        %591 = vmatmul.mubr.bf16.gmra.mxu0 %v311
        %v592 = vpop.f32.mrf.mxu0
        %v593 = vadd.f32 %v358, %v592
        %v594 = vpop.f32.mrf.mxu0
        %v595 = vadd.f32 %v362, %v594
        %v596 = vpop.f32.mrf.mxu0
        %v597 = vadd.f32 %v358, %v596
        %v598 = vpop.f32.mrf.mxu0
        %v599 = vadd.f32 %v362, %v598
        %600 = vmatprep.mubr.bf16.mxu0 0
        %601 = vmatmul.mubr.bf16.gmra.mxu0 %v312
        %v602 = vpop.f32.mrf.mxu0
        %v603 = vadd.f32 %v358, %v602
        %v604 = vpop.f32.mrf.mxu0
        %v605 = vadd.f32 %v362, %v604
        %v606 = vpop.f32.mrf.mxu0
        %v607 = vadd.f32 %v358, %v606
        %v608 = vpop.f32.mrf.mxu0
        %v609 = vadd.f32 %v362, %v608
        %610 = vmatprep.mubr.bf16.mxu0 0
        %611 = vmatmul.mubr.bf16.gmra.mxu0 %v313
        %v612 = vpop.f32.mrf.mxu0
        %v613 = vadd.f32 %v358, %v612
        %v614 = vpop.f32.mrf.mxu0
        %v615 = vadd.f32 %v362, %v614
        %v616 = vpop.f32.mrf.mxu0
        %v617 = vadd.f32 %v358, %v616
        %v618 = vpop.f32.mrf.mxu0
        %v619 = vadd.f32 %v362, %v618
        %620 = vmatprep.mubr.bf16.mxu0 0
        %621 = vmatmul.mubr.bf16.gmra.mxu0 %v314
        %v622 = vpop.f32.mrf.mxu0
        %v623 = vadd.f32 %v358, %v622
        %v624 = vpop.f32.mrf.mxu0
        %v625 = vadd.f32 %v362, %v624
        %v626 = vpop.f32.mrf.mxu0
        %v627 = vadd.f32 %v358, %v626
        %v628 = vpop.f32.mrf.mxu0
        %v629 = vadd.f32 %v362, %v628
        %630 = vmatprep.mubr.bf16.mxu0 0
        %631 = vmatmul.mubr.bf16.gmra.mxu0 %v315
        %v632 = vpop.f32.mrf.mxu0
        %v633 = vadd.f32 %v358, %v632
        %v634 = vpop.f32.mrf.mxu0
        %v635 = vadd.f32 %v362, %v634
        %v636 = vpop.f32.mrf.mxu0
        %v637 = vadd.f32 %v358, %v636
        %v638 = vpop.f32.mrf.mxu0
        %v639 = vadd.f32 %v362, %v638
        %640 = vmatprep.mubr.bf16.mxu0 0
        %641 = vmatmul.mubr.bf16.gmra.mxu0 %v316
        %v642 = vpop.f32.mrf.mxu0
        %v643 = vadd.f32 %v358, %v642
        %v644 = vpop.f32.mrf.mxu0
        %v645 = vadd.f32 %v362, %v644
        %v646 = vpop.f32.mrf.mxu0
        %v647 = vadd.f32 %v358, %v646
        %v648 = vpop.f32.mrf.mxu0
        %v649 = vadd.f32 %v362, %v648
        %650 = vmatprep.mubr.bf16.mxu0 0
        %651 = vmatmul.mubr.bf16.gmra.mxu0 %v317
        %v652 = vpop.f32.mrf.mxu0
        %v653 = vadd.f32 %v358, %v652
        %v654 = vpop.f32.mrf.mxu0
        %v655 = vadd.f32 %v362, %v654
        %v656 = vpop.f32.mrf.mxu0
        %v657 = vadd.f32 %v358, %v656
        %v658 = vpop.f32.mrf.mxu0
        %v659 = vadd.f32 %v362, %v658
        %660 = vmatprep.mubr.bf16.mxu0 0
        %661 = vmatmul.mubr.bf16.gmra.mxu0 %v318
        %v662 = vpop.f32.mrf.mxu0
        %v663 = vadd.f32 %v358, %v662
        %v664 = vpop.f32.mrf.mxu0
        %v665 = vadd.f32 %v362, %v664
        %v666 = vpop.f32.mrf.mxu0
        %v667 = vadd.f32 %v358, %v666
        %v668 = vpop.f32.mrf.mxu0
        %v669 = vadd.f32 %v362, %v668
        %670 = vmatprep.mubr.bf16.mxu0 0
        %671 = vmatmul.mubr.bf16.gmra.mxu0 %v319
        %v672 = vpop.f32.mrf.mxu0
        %v673 = vadd.f32 %v358, %v672
        %v674 = vpop.f32.mrf.mxu0
        %v675 = vadd.f32 %v362, %v674
        %v676 = vpop.f32.mrf.mxu0
        %v677 = vadd.f32 %v358, %v676
        %v678 = vpop.f32.mrf.mxu0
        %v679 = vadd.f32 %v362, %v678
        %680 = vmatprep.mubr.bf16.mxu0 0
        %681 = vmatmul.mubr.bf16.gmra.mxu0 %v320
        %v682 = vpop.f32.mrf.mxu0
        %v683 = vadd.f32 %v358, %v682
        %v684 = vpop.f32.mrf.mxu0
        %v685 = vadd.f32 %v362, %v684
        %v686 = vpop.f32.mrf.mxu0
        %v687 = vadd.f32 %v358, %v686
        %v688 = vpop.f32.mrf.mxu0
        %v689 = vadd.f32 %v362, %v688
        %690 = vdwg.mxu0
        %691 = vmatprep.subr.bf16.mxu0 0
        %692 = vmatpush1.bf16.msra.mxu0 %v473
        %693 = vmatprep.subr.bf16.mxu0 0
        %694 = vmatpush1.bf16.msra.mxu0 %v470
        %695 = vmatprep.subr.bf16.mxu0 0
        %696 = vmatpush1.bf16.msra.mxu0 %v467
        %697 = vmatprep.subr.bf16.mxu0 0
        %698 = vmatpush1.bf16.msra.mxu0 %v464
        %699 = vmatprep.subr.bf16.mxu0 0
        %700 = vmatpush1.bf16.msra.mxu0 %v461
        %701 = vmatprep.subr.bf16.mxu0 0
        %702 = vmatpush1.bf16.msra.mxu0 %v458
        %703 = vmatprep.subr.bf16.mxu0 0
        %704 = vmatpush1.bf16.msra.mxu0 %v455
        %705 = vmatprep.subr.bf16.mxu0 0
        %706 = vmatpush1.bf16.msra.mxu0 %v452
        %707 = vmatprep.subr.bf16.mxu0 0
        %708 = vmatpush2.bf16.msra.mxu0 0
        %709 = vmatprep.subr.bf16.mxu0 0
        %710 = vmatpush2.bf16.msra.mxu0 0
        %711 = vmatprep.subr.bf16.mxu0 0
        %712 = vmatpush2.bf16.msra.mxu0 0
        %713 = vmatprep.subr.bf16.mxu0 0
        %714 = vmatpush2.bf16.msra.mxu0 0
        %715 = vmatprep.subr.bf16.mxu0 0
        %716 = vmatpush2.bf16.msra.mxu0 0
        %717 = vmatprep.subr.bf16.mxu0 0
        %718 = vmatpush2.bf16.msra.mxu0 0
        %719 = vmatprep.subr.bf16.mxu0 0
        %720 = vmatpush2.bf16.msra.mxu0 0
        %721 = vmatprep.subr.bf16.mxu0 0
        %722 = vmatpush2.bf16.msra.mxu0 0
        %723 = vmatprep.mubr.bf16.mxu0 0
        %724 = vmatmul.mubr.bf16.gmra.mxu0 %v305
        %v725 = vpop.f32.mrf.mxu0
        %v726 = vadd.f32 %v366, %v725
        %v727 = vpop.f32.mrf.mxu0
        %v728 = vpop.f32.mrf.mxu0
        %v729 = vadd.f32 %v366, %v728
        %v730 = vpop.f32.mrf.mxu0
        %731 = vmatprep.mubr.bf16.mxu0 0
        %732 = vmatmul.mubr.bf16.gmra.mxu0 %v306
        %v733 = vpop.f32.mrf.mxu0
        %v734 = vadd.f32 %v366, %v733
        %v735 = vpop.f32.mrf.mxu0
        %v736 = vpop.f32.mrf.mxu0
        %v737 = vadd.f32 %v366, %v736
        %v738 = vpop.f32.mrf.mxu0
        %739 = vmatprep.mubr.bf16.mxu0 0
        %740 = vmatmul.mubr.bf16.gmra.mxu0 %v307
        %v741 = vpop.f32.mrf.mxu0
        %v742 = vadd.f32 %v366, %v741
        %v743 = vpop.f32.mrf.mxu0
        %v744 = vpop.f32.mrf.mxu0
        %v745 = vadd.f32 %v366, %v744
        %v746 = vpop.f32.mrf.mxu0
        %747 = vmatprep.mubr.bf16.mxu0 0
        %748 = vmatmul.mubr.bf16.gmra.mxu0 %v308
        %v749 = vpop.f32.mrf.mxu0
        %v750 = vadd.f32 %v366, %v749
        %v751 = vpop.f32.mrf.mxu0
        %v752 = vpop.f32.mrf.mxu0
        %v753 = vadd.f32 %v366, %v752
        %v754 = vpop.f32.mrf.mxu0
        %755 = vmatprep.mubr.bf16.mxu0 0
        %756 = vmatmul.mubr.bf16.gmra.mxu0 %v309
        %v757 = vpop.f32.mrf.mxu0
        %v758 = vadd.f32 %v366, %v757
        %v759 = vpop.f32.mrf.mxu0
        %v760 = vpop.f32.mrf.mxu0
        %v761 = vadd.f32 %v366, %v760
        %v762 = vpop.f32.mrf.mxu0
        %763 = vmatprep.mubr.bf16.mxu0 0
        %764 = vmatmul.mubr.bf16.gmra.mxu0 %v310
        %v765 = vpop.f32.mrf.mxu0
        %v766 = vadd.f32 %v366, %v765
        %v767 = vpop.f32.mrf.mxu0
        %v768 = vpop.f32.mrf.mxu0
        %v769 = vadd.f32 %v366, %v768
        %v770 = vpop.f32.mrf.mxu0
        %771 = vmatprep.mubr.bf16.mxu0 0
        %772 = vmatmul.mubr.bf16.gmra.mxu0 %v311
        %v773 = vpop.f32.mrf.mxu0
        %v774 = vadd.f32 %v366, %v773
        %v775 = vpop.f32.mrf.mxu0
        %v776 = vpop.f32.mrf.mxu0
        %v777 = vadd.f32 %v366, %v776
        %v778 = vpop.f32.mrf.mxu0
        %779 = vmatprep.mubr.bf16.mxu0 0
        %780 = vmatmul.mubr.bf16.gmra.mxu0 %v312
        %v781 = vpop.f32.mrf.mxu0
        %v782 = vadd.f32 %v366, %v781
        %v783 = vpop.f32.mrf.mxu0
        %v784 = vpop.f32.mrf.mxu0
        %v785 = vadd.f32 %v366, %v784
        %v786 = vpop.f32.mrf.mxu0
        %787 = vmatprep.mubr.bf16.mxu0 0
        %788 = vmatmul.mubr.bf16.gmra.mxu0 %v313
        %v789 = vpop.f32.mrf.mxu0
        %v790 = vadd.f32 %v366, %v789
        %v791 = vpop.f32.mrf.mxu0
        %v792 = vpop.f32.mrf.mxu0
        %v793 = vadd.f32 %v366, %v792
        %v794 = vpop.f32.mrf.mxu0
        %795 = vmatprep.mubr.bf16.mxu0 0
        %796 = vmatmul.mubr.bf16.gmra.mxu0 %v314
        %v797 = vpop.f32.mrf.mxu0
        %v798 = vadd.f32 %v366, %v797
        %v799 = vpop.f32.mrf.mxu0
        %v800 = vpop.f32.mrf.mxu0
        %v801 = vadd.f32 %v366, %v800
        %v802 = vpop.f32.mrf.mxu0
        %803 = vmatprep.mubr.bf16.mxu0 0
        %804 = vmatmul.mubr.bf16.gmra.mxu0 %v315
        %v805 = vpop.f32.mrf.mxu0
        %v806 = vadd.f32 %v366, %v805
        %v807 = vpop.f32.mrf.mxu0
        %v808 = vpop.f32.mrf.mxu0
        %v809 = vadd.f32 %v366, %v808
        %v810 = vpop.f32.mrf.mxu0
        %811 = vmatprep.mubr.bf16.mxu0 0
        %812 = vmatmul.mubr.bf16.gmra.mxu0 %v316
        %v813 = vpop.f32.mrf.mxu0
        %v814 = vadd.f32 %v366, %v813
        %v815 = vpop.f32.mrf.mxu0
        %v816 = vpop.f32.mrf.mxu0
        %v817 = vadd.f32 %v366, %v816
        %v818 = vpop.f32.mrf.mxu0
        %819 = vmatprep.mubr.bf16.mxu0 0
        %820 = vmatmul.mubr.bf16.gmra.mxu0 %v317
        %v821 = vpop.f32.mrf.mxu0
        %v822 = vadd.f32 %v366, %v821
        %v823 = vpop.f32.mrf.mxu0
        %v824 = vpop.f32.mrf.mxu0
        %v825 = vadd.f32 %v366, %v824
        %v826 = vpop.f32.mrf.mxu0
        %827 = vmatprep.mubr.bf16.mxu0 0
        %828 = vmatmul.mubr.bf16.gmra.mxu0 %v318
        %v829 = vpop.f32.mrf.mxu0
        %v830 = vadd.f32 %v366, %v829
        %v831 = vpop.f32.mrf.mxu0
        %v832 = vpop.f32.mrf.mxu0
        %v833 = vadd.f32 %v366, %v832
        %v834 = vpop.f32.mrf.mxu0
        %835 = vmatprep.mubr.bf16.mxu0 0
        %836 = vmatmul.mubr.bf16.gmra.mxu0 %v319
        %v837 = vpop.f32.mrf.mxu0
        %v838 = vadd.f32 %v366, %v837
        %v839 = vpop.f32.mrf.mxu0
        %v840 = vpop.f32.mrf.mxu0
        %v841 = vadd.f32 %v366, %v840
        %v842 = vpop.f32.mrf.mxu0
        %843 = vmatprep.mubr.bf16.mxu0 0
        %844 = vmatmul.mubr.bf16.gmra.mxu0 %v320
        %v845 = vpop.f32.mrf.mxu0
        %v846 = vadd.f32 %v366, %v845
        %v847 = vpop.f32.mrf.mxu0
        %v848 = vpop.f32.mrf.mxu0
        %v849 = vadd.f32 %v366, %v848
        %v850 = vpop.f32.mrf.mxu0
        %851 = vdwg.mxu0
        %v852 = vmul.f32 %v533, 0.35355338
        %v853 = vmul.f32 %v537, 0.35355338
        %v854 = vmul.f32 %v543, 0.35355338
        %v855 = vmul.f32 %v547, 0.35355338
        %v856 = vmul.f32 %v553, 0.35355338
        %v857 = vmul.f32 %v557, 0.35355338
        %v858 = vmul.f32 %v563, 0.35355338
        %v859 = vmul.f32 %v567, 0.35355338
        %v860 = vmul.f32 %v573, 0.35355338
        %v861 = vmul.f32 %v577, 0.35355338
        %v862 = vmul.f32 %v583, 0.35355338
        %v863 = vmul.f32 %v587, 0.35355338
        %v864 = vmul.f32 %v593, 0.35355338
        %v865 = vmul.f32 %v597, 0.35355338
        %v866 = vmul.f32 %v603, 0.35355338
        %v867 = vmul.f32 %v607, 0.35355338
        %v868 = vmul.f32 %v613, 0.35355338
        %v869 = vmul.f32 %v617, 0.35355338
        %v870 = vmul.f32 %v623, 0.35355338
        %v871 = vmul.f32 %v627, 0.35355338
        %v872 = vmul.f32 %v633, 0.35355338
        %v873 = vmul.f32 %v637, 0.35355338
        %v874 = vmul.f32 %v643, 0.35355338
        %v875 = vmul.f32 %v647, 0.35355338
        %v876 = vmul.f32 %v653, 0.35355338
        %v877 = vmul.f32 %v657, 0.35355338
        %v878 = vmul.f32 %v663, 0.35355338
        %v879 = vmul.f32 %v667, 0.35355338
        %v880 = vmul.f32 %v673, 0.35355338
        %v881 = vmul.f32 %v677, 0.35355338
        %v882 = vmul.f32 %v683, 0.35355338
        %v883 = vmul.f32 %v687, 0.35355338
        %v884 = vpack.c.bf16 %v853, %v852
        %v885 = vpack.c.bf16 %v855, %v854
        %v886 = vpack.c.bf16 %v857, %v856
        %v887 = vpack.c.bf16 %v859, %v858
        %v888 = vpack.c.bf16 %v861, %v860
        %v889 = vpack.c.bf16 %v863, %v862
        %v890 = vpack.c.bf16 %v865, %v864
        %v891 = vpack.c.bf16 %v867, %v866
        %v892 = vpack.c.bf16 %v869, %v868
        %v893 = vpack.c.bf16 %v871, %v870
        %v894 = vpack.c.bf16 %v873, %v872
        %v895 = vpack.c.bf16 %v875, %v874
        %v896 = vpack.c.bf16 %v877, %v876
        %v897 = vpack.c.bf16 %v879, %v878
        %v898 = vpack.c.bf16 %v881, %v880
        %v899 = vpack.c.bf16 %v883, %v882
        %v900 = vpack.c.bf16 %v539, %v535
        %v901 = vpack.c.bf16 %v549, %v545
        %v902 = vpack.c.bf16 %v559, %v555
        %v903 = vpack.c.bf16 %v569, %v565
        %v904 = vpack.c.bf16 %v579, %v575
        %v905 = vpack.c.bf16 %v589, %v585
        %v906 = vpack.c.bf16 %v599, %v595
        %v907 = vpack.c.bf16 %v609, %v605
        %v908 = vpack.c.bf16 %v619, %v615
        %v909 = vpack.c.bf16 %v629, %v625
        %v910 = vpack.c.bf16 %v639, %v635
        %v911 = vpack.c.bf16 %v649, %v645
        %v912 = vpack.c.bf16 %v659, %v655
        %v913 = vpack.c.bf16 %v669, %v665
        %v914 = vpack.c.bf16 %v679, %v675
        %v915 = vpack.c.bf16 %v689, %v685
        %932 = vrot.lane.b32.xlu0 %v884, 64
        %v933 = vpop.permute.xlu0 %932
        %934 = vrot.lane.b32.xlu0 %v885, 64
        %v935 = vpop.permute.xlu0 %934
        %936 = vrot.lane.b32.xlu0 %v886, 64
        %v937 = vpop.permute.xlu0 %936
        %938 = vrot.lane.b32.xlu0 %v887, 64
        %v939 = vpop.permute.xlu0 %938
        %940 = vrot.lane.b32.xlu0 %v888, 64
        %v941 = vpop.permute.xlu0 %940
        %942 = vrot.lane.b32.xlu0 %v889, 64
        %v943 = vpop.permute.xlu0 %942
        %944 = vrot.lane.b32.xlu0 %v890, 64
        %v945 = vpop.permute.xlu0 %944
        %946 = vrot.lane.b32.xlu0 %v891, 64
        %v947 = vpop.permute.xlu0 %946
        %948 = vrot.lane.b32.xlu0 %v892, 64
        %v949 = vpop.permute.xlu0 %948
        %950 = vrot.lane.b32.xlu0 %v893, 64
        %v951 = vpop.permute.xlu0 %950
        %952 = vrot.lane.b32.xlu0 %v894, 64
        %v953 = vpop.permute.xlu0 %952
        %954 = vrot.lane.b32.xlu0 %v895, 64
        %v955 = vpop.permute.xlu0 %954
        %956 = vrot.lane.b32.xlu0 %v896, 64
        %v957 = vpop.permute.xlu0 %956
        %958 = vrot.lane.b32.xlu0 %v897, 64
        %v959 = vpop.permute.xlu0 %958
        %960 = vrot.lane.b32.xlu0 %v898, 64
        %v961 = vpop.permute.xlu0 %960
        %962 = vrot.lane.b32.xlu0 %v899, 64
        %v963 = vpop.permute.xlu0 %962
        %vm964 = vcmask 523264
        %v966 = vsel %vm964, %v884, 0
        %v969 = vsel %vm964, %v885, 0
        %v972 = vsel %vm964, %v886, 0
        %v975 = vsel %vm964, %v887, 0
        %v978 = vsel %vm964, %v888, 0
        %v981 = vsel %vm964, %v889, 0
        %v984 = vsel %vm964, %v890, 0
        %v987 = vsel %vm964, %v891, 0
        %v990 = vsel %vm964, %v892, 0
        %v993 = vsel %vm964, %v893, 0
        %v996 = vsel %vm964, %v894, 0
        %v999 = vsel %vm964, %v895, 0
        %v1002 = vsel %vm964, %v896, 0
        %v1005 = vsel %vm964, %v897, 0
        %v1008 = vsel %vm964, %v898, 0
        %v1011 = vsel %vm964, %v899, 0
        %v1014 = vsel %vm964, %v933, 0
        %v1017 = vsel %vm964, %v935, 0
        %v1020 = vsel %vm964, %v937, 0
        %v1023 = vsel %vm964, %v939, 0
        %v1026 = vsel %vm964, %v941, 0
        %v1029 = vsel %vm964, %v943, 0
        %v1032 = vsel %vm964, %v945, 0
        %v1035 = vsel %vm964, %v947, 0
        %v1038 = vsel %vm964, %v949, 0
        %v1041 = vsel %vm964, %v951, 0
        %v1044 = vsel %vm964, %v953, 0
        %v1047 = vsel %vm964, %v955, 0
        %v1050 = vsel %vm964, %v957, 0
        %v1053 = vsel %vm964, %v959, 0
        %v1056 = vsel %vm964, %v961, 0
        %v1059 = vsel %vm964, %v963, 0
        %1061 = vmatprep.subr.bf16.mxu0 0
        %1062 = vmatpush1.bf16.xpose.msra.mxu0 %v1035
        %1063 = vmatprep.subr.bf16.mxu0 0
        %1064 = vmatpush1.bf16.xpose.msra.mxu0 %v1032
        %1065 = vmatprep.subr.bf16.mxu0 0
        %1066 = vmatpush1.bf16.xpose.msra.mxu0 %v1029
        %1067 = vmatprep.subr.bf16.mxu0 0
        %1068 = vmatpush1.bf16.xpose.msra.mxu0 %v1026
        %1069 = vmatprep.subr.bf16.mxu0 0
        %1070 = vmatpush1.bf16.xpose.msra.mxu0 %v1023
        %1071 = vmatprep.subr.bf16.mxu0 0
        %1072 = vmatpush1.bf16.xpose.msra.mxu0 %v1020
        %1073 = vmatprep.subr.bf16.mxu0 0
        %1074 = vmatpush1.bf16.xpose.msra.mxu0 %v1017
        %1075 = vmatprep.subr.bf16.mxu0 0
        %1076 = vmatpush1.bf16.xpose.msra.mxu0 %v1014
        %1077 = vmatprep.subr.bf16.mxu0 0
        %1078 = vmatpush2.bf16.xpose.msra.mxu0 %v1059
        %1079 = vmatprep.subr.bf16.mxu0 0
        %1080 = vmatpush2.bf16.xpose.msra.mxu0 %v1056
        %1081 = vmatprep.subr.bf16.mxu0 0
        %1082 = vmatpush2.bf16.xpose.msra.mxu0 %v1053
        %1083 = vmatprep.subr.bf16.mxu0 0
        %1084 = vmatpush2.bf16.xpose.msra.mxu0 %v1050
        %1085 = vmatprep.subr.bf16.mxu0 0
        %1086 = vmatpush2.bf16.xpose.msra.mxu0 %v1047
        %1087 = vmatprep.subr.bf16.mxu0 0
        %1088 = vmatpush2.bf16.xpose.msra.mxu0 %v1044
        %1089 = vmatprep.subr.bf16.mxu0 0
        %1090 = vmatpush2.bf16.xpose.msra.mxu0 %v1041
        %1091 = vmatprep.subr.bf16.mxu0 0
        %1092 = vmatpush2.bf16.xpose.msra.mxu0 %v1038
        %1093 = vmatprep.mubr.bf16.mxu0 0
        %1094 = vmatmul.mubr.bf16.gmra.mxu0 %v966
        %v1095 = vpop.f32.mrf.mxu0
        %v1096 = vadd.f32 0.0, %v1095
        %v1097 = vpop.f32.mrf.mxu0
        %v1098 = vadd.f32 0.0, %v1097
        %v1099 = vpop.f32.mrf.mxu0
        %v1100 = vadd.f32 0.0, %v1099
        %v1101 = vpop.f32.mrf.mxu0
        %v1102 = vadd.f32 0.0, %v1101
        %1103 = vmatprep.mubr.bf16.mxu0 0
        %1104 = vmatmul.mubr.bf16.gmra.mxu0 %v969
        %v1105 = vpop.f32.mrf.mxu0
        %v1106 = vadd.f32 0.0, %v1105
        %v1107 = vpop.f32.mrf.mxu0
        %v1108 = vadd.f32 0.0, %v1107
        %v1109 = vpop.f32.mrf.mxu0
        %v1110 = vadd.f32 0.0, %v1109
        %v1111 = vpop.f32.mrf.mxu0
        %v1112 = vadd.f32 0.0, %v1111
        %1113 = vmatprep.mubr.bf16.mxu0 0
        %1114 = vmatmul.mubr.bf16.gmra.mxu0 %v972
        %v1115 = vpop.f32.mrf.mxu0
        %v1116 = vadd.f32 0.0, %v1115
        %v1117 = vpop.f32.mrf.mxu0
        %v1118 = vadd.f32 0.0, %v1117
        %v1119 = vpop.f32.mrf.mxu0
        %v1120 = vadd.f32 0.0, %v1119
        %v1121 = vpop.f32.mrf.mxu0
        %v1122 = vadd.f32 0.0, %v1121
        %1123 = vmatprep.mubr.bf16.mxu0 0
        %1124 = vmatmul.mubr.bf16.gmra.mxu0 %v975
        %v1125 = vpop.f32.mrf.mxu0
        %v1126 = vadd.f32 0.0, %v1125
        %v1127 = vpop.f32.mrf.mxu0
        %v1128 = vadd.f32 0.0, %v1127
        %v1129 = vpop.f32.mrf.mxu0
        %v1130 = vadd.f32 0.0, %v1129
        %v1131 = vpop.f32.mrf.mxu0
        %v1132 = vadd.f32 0.0, %v1131
        %1133 = vmatprep.mubr.bf16.mxu0 0
        %1134 = vmatmul.mubr.bf16.gmra.mxu0 %v978
        %v1135 = vpop.f32.mrf.mxu0
        %v1136 = vadd.f32 0.0, %v1135
        %v1137 = vpop.f32.mrf.mxu0
        %v1138 = vadd.f32 0.0, %v1137
        %v1139 = vpop.f32.mrf.mxu0
        %v1140 = vadd.f32 0.0, %v1139
        %v1141 = vpop.f32.mrf.mxu0
        %v1142 = vadd.f32 0.0, %v1141
        %1143 = vmatprep.mubr.bf16.mxu0 0
        %1144 = vmatmul.mubr.bf16.gmra.mxu0 %v981
        %v1145 = vpop.f32.mrf.mxu0
        %v1146 = vadd.f32 0.0, %v1145
        %v1147 = vpop.f32.mrf.mxu0
        %v1148 = vadd.f32 0.0, %v1147
        %v1149 = vpop.f32.mrf.mxu0
        %v1150 = vadd.f32 0.0, %v1149
        %v1151 = vpop.f32.mrf.mxu0
        %v1152 = vadd.f32 0.0, %v1151
        %1153 = vmatprep.mubr.bf16.mxu0 0
        %1154 = vmatmul.mubr.bf16.gmra.mxu0 %v984
        %v1155 = vpop.f32.mrf.mxu0
        %v1156 = vadd.f32 0.0, %v1155
        %v1157 = vpop.f32.mrf.mxu0
        %v1158 = vadd.f32 0.0, %v1157
        %v1159 = vpop.f32.mrf.mxu0
        %v1160 = vadd.f32 0.0, %v1159
        %v1161 = vpop.f32.mrf.mxu0
        %v1162 = vadd.f32 0.0, %v1161
        %1163 = vmatprep.mubr.bf16.mxu0 0
        %1164 = vmatmul.mubr.bf16.gmra.mxu0 %v987
        %v1165 = vpop.f32.mrf.mxu0
        %v1166 = vadd.f32 0.0, %v1165
        %v1167 = vpop.f32.mrf.mxu0
        %v1168 = vadd.f32 0.0, %v1167
        %v1169 = vpop.f32.mrf.mxu0
        %v1170 = vadd.f32 0.0, %v1169
        %v1171 = vpop.f32.mrf.mxu0
        %v1172 = vadd.f32 0.0, %v1171
        %1173 = vmatprep.mubr.bf16.mxu0 0
        %1174 = vmatmul.mubr.bf16.gmra.mxu0 %v990
        %v1175 = vpop.f32.mrf.mxu0
        %v1176 = vadd.f32 0.0, %v1175
        %v1177 = vpop.f32.mrf.mxu0
        %v1178 = vadd.f32 0.0, %v1177
        %v1179 = vpop.f32.mrf.mxu0
        %v1180 = vadd.f32 0.0, %v1179
        %v1181 = vpop.f32.mrf.mxu0
        %v1182 = vadd.f32 0.0, %v1181
        %1183 = vmatprep.mubr.bf16.mxu0 0
        %1184 = vmatmul.mubr.bf16.gmra.mxu0 %v993
        %v1185 = vpop.f32.mrf.mxu0
        %v1186 = vadd.f32 0.0, %v1185
        %v1187 = vpop.f32.mrf.mxu0
        %v1188 = vadd.f32 0.0, %v1187
        %v1189 = vpop.f32.mrf.mxu0
        %v1190 = vadd.f32 0.0, %v1189
        %v1191 = vpop.f32.mrf.mxu0
        %v1192 = vadd.f32 0.0, %v1191
        %1193 = vmatprep.mubr.bf16.mxu0 0
        %1194 = vmatmul.mubr.bf16.gmra.mxu0 %v996
        %v1195 = vpop.f32.mrf.mxu0
        %v1196 = vadd.f32 0.0, %v1195
        %v1197 = vpop.f32.mrf.mxu0
        %v1198 = vadd.f32 0.0, %v1197
        %v1199 = vpop.f32.mrf.mxu0
        %v1200 = vadd.f32 0.0, %v1199
        %v1201 = vpop.f32.mrf.mxu0
        %v1202 = vadd.f32 0.0, %v1201
        %1203 = vmatprep.mubr.bf16.mxu0 0
        %1204 = vmatmul.mubr.bf16.gmra.mxu0 %v999
        %v1205 = vpop.f32.mrf.mxu0
        %v1206 = vadd.f32 0.0, %v1205
        %v1207 = vpop.f32.mrf.mxu0
        %v1208 = vadd.f32 0.0, %v1207
        %v1209 = vpop.f32.mrf.mxu0
        %v1210 = vadd.f32 0.0, %v1209
        %v1211 = vpop.f32.mrf.mxu0
        %v1212 = vadd.f32 0.0, %v1211
        %1213 = vmatprep.mubr.bf16.mxu0 0
        %1214 = vmatmul.mubr.bf16.gmra.mxu0 %v1002
        %v1215 = vpop.f32.mrf.mxu0
        %v1216 = vadd.f32 0.0, %v1215
        %v1217 = vpop.f32.mrf.mxu0
        %v1218 = vadd.f32 0.0, %v1217
        %v1219 = vpop.f32.mrf.mxu0
        %v1220 = vadd.f32 0.0, %v1219
        %v1221 = vpop.f32.mrf.mxu0
        %v1222 = vadd.f32 0.0, %v1221
        %1223 = vmatprep.mubr.bf16.mxu0 0
        %1224 = vmatmul.mubr.bf16.gmra.mxu0 %v1005
        %v1225 = vpop.f32.mrf.mxu0
        %v1226 = vadd.f32 0.0, %v1225
        %v1227 = vpop.f32.mrf.mxu0
        %v1228 = vadd.f32 0.0, %v1227
        %v1229 = vpop.f32.mrf.mxu0
        %v1230 = vadd.f32 0.0, %v1229
        %v1231 = vpop.f32.mrf.mxu0
        %v1232 = vadd.f32 0.0, %v1231
        %1233 = vmatprep.mubr.bf16.mxu0 0
        %1234 = vmatmul.mubr.bf16.gmra.mxu0 %v1008
        %v1235 = vpop.f32.mrf.mxu0
        %v1236 = vadd.f32 0.0, %v1235
        %v1237 = vpop.f32.mrf.mxu0
        %v1238 = vadd.f32 0.0, %v1237
        %v1239 = vpop.f32.mrf.mxu0
        %v1240 = vadd.f32 0.0, %v1239
        %v1241 = vpop.f32.mrf.mxu0
        %v1242 = vadd.f32 0.0, %v1241
        %1243 = vmatprep.mubr.bf16.mxu0 0
        %1244 = vmatmul.mubr.bf16.gmra.mxu0 %v1011
        %v1245 = vpop.f32.mrf.mxu0
        %v1246 = vadd.f32 0.0, %v1245
        %v1247 = vpop.f32.mrf.mxu0
        %v1248 = vadd.f32 0.0, %v1247
        %v1249 = vpop.f32.mrf.mxu0
        %v1250 = vadd.f32 0.0, %v1249
        %v1251 = vpop.f32.mrf.mxu0
        %v1252 = vadd.f32 0.0, %v1251
        %1253 = vdwg.mxu0
        %v1254 = vmax.f32 %v1096, %v1098
        %1255 = vmax.xlane.f32.xlu0 %v1254
        %v1256 = vpop.xlane.xlu0 %1255
        %v1257 = vmax.f32 %v1100, %v1102
        %1258 = vmax.xlane.f32.xlu0 %v1257
        %v1259 = vpop.xlane.xlu0 %1258
        %v1260 = vmax.f32 %v1106, %v1108
        %1261 = vmax.xlane.f32.xlu0 %v1260
        %v1262 = vpop.xlane.xlu0 %1261
        %v1263 = vmax.f32 %v1110, %v1112
        %1264 = vmax.xlane.f32.xlu0 %v1263
        %v1265 = vpop.xlane.xlu0 %1264
        %v1266 = vmax.f32 %v1116, %v1118
        %1267 = vmax.xlane.f32.xlu0 %v1266
        %v1268 = vpop.xlane.xlu0 %1267
        %v1269 = vmax.f32 %v1120, %v1122
        %1270 = vmax.xlane.f32.xlu0 %v1269
        %v1271 = vpop.xlane.xlu0 %1270
        %v1272 = vmax.f32 %v1126, %v1128
        %1273 = vmax.xlane.f32.xlu0 %v1272
        %v1274 = vpop.xlane.xlu0 %1273
        %v1275 = vmax.f32 %v1130, %v1132
        %1276 = vmax.xlane.f32.xlu0 %v1275
        %v1277 = vpop.xlane.xlu0 %1276
        %v1278 = vmax.f32 %v1136, %v1138
        %1279 = vmax.xlane.f32.xlu0 %v1278
        %v1280 = vpop.xlane.xlu0 %1279
        %v1281 = vmax.f32 %v1140, %v1142
        %1282 = vmax.xlane.f32.xlu0 %v1281
        %v1283 = vpop.xlane.xlu0 %1282
        %v1284 = vmax.f32 %v1146, %v1148
        %1285 = vmax.xlane.f32.xlu0 %v1284
        %v1286 = vpop.xlane.xlu0 %1285
        %v1287 = vmax.f32 %v1150, %v1152
        %1288 = vmax.xlane.f32.xlu0 %v1287
        %v1289 = vpop.xlane.xlu0 %1288
        %v1290 = vmax.f32 %v1156, %v1158
        %1291 = vmax.xlane.f32.xlu0 %v1290
        %v1292 = vpop.xlane.xlu0 %1291
        %v1293 = vmax.f32 %v1160, %v1162
        %1294 = vmax.xlane.f32.xlu0 %v1293
        %v1295 = vpop.xlane.xlu0 %1294
        %v1296 = vmax.f32 %v1166, %v1168
        %1297 = vmax.xlane.f32.xlu0 %v1296
        %v1298 = vpop.xlane.xlu0 %1297
        %v1299 = vmax.f32 %v1170, %v1172
        %1300 = vmax.xlane.f32.xlu0 %v1299
        %v1301 = vpop.xlane.xlu0 %1300
        %v1302 = vmax.f32 %v1176, %v1178
        %1303 = vmax.xlane.f32.xlu0 %v1302
        %v1304 = vpop.xlane.xlu0 %1303
        %v1305 = vmax.f32 %v1180, %v1182
        %1306 = vmax.xlane.f32.xlu0 %v1305
        %v1307 = vpop.xlane.xlu0 %1306
        %v1308 = vmax.f32 %v1186, %v1188
        %1309 = vmax.xlane.f32.xlu0 %v1308
        %v1310 = vpop.xlane.xlu0 %1309
        %v1311 = vmax.f32 %v1190, %v1192
        %1312 = vmax.xlane.f32.xlu0 %v1311
        %v1313 = vpop.xlane.xlu0 %1312
        %v1314 = vmax.f32 %v1196, %v1198
        %1315 = vmax.xlane.f32.xlu0 %v1314
        %v1316 = vpop.xlane.xlu0 %1315
        %v1317 = vmax.f32 %v1200, %v1202
        %1318 = vmax.xlane.f32.xlu0 %v1317
        %v1319 = vpop.xlane.xlu0 %1318
        %v1320 = vmax.f32 %v1206, %v1208
        %1321 = vmax.xlane.f32.xlu0 %v1320
        %v1322 = vpop.xlane.xlu0 %1321
        %v1323 = vmax.f32 %v1210, %v1212
        %1324 = vmax.xlane.f32.xlu0 %v1323
        %v1325 = vpop.xlane.xlu0 %1324
        %v1326 = vmax.f32 %v1216, %v1218
        %1327 = vmax.xlane.f32.xlu0 %v1326
        %v1328 = vpop.xlane.xlu0 %1327
        %v1329 = vmax.f32 %v1220, %v1222
        %1330 = vmax.xlane.f32.xlu0 %v1329
        %v1331 = vpop.xlane.xlu0 %1330
        %v1332 = vmax.f32 %v1226, %v1228
        %1333 = vmax.xlane.f32.xlu0 %v1332
        %v1334 = vpop.xlane.xlu0 %1333
        %v1335 = vmax.f32 %v1230, %v1232
        %1336 = vmax.xlane.f32.xlu0 %v1335
        %v1337 = vpop.xlane.xlu0 %1336
        %v1338 = vmax.f32 %v1236, %v1238
        %1339 = vmax.xlane.f32.xlu0 %v1338
        %v1340 = vpop.xlane.xlu0 %1339
        %v1341 = vmax.f32 %v1240, %v1242
        %1342 = vmax.xlane.f32.xlu0 %v1341
        %v1343 = vpop.xlane.xlu0 %1342
        %v1344 = vmax.f32 %v1246, %v1248
        %1345 = vmax.xlane.f32.xlu0 %v1344
        %v1346 = vpop.xlane.xlu0 %1345
        %v1347 = vmax.f32 %v1250, %v1252
        %1348 = vmax.xlane.f32.xlu0 %v1347
        %v1349 = vpop.xlane.xlu0 %1348
        %v1350 = vsub.f32 %v1096, %v1256
        %v1351 = vsub.f32 %v1098, %v1256
        %v1352 = vsub.f32 %v1100, %v1259
        %v1353 = vsub.f32 %v1102, %v1259
        %v1354 = vsub.f32 %v1106, %v1262
        %v1355 = vsub.f32 %v1108, %v1262
        %v1356 = vsub.f32 %v1110, %v1265
        %v1357 = vsub.f32 %v1112, %v1265
        %v1358 = vsub.f32 %v1116, %v1268
        %v1359 = vsub.f32 %v1118, %v1268
        %v1360 = vsub.f32 %v1120, %v1271
        %v1361 = vsub.f32 %v1122, %v1271
        %v1362 = vsub.f32 %v1126, %v1274
        %v1363 = vsub.f32 %v1128, %v1274
        %v1364 = vsub.f32 %v1130, %v1277
        %v1365 = vsub.f32 %v1132, %v1277
        %v1366 = vsub.f32 %v1136, %v1280
        %v1367 = vsub.f32 %v1138, %v1280
        %v1368 = vsub.f32 %v1140, %v1283
        %v1369 = vsub.f32 %v1142, %v1283
        %v1370 = vsub.f32 %v1146, %v1286
        %v1371 = vsub.f32 %v1148, %v1286
        %v1372 = vsub.f32 %v1150, %v1289
        %v1373 = vsub.f32 %v1152, %v1289
        %v1374 = vsub.f32 %v1156, %v1292
        %v1375 = vsub.f32 %v1158, %v1292
        %v1376 = vsub.f32 %v1160, %v1295
        %v1377 = vsub.f32 %v1162, %v1295
        %v1378 = vsub.f32 %v1166, %v1298
        %v1379 = vsub.f32 %v1168, %v1298
        %v1380 = vsub.f32 %v1170, %v1301
        %v1381 = vsub.f32 %v1172, %v1301
        %v1382 = vsub.f32 %v1176, %v1304
        %v1383 = vsub.f32 %v1178, %v1304
        %v1384 = vsub.f32 %v1180, %v1307
        %v1385 = vsub.f32 %v1182, %v1307
        %v1386 = vsub.f32 %v1186, %v1310
        %v1387 = vsub.f32 %v1188, %v1310
        %v1388 = vsub.f32 %v1190, %v1313
        %v1389 = vsub.f32 %v1192, %v1313
        %v1390 = vsub.f32 %v1196, %v1316
        %v1391 = vsub.f32 %v1198, %v1316
        %v1392 = vsub.f32 %v1200, %v1319
        %v1393 = vsub.f32 %v1202, %v1319
        %v1394 = vsub.f32 %v1206, %v1322
        %v1395 = vsub.f32 %v1208, %v1322
        %v1396 = vsub.f32 %v1210, %v1325
        %v1397 = vsub.f32 %v1212, %v1325
        %v1398 = vsub.f32 %v1216, %v1328
        %v1399 = vsub.f32 %v1218, %v1328
        %v1400 = vsub.f32 %v1220, %v1331
        %v1401 = vsub.f32 %v1222, %v1331
        %v1402 = vsub.f32 %v1226, %v1334
        %v1403 = vsub.f32 %v1228, %v1334
        %v1404 = vsub.f32 %v1230, %v1337
        %v1405 = vsub.f32 %v1232, %v1337
        %v1406 = vsub.f32 %v1236, %v1340
        %v1407 = vsub.f32 %v1238, %v1340
        %v1408 = vsub.f32 %v1240, %v1343
        %v1409 = vsub.f32 %v1242, %v1343
        %v1410 = vsub.f32 %v1246, %v1346
        %v1411 = vsub.f32 %v1248, %v1346
        %v1412 = vsub.f32 %v1250, %v1349
        %v1413 = vsub.f32 %v1252, %v1349
        %v1414 = vmul.f32 %v1350, 1.442695
        %v1415 = vpow.pop %v1414
        %v1416 = vmul.f32 %v1351, 1.442695
        %v1417 = vpow.pop %v1416
        %v1418 = vmul.f32 %v1352, 1.442695
        %v1419 = vpow.pop %v1418
        %v1420 = vmul.f32 %v1353, 1.442695
        %v1421 = vpow.pop %v1420
        %v1422 = vmul.f32 %v1354, 1.442695
        %v1423 = vpow.pop %v1422
        %v1424 = vmul.f32 %v1355, 1.442695
        %v1425 = vpow.pop %v1424
        %v1426 = vmul.f32 %v1356, 1.442695
        %v1427 = vpow.pop %v1426
        %v1428 = vmul.f32 %v1357, 1.442695
        %v1429 = vpow.pop %v1428
        %v1430 = vmul.f32 %v1358, 1.442695
        %v1431 = vpow.pop %v1430
        %v1432 = vmul.f32 %v1359, 1.442695
        %v1433 = vpow.pop %v1432
        %v1434 = vmul.f32 %v1360, 1.442695
        %v1435 = vpow.pop %v1434
        %v1436 = vmul.f32 %v1361, 1.442695
        %v1437 = vpow.pop %v1436
        %v1438 = vmul.f32 %v1362, 1.442695
        %v1439 = vpow.pop %v1438
        %v1440 = vmul.f32 %v1363, 1.442695
        %v1441 = vpow.pop %v1440
        %v1442 = vmul.f32 %v1364, 1.442695
        %v1443 = vpow.pop %v1442
        %v1444 = vmul.f32 %v1365, 1.442695
        %v1445 = vpow.pop %v1444
        %v1446 = vmul.f32 %v1366, 1.442695
        %v1447 = vpow.pop %v1446
        %v1448 = vmul.f32 %v1367, 1.442695
        %v1449 = vpow.pop %v1448
        %v1450 = vmul.f32 %v1368, 1.442695
        %v1451 = vpow.pop %v1450
        %v1452 = vmul.f32 %v1369, 1.442695
        %v1453 = vpow.pop %v1452
        %v1454 = vmul.f32 %v1370, 1.442695
        %v1455 = vpow.pop %v1454
        %v1456 = vmul.f32 %v1371, 1.442695
        %v1457 = vpow.pop %v1456
        %v1458 = vmul.f32 %v1372, 1.442695
        %v1459 = vpow.pop %v1458
        %v1460 = vmul.f32 %v1373, 1.442695
        %v1461 = vpow.pop %v1460
        %v1462 = vmul.f32 %v1374, 1.442695
        %v1463 = vpow.pop %v1462
        %v1464 = vmul.f32 %v1375, 1.442695
        %v1465 = vpow.pop %v1464
        %v1466 = vmul.f32 %v1376, 1.442695
        %v1467 = vpow.pop %v1466
        %v1468 = vmul.f32 %v1377, 1.442695
        %v1469 = vpow.pop %v1468
        %v1470 = vmul.f32 %v1378, 1.442695
        %v1471 = vpow.pop %v1470
        %v1472 = vmul.f32 %v1379, 1.442695
        %v1473 = vpow.pop %v1472
        %v1474 = vmul.f32 %v1380, 1.442695
        %v1475 = vpow.pop %v1474
        %v1476 = vmul.f32 %v1381, 1.442695
        %v1477 = vpow.pop %v1476
        %v1478 = vmul.f32 %v1382, 1.442695
        %v1479 = vpow.pop %v1478
        %v1480 = vmul.f32 %v1383, 1.442695
        %v1481 = vpow.pop %v1480
        %v1482 = vmul.f32 %v1384, 1.442695
        %v1483 = vpow.pop %v1482
        %v1484 = vmul.f32 %v1385, 1.442695
        %v1485 = vpow.pop %v1484
        %v1486 = vmul.f32 %v1386, 1.442695
        %v1487 = vpow.pop %v1486
        %v1488 = vmul.f32 %v1387, 1.442695
        %v1489 = vpow.pop %v1488
        %v1490 = vmul.f32 %v1388, 1.442695
        %v1491 = vpow.pop %v1490
        %v1492 = vmul.f32 %v1389, 1.442695
        %v1493 = vpow.pop %v1492
        %v1494 = vmul.f32 %v1390, 1.442695
        %v1495 = vpow.pop %v1494
        %v1496 = vmul.f32 %v1391, 1.442695
        %v1497 = vpow.pop %v1496
        %v1498 = vmul.f32 %v1392, 1.442695
        %v1499 = vpow.pop %v1498
        %v1500 = vmul.f32 %v1393, 1.442695
        %v1501 = vpow.pop %v1500
        %v1502 = vmul.f32 %v1394, 1.442695
        %v1503 = vpow.pop %v1502
        %v1504 = vmul.f32 %v1395, 1.442695
        %v1505 = vpow.pop %v1504
        %v1506 = vmul.f32 %v1396, 1.442695
        %v1507 = vpow.pop %v1506
        %v1508 = vmul.f32 %v1397, 1.442695
        %v1509 = vpow.pop %v1508
        %v1510 = vmul.f32 %v1398, 1.442695
        %v1511 = vpow.pop %v1510
        %v1512 = vmul.f32 %v1399, 1.442695
        %v1513 = vpow.pop %v1512
        %v1514 = vmul.f32 %v1400, 1.442695
        %v1515 = vpow.pop %v1514
        %v1516 = vmul.f32 %v1401, 1.442695
        %v1517 = vpow.pop %v1516
        %v1518 = vmul.f32 %v1402, 1.442695
        %v1519 = vpow.pop %v1518
        %v1520 = vmul.f32 %v1403, 1.442695
        %v1521 = vpow.pop %v1520
        %v1522 = vmul.f32 %v1404, 1.442695
        %v1523 = vpow.pop %v1522
        %v1524 = vmul.f32 %v1405, 1.442695
        %v1525 = vpow.pop %v1524
        %v1526 = vmul.f32 %v1406, 1.442695
        %v1527 = vpow.pop %v1526
        %v1528 = vmul.f32 %v1407, 1.442695
        %v1529 = vpow.pop %v1528
        %v1530 = vmul.f32 %v1408, 1.442695
        %v1531 = vpow.pop %v1530
        %v1532 = vmul.f32 %v1409, 1.442695
        %v1533 = vpow.pop %v1532
        %v1534 = vmul.f32 %v1410, 1.442695
        %v1535 = vpow.pop %v1534
        %v1536 = vmul.f32 %v1411, 1.442695
        %v1537 = vpow.pop %v1536
        %v1538 = vmul.f32 %v1412, 1.442695
        %v1539 = vpow.pop %v1538
        %v1540 = vmul.f32 %v1413, 1.442695
        %v1541 = vpow.pop %v1540
        %v1542 = vadd.f32 %v1415, %v1417
        %1543 = vadd.xlane.f32.xlu0 %v1542
        %v1544 = vpop.xlane.xlu0 %1543
        %v1545 = vadd.f32 %v1419, %v1421
        %1546 = vadd.xlane.f32.xlu0 %v1545
        %v1547 = vpop.xlane.xlu0 %1546
        %v1548 = vadd.f32 %v1423, %v1425
        %1549 = vadd.xlane.f32.xlu0 %v1548
        %v1550 = vpop.xlane.xlu0 %1549
        %v1551 = vadd.f32 %v1427, %v1429
        %1552 = vadd.xlane.f32.xlu0 %v1551
        %v1553 = vpop.xlane.xlu0 %1552
        %v1554 = vadd.f32 %v1431, %v1433
        %1555 = vadd.xlane.f32.xlu0 %v1554
        %v1556 = vpop.xlane.xlu0 %1555
        %v1557 = vadd.f32 %v1435, %v1437
        %1558 = vadd.xlane.f32.xlu0 %v1557
        %v1559 = vpop.xlane.xlu0 %1558
        %v1560 = vadd.f32 %v1439, %v1441
        %1561 = vadd.xlane.f32.xlu0 %v1560
        %v1562 = vpop.xlane.xlu0 %1561
        %v1563 = vadd.f32 %v1443, %v1445
        %1564 = vadd.xlane.f32.xlu0 %v1563
        %v1565 = vpop.xlane.xlu0 %1564
        %v1566 = vadd.f32 %v1447, %v1449
        %1567 = vadd.xlane.f32.xlu0 %v1566
        %v1568 = vpop.xlane.xlu0 %1567
        %v1569 = vadd.f32 %v1451, %v1453
        %1570 = vadd.xlane.f32.xlu0 %v1569
        %v1571 = vpop.xlane.xlu0 %1570
        %v1572 = vadd.f32 %v1455, %v1457
        %1573 = vadd.xlane.f32.xlu0 %v1572
        %v1574 = vpop.xlane.xlu0 %1573
        %v1575 = vadd.f32 %v1459, %v1461
        %1576 = vadd.xlane.f32.xlu0 %v1575
        %v1577 = vpop.xlane.xlu0 %1576
        %v1578 = vadd.f32 %v1463, %v1465
        %1579 = vadd.xlane.f32.xlu0 %v1578
        %v1580 = vpop.xlane.xlu0 %1579
        %v1581 = vadd.f32 %v1467, %v1469
        %1582 = vadd.xlane.f32.xlu0 %v1581
        %v1583 = vpop.xlane.xlu0 %1582
        %v1584 = vadd.f32 %v1471, %v1473
        %1585 = vadd.xlane.f32.xlu0 %v1584
        %v1586 = vpop.xlane.xlu0 %1585
        %v1587 = vadd.f32 %v1475, %v1477
        %1588 = vadd.xlane.f32.xlu0 %v1587
        %v1589 = vpop.xlane.xlu0 %1588
        %v1590 = vadd.f32 %v1479, %v1481
        %1591 = vadd.xlane.f32.xlu0 %v1590
        %v1592 = vpop.xlane.xlu0 %1591
        %v1593 = vadd.f32 %v1483, %v1485
        %1594 = vadd.xlane.f32.xlu0 %v1593
        %v1595 = vpop.xlane.xlu0 %1594
        %v1596 = vadd.f32 %v1487, %v1489
        %1597 = vadd.xlane.f32.xlu0 %v1596
        %v1598 = vpop.xlane.xlu0 %1597
        %v1599 = vadd.f32 %v1491, %v1493
        %1600 = vadd.xlane.f32.xlu0 %v1599
        %v1601 = vpop.xlane.xlu0 %1600
        %v1602 = vadd.f32 %v1495, %v1497
        %1603 = vadd.xlane.f32.xlu0 %v1602
        %v1604 = vpop.xlane.xlu0 %1603
        %v1605 = vadd.f32 %v1499, %v1501
        %1606 = vadd.xlane.f32.xlu0 %v1605
        %v1607 = vpop.xlane.xlu0 %1606
        %v1608 = vadd.f32 %v1503, %v1505
        %1609 = vadd.xlane.f32.xlu0 %v1608
        %v1610 = vpop.xlane.xlu0 %1609
        %v1611 = vadd.f32 %v1507, %v1509
        %1612 = vadd.xlane.f32.xlu0 %v1611
        %v1613 = vpop.xlane.xlu0 %1612
        %v1614 = vadd.f32 %v1511, %v1513
        %1615 = vadd.xlane.f32.xlu0 %v1614
        %v1616 = vpop.xlane.xlu0 %1615
        %v1617 = vadd.f32 %v1515, %v1517
        %1618 = vadd.xlane.f32.xlu0 %v1617
        %v1619 = vpop.xlane.xlu0 %1618
        %v1620 = vadd.f32 %v1519, %v1521
        %1621 = vadd.xlane.f32.xlu0 %v1620
        %v1622 = vpop.xlane.xlu0 %1621
        %v1623 = vadd.f32 %v1523, %v1525
        %1624 = vadd.xlane.f32.xlu0 %v1623
        %v1625 = vpop.xlane.xlu0 %1624
        %v1626 = vadd.f32 %v1527, %v1529
        %1627 = vadd.xlane.f32.xlu0 %v1626
        %v1628 = vpop.xlane.xlu0 %1627
        %v1629 = vadd.f32 %v1531, %v1533
        %1630 = vadd.xlane.f32.xlu0 %v1629
        %v1631 = vpop.xlane.xlu0 %1630
        %v1632 = vadd.f32 %v1535, %v1537
        %1633 = vadd.xlane.f32.xlu0 %v1632
        %v1634 = vpop.xlane.xlu0 %1633
        %v1635 = vadd.f32 %v1539, %v1541
        %1636 = vadd.xlane.f32.xlu0 %v1635
        %v1637 = vpop.xlane.xlu0 %1636
        %v1638 = vrcp.pop %v1544
        %v1639 = vrcp.pop %v1547
        %v1640 = vrcp.pop %v1550
        %v1641 = vrcp.pop %v1553
        %v1642 = vrcp.pop %v1556
        %v1643 = vrcp.pop %v1559
        %v1644 = vrcp.pop %v1562
        %v1645 = vrcp.pop %v1565
        %v1646 = vrcp.pop %v1568
        %v1647 = vrcp.pop %v1571
        %v1648 = vrcp.pop %v1574
        %v1649 = vrcp.pop %v1577
        %v1650 = vrcp.pop %v1580
        %v1651 = vrcp.pop %v1583
        %v1652 = vrcp.pop %v1586
        %v1653 = vrcp.pop %v1589
        %v1654 = vrcp.pop %v1592
        %v1655 = vrcp.pop %v1595
        %v1656 = vrcp.pop %v1598
        %v1657 = vrcp.pop %v1601
        %v1658 = vrcp.pop %v1604
        %v1659 = vrcp.pop %v1607
        %v1660 = vrcp.pop %v1610
        %v1661 = vrcp.pop %v1613
        %v1662 = vrcp.pop %v1616
        %v1663 = vrcp.pop %v1619
        %v1664 = vrcp.pop %v1622
        %v1665 = vrcp.pop %v1625
        %v1666 = vrcp.pop %v1628
        %v1667 = vrcp.pop %v1631
        %v1668 = vrcp.pop %v1634
        %v1669 = vrcp.pop %v1637
        %v1670 = vmul.f32 %v1415, %v1638
        %v1671 = vmul.f32 %v1417, %v1638
        %v1672 = vmul.f32 %v1419, %v1639
        %v1673 = vmul.f32 %v1421, %v1639
        %v1674 = vmul.f32 %v1423, %v1640
        %v1675 = vmul.f32 %v1425, %v1640
        %v1676 = vmul.f32 %v1427, %v1641
        %v1677 = vmul.f32 %v1429, %v1641
        %v1678 = vmul.f32 %v1431, %v1642
        %v1679 = vmul.f32 %v1433, %v1642
        %v1680 = vmul.f32 %v1435, %v1643
        %v1681 = vmul.f32 %v1437, %v1643
        %v1682 = vmul.f32 %v1439, %v1644
        %v1683 = vmul.f32 %v1441, %v1644
        %v1684 = vmul.f32 %v1443, %v1645
        %v1685 = vmul.f32 %v1445, %v1645
        %v1686 = vmul.f32 %v1447, %v1646
        %v1687 = vmul.f32 %v1449, %v1646
        %v1688 = vmul.f32 %v1451, %v1647
        %v1689 = vmul.f32 %v1453, %v1647
        %v1690 = vmul.f32 %v1455, %v1648
        %v1691 = vmul.f32 %v1457, %v1648
        %v1692 = vmul.f32 %v1459, %v1649
        %v1693 = vmul.f32 %v1461, %v1649
        %v1694 = vmul.f32 %v1463, %v1650
        %v1695 = vmul.f32 %v1465, %v1650
        %v1696 = vmul.f32 %v1467, %v1651
        %v1697 = vmul.f32 %v1469, %v1651
        %v1698 = vmul.f32 %v1471, %v1652
        %v1699 = vmul.f32 %v1473, %v1652
        %v1700 = vmul.f32 %v1475, %v1653
        %v1701 = vmul.f32 %v1477, %v1653
        %v1702 = vmul.f32 %v1479, %v1654
        %v1703 = vmul.f32 %v1481, %v1654
        %v1704 = vmul.f32 %v1483, %v1655
        %v1705 = vmul.f32 %v1485, %v1655
        %v1706 = vmul.f32 %v1487, %v1656
        %v1707 = vmul.f32 %v1489, %v1656
        %v1708 = vmul.f32 %v1491, %v1657
        %v1709 = vmul.f32 %v1493, %v1657
        %v1710 = vmul.f32 %v1495, %v1658
        %v1711 = vmul.f32 %v1497, %v1658
        %v1712 = vmul.f32 %v1499, %v1659
        %v1713 = vmul.f32 %v1501, %v1659
        %v1714 = vmul.f32 %v1503, %v1660
        %v1715 = vmul.f32 %v1505, %v1660
        %v1716 = vmul.f32 %v1507, %v1661
        %v1717 = vmul.f32 %v1509, %v1661
        %v1718 = vmul.f32 %v1511, %v1662
        %v1719 = vmul.f32 %v1513, %v1662
        %v1720 = vmul.f32 %v1515, %v1663
        %v1721 = vmul.f32 %v1517, %v1663
        %v1722 = vmul.f32 %v1519, %v1664
        %v1723 = vmul.f32 %v1521, %v1664
        %v1724 = vmul.f32 %v1523, %v1665
        %v1725 = vmul.f32 %v1525, %v1665
        %v1726 = vmul.f32 %v1527, %v1666
        %v1727 = vmul.f32 %v1529, %v1666
        %v1728 = vmul.f32 %v1531, %v1667
        %v1729 = vmul.f32 %v1533, %v1667
        %v1730 = vmul.f32 %v1535, %v1668
        %v1731 = vmul.f32 %v1537, %v1668
        %v1732 = vmul.f32 %v1539, %v1669
        %v1733 = vmul.f32 %v1541, %v1669
        %v1734 = vpack.c.bf16 %v1672, %v1670
        %v1735 = vpack.c.bf16 %v1673, %v1671
        %v1736 = vpack.c.bf16 %v1676, %v1674
        %v1737 = vpack.c.bf16 %v1677, %v1675
        %v1738 = vpack.c.bf16 %v1680, %v1678
        %v1739 = vpack.c.bf16 %v1681, %v1679
        %v1740 = vpack.c.bf16 %v1684, %v1682
        %v1741 = vpack.c.bf16 %v1685, %v1683
        %v1742 = vpack.c.bf16 %v1688, %v1686
        %v1743 = vpack.c.bf16 %v1689, %v1687
        %v1744 = vpack.c.bf16 %v1692, %v1690
        %v1745 = vpack.c.bf16 %v1693, %v1691
        %v1746 = vpack.c.bf16 %v1696, %v1694
        %v1747 = vpack.c.bf16 %v1697, %v1695
        %v1748 = vpack.c.bf16 %v1700, %v1698
        %v1749 = vpack.c.bf16 %v1701, %v1699
        %v1750 = vpack.c.bf16 %v1704, %v1702
        %v1751 = vpack.c.bf16 %v1705, %v1703
        %v1752 = vpack.c.bf16 %v1708, %v1706
        %v1753 = vpack.c.bf16 %v1709, %v1707
        %v1754 = vpack.c.bf16 %v1712, %v1710
        %v1755 = vpack.c.bf16 %v1713, %v1711
        %v1756 = vpack.c.bf16 %v1716, %v1714
        %v1757 = vpack.c.bf16 %v1717, %v1715
        %v1758 = vpack.c.bf16 %v1720, %v1718
        %v1759 = vpack.c.bf16 %v1721, %v1719
        %v1760 = vpack.c.bf16 %v1724, %v1722
        %v1761 = vpack.c.bf16 %v1725, %v1723
        %v1762 = vpack.c.bf16 %v1728, %v1726
        %v1763 = vpack.c.bf16 %v1729, %v1727
        %v1764 = vpack.c.bf16 %v1732, %v1730
        %v1765 = vpack.c.bf16 %v1733, %v1731
        %1766 = vmatprep.subr.bf16.mxu0 0
        %1767 = vmatpush1.bf16.msra.mxu0 %v907
        %1768 = vmatprep.subr.bf16.mxu0 0
        %1769 = vmatpush1.bf16.msra.mxu0 %v906
        %1770 = vmatprep.subr.bf16.mxu0 0
        %1771 = vmatpush1.bf16.msra.mxu0 %v905
        %1772 = vmatprep.subr.bf16.mxu0 0
        %1773 = vmatpush1.bf16.msra.mxu0 %v904
        %1774 = vmatprep.subr.bf16.mxu0 0
        %1775 = vmatpush1.bf16.msra.mxu0 %v903
        %1776 = vmatprep.subr.bf16.mxu0 0
        %1777 = vmatpush1.bf16.msra.mxu0 %v902
        %1778 = vmatprep.subr.bf16.mxu0 0
        %1779 = vmatpush1.bf16.msra.mxu0 %v901
        %1780 = vmatprep.subr.bf16.mxu0 0
        %1781 = vmatpush1.bf16.msra.mxu0 %v900
        %1782 = vmatprep.subr.bf16.mxu0 0
        %1783 = vmatpush2.bf16.msra.mxu0 %v915
        %1784 = vmatprep.subr.bf16.mxu0 0
        %1785 = vmatpush2.bf16.msra.mxu0 %v914
        %1786 = vmatprep.subr.bf16.mxu0 0
        %1787 = vmatpush2.bf16.msra.mxu0 %v913
        %1788 = vmatprep.subr.bf16.mxu0 0
        %1789 = vmatpush2.bf16.msra.mxu0 %v912
        %1790 = vmatprep.subr.bf16.mxu0 0
        %1791 = vmatpush2.bf16.msra.mxu0 %v911
        %1792 = vmatprep.subr.bf16.mxu0 0
        %1793 = vmatpush2.bf16.msra.mxu0 %v910
        %1794 = vmatprep.subr.bf16.mxu0 0
        %1795 = vmatpush2.bf16.msra.mxu0 %v909
        %1796 = vmatprep.subr.bf16.mxu0 0
        %1797 = vmatpush2.bf16.msra.mxu0 %v908
        %1798 = vmatprep.mubr.bf16.mxu0 %v1735
        %1799 = vmatmul.mubr.bf16.gmra.mxu0 %v1734
        %v1800 = vpop.f32.mrf.mxu0
        %v1801 = vadd.f32 0.0, %v1800
        %v1802 = vpop.f32.mrf.mxu0
        %v1803 = vpop.f32.mrf.mxu0
        %v1804 = vadd.f32 0.0, %v1803
        %v1805 = vpop.f32.mrf.mxu0
        %1806 = vmatprep.mubr.bf16.mxu0 %v1737
        %1807 = vmatmul.mubr.bf16.gmra.mxu0 %v1736
        %v1808 = vpop.f32.mrf.mxu0
        %v1809 = vadd.f32 0.0, %v1808
        %v1810 = vpop.f32.mrf.mxu0
        %v1811 = vpop.f32.mrf.mxu0
        %v1812 = vadd.f32 0.0, %v1811
        %v1813 = vpop.f32.mrf.mxu0
        %1814 = vmatprep.mubr.bf16.mxu0 %v1739
        %1815 = vmatmul.mubr.bf16.gmra.mxu0 %v1738
        %v1816 = vpop.f32.mrf.mxu0
        %v1817 = vadd.f32 0.0, %v1816
        %v1818 = vpop.f32.mrf.mxu0
        %v1819 = vpop.f32.mrf.mxu0
        %v1820 = vadd.f32 0.0, %v1819
        %v1821 = vpop.f32.mrf.mxu0
        %1822 = vmatprep.mubr.bf16.mxu0 %v1741
        %1823 = vmatmul.mubr.bf16.gmra.mxu0 %v1740
        %v1824 = vpop.f32.mrf.mxu0
        %v1825 = vadd.f32 0.0, %v1824
        %v1826 = vpop.f32.mrf.mxu0
        %v1827 = vpop.f32.mrf.mxu0
        %v1828 = vadd.f32 0.0, %v1827
        %v1829 = vpop.f32.mrf.mxu0
        %1830 = vmatprep.mubr.bf16.mxu0 %v1743
        %1831 = vmatmul.mubr.bf16.gmra.mxu0 %v1742
        %v1832 = vpop.f32.mrf.mxu0
        %v1833 = vadd.f32 0.0, %v1832
        %v1834 = vpop.f32.mrf.mxu0
        %v1835 = vpop.f32.mrf.mxu0
        %v1836 = vadd.f32 0.0, %v1835
        %v1837 = vpop.f32.mrf.mxu0
        %1838 = vmatprep.mubr.bf16.mxu0 %v1745
        %1839 = vmatmul.mubr.bf16.gmra.mxu0 %v1744
        %v1840 = vpop.f32.mrf.mxu0
        %v1841 = vadd.f32 0.0, %v1840
        %v1842 = vpop.f32.mrf.mxu0
        %v1843 = vpop.f32.mrf.mxu0
        %v1844 = vadd.f32 0.0, %v1843
        %v1845 = vpop.f32.mrf.mxu0
        %1846 = vmatprep.mubr.bf16.mxu0 %v1747
        %1847 = vmatmul.mubr.bf16.gmra.mxu0 %v1746
        %v1848 = vpop.f32.mrf.mxu0
        %v1849 = vadd.f32 0.0, %v1848
        %v1850 = vpop.f32.mrf.mxu0
        %v1851 = vpop.f32.mrf.mxu0
        %v1852 = vadd.f32 0.0, %v1851
        %v1853 = vpop.f32.mrf.mxu0
        %1854 = vmatprep.mubr.bf16.mxu0 %v1749
        %1855 = vmatmul.mubr.bf16.gmra.mxu0 %v1748
        %v1856 = vpop.f32.mrf.mxu0
        %v1857 = vadd.f32 0.0, %v1856
        %v1858 = vpop.f32.mrf.mxu0
        %v1859 = vpop.f32.mrf.mxu0
        %v1860 = vadd.f32 0.0, %v1859
        %v1861 = vpop.f32.mrf.mxu0
        %1862 = vmatprep.mubr.bf16.mxu0 %v1751
        %1863 = vmatmul.mubr.bf16.gmra.mxu0 %v1750
        %v1864 = vpop.f32.mrf.mxu0
        %v1865 = vadd.f32 0.0, %v1864
        %v1866 = vpop.f32.mrf.mxu0
        %v1867 = vpop.f32.mrf.mxu0
        %v1868 = vadd.f32 0.0, %v1867
        %v1869 = vpop.f32.mrf.mxu0
        %1870 = vmatprep.mubr.bf16.mxu0 %v1753
        %1871 = vmatmul.mubr.bf16.gmra.mxu0 %v1752
        %v1872 = vpop.f32.mrf.mxu0
        %v1873 = vadd.f32 0.0, %v1872
        %v1874 = vpop.f32.mrf.mxu0
        %v1875 = vpop.f32.mrf.mxu0
        %v1876 = vadd.f32 0.0, %v1875
        %v1877 = vpop.f32.mrf.mxu0
        %1878 = vmatprep.mubr.bf16.mxu0 %v1755
        %1879 = vmatmul.mubr.bf16.gmra.mxu0 %v1754
        %v1880 = vpop.f32.mrf.mxu0
        %v1881 = vadd.f32 0.0, %v1880
        %v1882 = vpop.f32.mrf.mxu0
        %v1883 = vpop.f32.mrf.mxu0
        %v1884 = vadd.f32 0.0, %v1883
        %v1885 = vpop.f32.mrf.mxu0
        %1886 = vmatprep.mubr.bf16.mxu0 %v1757
        %1887 = vmatmul.mubr.bf16.gmra.mxu0 %v1756
        %v1888 = vpop.f32.mrf.mxu0
        %v1889 = vadd.f32 0.0, %v1888
        %v1890 = vpop.f32.mrf.mxu0
        %v1891 = vpop.f32.mrf.mxu0
        %v1892 = vadd.f32 0.0, %v1891
        %v1893 = vpop.f32.mrf.mxu0
        %1894 = vmatprep.mubr.bf16.mxu0 %v1759
        %1895 = vmatmul.mubr.bf16.gmra.mxu0 %v1758
        %v1896 = vpop.f32.mrf.mxu0
        %v1897 = vadd.f32 0.0, %v1896
        %v1898 = vpop.f32.mrf.mxu0
        %v1899 = vpop.f32.mrf.mxu0
        %v1900 = vadd.f32 0.0, %v1899
        %v1901 = vpop.f32.mrf.mxu0
        %1902 = vmatprep.mubr.bf16.mxu0 %v1761
        %1903 = vmatmul.mubr.bf16.gmra.mxu0 %v1760
        %v1904 = vpop.f32.mrf.mxu0
        %v1905 = vadd.f32 0.0, %v1904
        %v1906 = vpop.f32.mrf.mxu0
        %v1907 = vpop.f32.mrf.mxu0
        %v1908 = vadd.f32 0.0, %v1907
        %v1909 = vpop.f32.mrf.mxu0
        %1910 = vmatprep.mubr.bf16.mxu0 %v1763
        %1911 = vmatmul.mubr.bf16.gmra.mxu0 %v1762
        %v1912 = vpop.f32.mrf.mxu0
        %v1913 = vadd.f32 0.0, %v1912
        %v1914 = vpop.f32.mrf.mxu0
        %v1915 = vpop.f32.mrf.mxu0
        %v1916 = vadd.f32 0.0, %v1915
        %v1917 = vpop.f32.mrf.mxu0
        %1918 = vmatprep.mubr.bf16.mxu0 %v1765
        %1919 = vmatmul.mubr.bf16.gmra.mxu0 %v1764
        %v1920 = vpop.f32.mrf.mxu0
        %v1921 = vadd.f32 0.0, %v1920
        %v1922 = vpop.f32.mrf.mxu0
        %v1923 = vpop.f32.mrf.mxu0
        %v1924 = vadd.f32 0.0, %v1923
        %v1925 = vpop.f32.mrf.mxu0
        %1926 = vdwg.mxu0
        %v1927 = vmul.f32 %v535, 0.35355338
        %v1928 = vmul.f32 %v539, 0.35355338
        %v1929 = vmul.f32 %v545, 0.35355338
        %v1930 = vmul.f32 %v549, 0.35355338
        %v1931 = vmul.f32 %v555, 0.35355338
        %v1932 = vmul.f32 %v559, 0.35355338
        %v1933 = vmul.f32 %v565, 0.35355338
        %v1934 = vmul.f32 %v569, 0.35355338
        %v1935 = vmul.f32 %v575, 0.35355338
        %v1936 = vmul.f32 %v579, 0.35355338
        %v1937 = vmul.f32 %v585, 0.35355338
        %v1938 = vmul.f32 %v589, 0.35355338
        %v1939 = vmul.f32 %v595, 0.35355338
        %v1940 = vmul.f32 %v599, 0.35355338
        %v1941 = vmul.f32 %v605, 0.35355338
        %v1942 = vmul.f32 %v609, 0.35355338
        %v1943 = vmul.f32 %v615, 0.35355338
        %v1944 = vmul.f32 %v619, 0.35355338
        %v1945 = vmul.f32 %v625, 0.35355338
        %v1946 = vmul.f32 %v629, 0.35355338
        %v1947 = vmul.f32 %v635, 0.35355338
        %v1948 = vmul.f32 %v639, 0.35355338
        %v1949 = vmul.f32 %v645, 0.35355338
        %v1950 = vmul.f32 %v649, 0.35355338
        %v1951 = vmul.f32 %v655, 0.35355338
        %v1952 = vmul.f32 %v659, 0.35355338
        %v1953 = vmul.f32 %v665, 0.35355338
        %v1954 = vmul.f32 %v669, 0.35355338
        %v1955 = vmul.f32 %v675, 0.35355338
        %v1956 = vmul.f32 %v679, 0.35355338
        %v1957 = vmul.f32 %v685, 0.35355338
        %v1958 = vmul.f32 %v689, 0.35355338
        %v1959 = vpack.c.bf16 %v1928, %v1927
        %v1960 = vpack.c.bf16 %v1930, %v1929
        %v1961 = vpack.c.bf16 %v1932, %v1931
        %v1962 = vpack.c.bf16 %v1934, %v1933
        %v1963 = vpack.c.bf16 %v1936, %v1935
        %v1964 = vpack.c.bf16 %v1938, %v1937
        %v1965 = vpack.c.bf16 %v1940, %v1939
        %v1966 = vpack.c.bf16 %v1942, %v1941
        %v1967 = vpack.c.bf16 %v1944, %v1943
        %v1968 = vpack.c.bf16 %v1946, %v1945
        %v1969 = vpack.c.bf16 %v1948, %v1947
        %v1970 = vpack.c.bf16 %v1950, %v1949
        %v1971 = vpack.c.bf16 %v1952, %v1951
        %v1972 = vpack.c.bf16 %v1954, %v1953
        %v1973 = vpack.c.bf16 %v1956, %v1955
        %v1974 = vpack.c.bf16 %v1958, %v1957
        %v1975 = vmul.f32 %v726, 0.35355338
        %v1976 = vmul.f32 %v729, 0.35355338
        %v1977 = vmul.f32 %v734, 0.35355338
        %v1978 = vmul.f32 %v737, 0.35355338
        %v1979 = vmul.f32 %v742, 0.35355338
        %v1980 = vmul.f32 %v745, 0.35355338
        %v1981 = vmul.f32 %v750, 0.35355338
        %v1982 = vmul.f32 %v753, 0.35355338
        %v1983 = vmul.f32 %v758, 0.35355338
        %v1984 = vmul.f32 %v761, 0.35355338
        %v1985 = vmul.f32 %v766, 0.35355338
        %v1986 = vmul.f32 %v769, 0.35355338
        %v1987 = vmul.f32 %v774, 0.35355338
        %v1988 = vmul.f32 %v777, 0.35355338
        %v1989 = vmul.f32 %v782, 0.35355338
        %v1990 = vmul.f32 %v785, 0.35355338
        %v1991 = vmul.f32 %v790, 0.35355338
        %v1992 = vmul.f32 %v793, 0.35355338
        %v1993 = vmul.f32 %v798, 0.35355338
        %v1994 = vmul.f32 %v801, 0.35355338
        %v1995 = vmul.f32 %v806, 0.35355338
        %v1996 = vmul.f32 %v809, 0.35355338
        %v1997 = vmul.f32 %v814, 0.35355338
        %v1998 = vmul.f32 %v817, 0.35355338
        %v1999 = vmul.f32 %v822, 0.35355338
        %v2000 = vmul.f32 %v825, 0.35355338
        %v2001 = vmul.f32 %v830, 0.35355338
        %v2002 = vmul.f32 %v833, 0.35355338
        %v2003 = vmul.f32 %v838, 0.35355338
        %v2004 = vmul.f32 %v841, 0.35355338
        %v2005 = vmul.f32 %v846, 0.35355338
        %v2006 = vmul.f32 %v849, 0.35355338
        %v2007 = vpack.c.bf16 %v1976, %v1975
        %v2008 = vpack.c.bf16 %v1978, %v1977
        %v2009 = vpack.c.bf16 %v1980, %v1979
        %v2010 = vpack.c.bf16 %v1982, %v1981
        %v2011 = vpack.c.bf16 %v1984, %v1983
        %v2012 = vpack.c.bf16 %v1986, %v1985
        %v2013 = vpack.c.bf16 %v1988, %v1987
        %v2014 = vpack.c.bf16 %v1990, %v1989
        %v2015 = vpack.c.bf16 %v1992, %v1991
        %v2016 = vpack.c.bf16 %v1994, %v1993
        %v2017 = vpack.c.bf16 %v1996, %v1995
        %v2018 = vpack.c.bf16 %v1998, %v1997
        %v2019 = vpack.c.bf16 %v2000, %v1999
        %v2020 = vpack.c.bf16 %v2002, %v2001
        %v2021 = vpack.c.bf16 %v2004, %v2003
        %v2022 = vpack.c.bf16 %v2006, %v2005
        %v2023 = vpack.c.bf16 %v729, %v726
        %v2024 = vpack.c.bf16 %v737, %v734
        %v2025 = vpack.c.bf16 %v745, %v742
        %v2026 = vpack.c.bf16 %v753, %v750
        %v2027 = vpack.c.bf16 %v761, %v758
        %v2028 = vpack.c.bf16 %v769, %v766
        %v2029 = vpack.c.bf16 %v777, %v774
        %v2030 = vpack.c.bf16 %v785, %v782
        %v2031 = vpack.c.bf16 %v793, %v790
        %v2032 = vpack.c.bf16 %v801, %v798
        %v2033 = vpack.c.bf16 %v809, %v806
        %v2034 = vpack.c.bf16 %v817, %v814
        %v2035 = vpack.c.bf16 %v825, %v822
        %v2036 = vpack.c.bf16 %v833, %v830
        %v2037 = vpack.c.bf16 %v841, %v838
        %v2038 = vpack.c.bf16 %v849, %v846
        %2055 = vrot.lane.b32.xlu0 %v1959, 64
        %v2056 = vpop.permute.xlu0 %2055
        %2057 = vrot.lane.b32.xlu0 %v1960, 64
        %v2058 = vpop.permute.xlu0 %2057
        %2059 = vrot.lane.b32.xlu0 %v1961, 64
        %v2060 = vpop.permute.xlu0 %2059
        %2061 = vrot.lane.b32.xlu0 %v1962, 64
        %v2062 = vpop.permute.xlu0 %2061
        %2063 = vrot.lane.b32.xlu0 %v1963, 64
        %v2064 = vpop.permute.xlu0 %2063
        %2065 = vrot.lane.b32.xlu0 %v1964, 64
        %v2066 = vpop.permute.xlu0 %2065
        %2067 = vrot.lane.b32.xlu0 %v1965, 64
        %v2068 = vpop.permute.xlu0 %2067
        %2069 = vrot.lane.b32.xlu0 %v1966, 64
        %v2070 = vpop.permute.xlu0 %2069
        %2071 = vrot.lane.b32.xlu0 %v1967, 64
        %v2072 = vpop.permute.xlu0 %2071
        %2073 = vrot.lane.b32.xlu0 %v1968, 64
        %v2074 = vpop.permute.xlu0 %2073
        %2075 = vrot.lane.b32.xlu0 %v1969, 64
        %v2076 = vpop.permute.xlu0 %2075
        %2077 = vrot.lane.b32.xlu0 %v1970, 64
        %v2078 = vpop.permute.xlu0 %2077
        %2079 = vrot.lane.b32.xlu0 %v1971, 64
        %v2080 = vpop.permute.xlu0 %2079
        %2081 = vrot.lane.b32.xlu0 %v1972, 64
        %v2082 = vpop.permute.xlu0 %2081
        %2083 = vrot.lane.b32.xlu0 %v1973, 64
        %v2084 = vpop.permute.xlu0 %2083
        %2085 = vrot.lane.b32.xlu0 %v1974, 64
        %v2086 = vpop.permute.xlu0 %2085
        %v2088 = vsel %vm964, %v2056, 0
        %v2091 = vsel %vm964, %v2058, 0
        %v2094 = vsel %vm964, %v2060, 0
        %v2097 = vsel %vm964, %v2062, 0
        %v2100 = vsel %vm964, %v2064, 0
        %v2103 = vsel %vm964, %v2066, 0
        %v2106 = vsel %vm964, %v2068, 0
        %v2109 = vsel %vm964, %v2070, 0
        %v2112 = vsel %vm964, %v2072, 0
        %v2115 = vsel %vm964, %v2074, 0
        %v2118 = vsel %vm964, %v2076, 0
        %v2121 = vsel %vm964, %v2078, 0
        %v2124 = vsel %vm964, %v2080, 0
        %v2127 = vsel %vm964, %v2082, 0
        %v2130 = vsel %vm964, %v2084, 0
        %v2133 = vsel %vm964, %v2086, 0
        %v2136 = vsel %vm964, %v2007, 0
        %v2139 = vsel %vm964, %v2008, 0
        %v2142 = vsel %vm964, %v2009, 0
        %v2145 = vsel %vm964, %v2010, 0
        %v2148 = vsel %vm964, %v2011, 0
        %v2151 = vsel %vm964, %v2012, 0
        %v2154 = vsel %vm964, %v2013, 0
        %v2157 = vsel %vm964, %v2014, 0
        %v2160 = vsel %vm964, %v2015, 0
        %v2163 = vsel %vm964, %v2016, 0
        %v2166 = vsel %vm964, %v2017, 0
        %v2169 = vsel %vm964, %v2018, 0
        %v2172 = vsel %vm964, %v2019, 0
        %v2175 = vsel %vm964, %v2020, 0
        %v2178 = vsel %vm964, %v2021, 0
        %v2181 = vsel %vm964, %v2022, 0
        %2183 = vmatprep.subr.bf16.mxu0 0
        %2184 = vmatpush1.bf16.xpose.msra.mxu0 %v2157
        %2185 = vmatprep.subr.bf16.mxu0 0
        %2186 = vmatpush1.bf16.xpose.msra.mxu0 %v2154
        %2187 = vmatprep.subr.bf16.mxu0 0
        %2188 = vmatpush1.bf16.xpose.msra.mxu0 %v2151
        %2189 = vmatprep.subr.bf16.mxu0 0
        %2190 = vmatpush1.bf16.xpose.msra.mxu0 %v2148
        %2191 = vmatprep.subr.bf16.mxu0 0
        %2192 = vmatpush1.bf16.xpose.msra.mxu0 %v2145
        %2193 = vmatprep.subr.bf16.mxu0 0
        %2194 = vmatpush1.bf16.xpose.msra.mxu0 %v2142
        %2195 = vmatprep.subr.bf16.mxu0 0
        %2196 = vmatpush1.bf16.xpose.msra.mxu0 %v2139
        %2197 = vmatprep.subr.bf16.mxu0 0
        %2198 = vmatpush1.bf16.xpose.msra.mxu0 %v2136
        %2199 = vmatprep.subr.bf16.mxu0 0
        %2200 = vmatpush2.bf16.xpose.msra.mxu0 %v2181
        %2201 = vmatprep.subr.bf16.mxu0 0
        %2202 = vmatpush2.bf16.xpose.msra.mxu0 %v2178
        %2203 = vmatprep.subr.bf16.mxu0 0
        %2204 = vmatpush2.bf16.xpose.msra.mxu0 %v2175
        %2205 = vmatprep.subr.bf16.mxu0 0
        %2206 = vmatpush2.bf16.xpose.msra.mxu0 %v2172
        %2207 = vmatprep.subr.bf16.mxu0 0
        %2208 = vmatpush2.bf16.xpose.msra.mxu0 %v2169
        %2209 = vmatprep.subr.bf16.mxu0 0
        %2210 = vmatpush2.bf16.xpose.msra.mxu0 %v2166
        %2211 = vmatprep.subr.bf16.mxu0 0
        %2212 = vmatpush2.bf16.xpose.msra.mxu0 %v2163
        %2213 = vmatprep.subr.bf16.mxu0 0
        %2214 = vmatpush2.bf16.xpose.msra.mxu0 %v2160
        %2215 = vmatprep.mubr.bf16.mxu0 0
        %2216 = vmatmul.mubr.bf16.gmra.mxu0 %v2088
        %v2217 = vpop.f32.mrf.mxu0
        %v2218 = vadd.f32 0.0, %v2217
        %v2219 = vpop.f32.mrf.mxu0
        %v2220 = vadd.f32 0.0, %v2219
        %v2221 = vpop.f32.mrf.mxu0
        %v2222 = vadd.f32 0.0, %v2221
        %v2223 = vpop.f32.mrf.mxu0
        %v2224 = vadd.f32 0.0, %v2223
        %2225 = vmatprep.mubr.bf16.mxu0 0
        %2226 = vmatmul.mubr.bf16.gmra.mxu0 %v2091
        %v2227 = vpop.f32.mrf.mxu0
        %v2228 = vadd.f32 0.0, %v2227
        %v2229 = vpop.f32.mrf.mxu0
        %v2230 = vadd.f32 0.0, %v2229
        %v2231 = vpop.f32.mrf.mxu0
        %v2232 = vadd.f32 0.0, %v2231
        %v2233 = vpop.f32.mrf.mxu0
        %v2234 = vadd.f32 0.0, %v2233
        %2235 = vmatprep.mubr.bf16.mxu0 0
        %2236 = vmatmul.mubr.bf16.gmra.mxu0 %v2094
        %v2237 = vpop.f32.mrf.mxu0
        %v2238 = vadd.f32 0.0, %v2237
        %v2239 = vpop.f32.mrf.mxu0
        %v2240 = vadd.f32 0.0, %v2239
        %v2241 = vpop.f32.mrf.mxu0
        %v2242 = vadd.f32 0.0, %v2241
        %v2243 = vpop.f32.mrf.mxu0
        %v2244 = vadd.f32 0.0, %v2243
        %2245 = vmatprep.mubr.bf16.mxu0 0
        %2246 = vmatmul.mubr.bf16.gmra.mxu0 %v2097
        %v2247 = vpop.f32.mrf.mxu0
        %v2248 = vadd.f32 0.0, %v2247
        %v2249 = vpop.f32.mrf.mxu0
        %v2250 = vadd.f32 0.0, %v2249
        %v2251 = vpop.f32.mrf.mxu0
        %v2252 = vadd.f32 0.0, %v2251
        %v2253 = vpop.f32.mrf.mxu0
        %v2254 = vadd.f32 0.0, %v2253
        %2255 = vmatprep.mubr.bf16.mxu0 0
        %2256 = vmatmul.mubr.bf16.gmra.mxu0 %v2100
        %v2257 = vpop.f32.mrf.mxu0
        %v2258 = vadd.f32 0.0, %v2257
        %v2259 = vpop.f32.mrf.mxu0
        %v2260 = vadd.f32 0.0, %v2259
        %v2261 = vpop.f32.mrf.mxu0
        %v2262 = vadd.f32 0.0, %v2261
        %v2263 = vpop.f32.mrf.mxu0
        %v2264 = vadd.f32 0.0, %v2263
        %2265 = vmatprep.mubr.bf16.mxu0 0
        %2266 = vmatmul.mubr.bf16.gmra.mxu0 %v2103
        %v2267 = vpop.f32.mrf.mxu0
        %v2268 = vadd.f32 0.0, %v2267
        %v2269 = vpop.f32.mrf.mxu0
        %v2270 = vadd.f32 0.0, %v2269
        %v2271 = vpop.f32.mrf.mxu0
        %v2272 = vadd.f32 0.0, %v2271
        %v2273 = vpop.f32.mrf.mxu0
        %v2274 = vadd.f32 0.0, %v2273
        %2275 = vmatprep.mubr.bf16.mxu0 0
        %2276 = vmatmul.mubr.bf16.gmra.mxu0 %v2106
        %v2277 = vpop.f32.mrf.mxu0
        %v2278 = vadd.f32 0.0, %v2277
        %v2279 = vpop.f32.mrf.mxu0
        %v2280 = vadd.f32 0.0, %v2279
        %v2281 = vpop.f32.mrf.mxu0
        %v2282 = vadd.f32 0.0, %v2281
        %v2283 = vpop.f32.mrf.mxu0
        %v2284 = vadd.f32 0.0, %v2283
        %2285 = vmatprep.mubr.bf16.mxu0 0
        %2286 = vmatmul.mubr.bf16.gmra.mxu0 %v2109
        %v2287 = vpop.f32.mrf.mxu0
        %v2288 = vadd.f32 0.0, %v2287
        %v2289 = vpop.f32.mrf.mxu0
        %v2290 = vadd.f32 0.0, %v2289
        %v2291 = vpop.f32.mrf.mxu0
        %v2292 = vadd.f32 0.0, %v2291
        %v2293 = vpop.f32.mrf.mxu0
        %v2294 = vadd.f32 0.0, %v2293
        %2295 = vmatprep.mubr.bf16.mxu0 0
        %2296 = vmatmul.mubr.bf16.gmra.mxu0 %v2112
        %v2297 = vpop.f32.mrf.mxu0
        %v2298 = vadd.f32 0.0, %v2297
        %v2299 = vpop.f32.mrf.mxu0
        %v2300 = vadd.f32 0.0, %v2299
        %v2301 = vpop.f32.mrf.mxu0
        %v2302 = vadd.f32 0.0, %v2301
        %v2303 = vpop.f32.mrf.mxu0
        %v2304 = vadd.f32 0.0, %v2303
        %2305 = vmatprep.mubr.bf16.mxu0 0
        %2306 = vmatmul.mubr.bf16.gmra.mxu0 %v2115
        %v2307 = vpop.f32.mrf.mxu0
        %v2308 = vadd.f32 0.0, %v2307
        %v2309 = vpop.f32.mrf.mxu0
        %v2310 = vadd.f32 0.0, %v2309
        %v2311 = vpop.f32.mrf.mxu0
        %v2312 = vadd.f32 0.0, %v2311
        %v2313 = vpop.f32.mrf.mxu0
        %v2314 = vadd.f32 0.0, %v2313
        %2315 = vmatprep.mubr.bf16.mxu0 0
        %2316 = vmatmul.mubr.bf16.gmra.mxu0 %v2118
        %v2317 = vpop.f32.mrf.mxu0
        %v2318 = vadd.f32 0.0, %v2317
        %v2319 = vpop.f32.mrf.mxu0
        %v2320 = vadd.f32 0.0, %v2319
        %v2321 = vpop.f32.mrf.mxu0
        %v2322 = vadd.f32 0.0, %v2321
        %v2323 = vpop.f32.mrf.mxu0
        %v2324 = vadd.f32 0.0, %v2323
        %2325 = vmatprep.mubr.bf16.mxu0 0
        %2326 = vmatmul.mubr.bf16.gmra.mxu0 %v2121
        %v2327 = vpop.f32.mrf.mxu0
        %v2328 = vadd.f32 0.0, %v2327
        %v2329 = vpop.f32.mrf.mxu0
        %v2330 = vadd.f32 0.0, %v2329
        %v2331 = vpop.f32.mrf.mxu0
        %v2332 = vadd.f32 0.0, %v2331
        %v2333 = vpop.f32.mrf.mxu0
        %v2334 = vadd.f32 0.0, %v2333
        %2335 = vmatprep.mubr.bf16.mxu0 0
        %2336 = vmatmul.mubr.bf16.gmra.mxu0 %v2124
        %v2337 = vpop.f32.mrf.mxu0
        %v2338 = vadd.f32 0.0, %v2337
        %v2339 = vpop.f32.mrf.mxu0
        %v2340 = vadd.f32 0.0, %v2339
        %v2341 = vpop.f32.mrf.mxu0
        %v2342 = vadd.f32 0.0, %v2341
        %v2343 = vpop.f32.mrf.mxu0
        %v2344 = vadd.f32 0.0, %v2343
        %2345 = vmatprep.mubr.bf16.mxu0 0
        %2346 = vmatmul.mubr.bf16.gmra.mxu0 %v2127
        %v2347 = vpop.f32.mrf.mxu0
        %v2348 = vadd.f32 0.0, %v2347
        %v2349 = vpop.f32.mrf.mxu0
        %v2350 = vadd.f32 0.0, %v2349
        %v2351 = vpop.f32.mrf.mxu0
        %v2352 = vadd.f32 0.0, %v2351
        %v2353 = vpop.f32.mrf.mxu0
        %v2354 = vadd.f32 0.0, %v2353
        %2355 = vmatprep.mubr.bf16.mxu0 0
        %2356 = vmatmul.mubr.bf16.gmra.mxu0 %v2130
        %v2357 = vpop.f32.mrf.mxu0
        %v2358 = vadd.f32 0.0, %v2357
        %v2359 = vpop.f32.mrf.mxu0
        %v2360 = vadd.f32 0.0, %v2359
        %v2361 = vpop.f32.mrf.mxu0
        %v2362 = vadd.f32 0.0, %v2361
        %v2363 = vpop.f32.mrf.mxu0
        %v2364 = vadd.f32 0.0, %v2363
        %2365 = vmatprep.mubr.bf16.mxu0 0
        %2366 = vmatmul.mubr.bf16.gmra.mxu0 %v2133
        %v2367 = vpop.f32.mrf.mxu0
        %v2368 = vadd.f32 0.0, %v2367
        %v2369 = vpop.f32.mrf.mxu0
        %v2370 = vadd.f32 0.0, %v2369
        %v2371 = vpop.f32.mrf.mxu0
        %v2372 = vadd.f32 0.0, %v2371
        %v2373 = vpop.f32.mrf.mxu0
        %v2374 = vadd.f32 0.0, %v2373
        %2375 = vdwg.mxu0
        %v2376 = vmax.f32 %v2218, %v2220
        %2377 = vmax.xlane.f32.xlu0 %v2376
        %v2378 = vpop.xlane.xlu0 %2377
        %v2379 = vmax.f32 %v2222, %v2224
        %2380 = vmax.xlane.f32.xlu0 %v2379
        %v2381 = vpop.xlane.xlu0 %2380
        %v2382 = vmax.f32 %v2228, %v2230
        %2383 = vmax.xlane.f32.xlu0 %v2382
        %v2384 = vpop.xlane.xlu0 %2383
        %v2385 = vmax.f32 %v2232, %v2234
        %2386 = vmax.xlane.f32.xlu0 %v2385
        %v2387 = vpop.xlane.xlu0 %2386
        %v2388 = vmax.f32 %v2238, %v2240
        %2389 = vmax.xlane.f32.xlu0 %v2388
        %v2390 = vpop.xlane.xlu0 %2389
        %v2391 = vmax.f32 %v2242, %v2244
        %2392 = vmax.xlane.f32.xlu0 %v2391
        %v2393 = vpop.xlane.xlu0 %2392
        %v2394 = vmax.f32 %v2248, %v2250
        %2395 = vmax.xlane.f32.xlu0 %v2394
        %v2396 = vpop.xlane.xlu0 %2395
        %v2397 = vmax.f32 %v2252, %v2254
        %2398 = vmax.xlane.f32.xlu0 %v2397
        %v2399 = vpop.xlane.xlu0 %2398
        %v2400 = vmax.f32 %v2258, %v2260
        %2401 = vmax.xlane.f32.xlu0 %v2400
        %v2402 = vpop.xlane.xlu0 %2401
        %v2403 = vmax.f32 %v2262, %v2264
        %2404 = vmax.xlane.f32.xlu0 %v2403
        %v2405 = vpop.xlane.xlu0 %2404
        %v2406 = vmax.f32 %v2268, %v2270
        %2407 = vmax.xlane.f32.xlu0 %v2406
        %v2408 = vpop.xlane.xlu0 %2407
        %v2409 = vmax.f32 %v2272, %v2274
        %2410 = vmax.xlane.f32.xlu0 %v2409
        %v2411 = vpop.xlane.xlu0 %2410
        %v2412 = vmax.f32 %v2278, %v2280
        %2413 = vmax.xlane.f32.xlu0 %v2412
        %v2414 = vpop.xlane.xlu0 %2413
        %v2415 = vmax.f32 %v2282, %v2284
        %2416 = vmax.xlane.f32.xlu0 %v2415
        %v2417 = vpop.xlane.xlu0 %2416
        %v2418 = vmax.f32 %v2288, %v2290
        %2419 = vmax.xlane.f32.xlu0 %v2418
        %v2420 = vpop.xlane.xlu0 %2419
        %v2421 = vmax.f32 %v2292, %v2294
        %2422 = vmax.xlane.f32.xlu0 %v2421
        %v2423 = vpop.xlane.xlu0 %2422
        %v2424 = vmax.f32 %v2298, %v2300
        %2425 = vmax.xlane.f32.xlu0 %v2424
        %v2426 = vpop.xlane.xlu0 %2425
        %v2427 = vmax.f32 %v2302, %v2304
        %2428 = vmax.xlane.f32.xlu0 %v2427
        %v2429 = vpop.xlane.xlu0 %2428
        %v2430 = vmax.f32 %v2308, %v2310
        %2431 = vmax.xlane.f32.xlu0 %v2430
        %v2432 = vpop.xlane.xlu0 %2431
        %v2433 = vmax.f32 %v2312, %v2314
        %2434 = vmax.xlane.f32.xlu0 %v2433
        %v2435 = vpop.xlane.xlu0 %2434
        %v2436 = vmax.f32 %v2318, %v2320
        %2437 = vmax.xlane.f32.xlu0 %v2436
        %v2438 = vpop.xlane.xlu0 %2437
        %v2439 = vmax.f32 %v2322, %v2324
        %2440 = vmax.xlane.f32.xlu0 %v2439
        %v2441 = vpop.xlane.xlu0 %2440
        %v2442 = vmax.f32 %v2328, %v2330
        %2443 = vmax.xlane.f32.xlu0 %v2442
        %v2444 = vpop.xlane.xlu0 %2443
        %v2445 = vmax.f32 %v2332, %v2334
        %2446 = vmax.xlane.f32.xlu0 %v2445
        %v2447 = vpop.xlane.xlu0 %2446
        %v2448 = vmax.f32 %v2338, %v2340
        %2449 = vmax.xlane.f32.xlu0 %v2448
        %v2450 = vpop.xlane.xlu0 %2449
        %v2451 = vmax.f32 %v2342, %v2344
        %2452 = vmax.xlane.f32.xlu0 %v2451
        %v2453 = vpop.xlane.xlu0 %2452
        %v2454 = vmax.f32 %v2348, %v2350
        %2455 = vmax.xlane.f32.xlu0 %v2454
        %v2456 = vpop.xlane.xlu0 %2455
        %v2457 = vmax.f32 %v2352, %v2354
        %2458 = vmax.xlane.f32.xlu0 %v2457
        %v2459 = vpop.xlane.xlu0 %2458
        %v2460 = vmax.f32 %v2358, %v2360
        %2461 = vmax.xlane.f32.xlu0 %v2460
        %v2462 = vpop.xlane.xlu0 %2461
        %v2463 = vmax.f32 %v2362, %v2364
        %2464 = vmax.xlane.f32.xlu0 %v2463
        %v2465 = vpop.xlane.xlu0 %2464
        %v2466 = vmax.f32 %v2368, %v2370
        %2467 = vmax.xlane.f32.xlu0 %v2466
        %v2468 = vpop.xlane.xlu0 %2467
        %v2469 = vmax.f32 %v2372, %v2374
        %2470 = vmax.xlane.f32.xlu0 %v2469
        %v2471 = vpop.xlane.xlu0 %2470
        %v2472 = vsub.f32 %v2218, %v2378
        %v2473 = vsub.f32 %v2220, %v2378
        %v2474 = vsub.f32 %v2222, %v2381
        %v2475 = vsub.f32 %v2224, %v2381
        %v2476 = vsub.f32 %v2228, %v2384
        %v2477 = vsub.f32 %v2230, %v2384
        %v2478 = vsub.f32 %v2232, %v2387
        %v2479 = vsub.f32 %v2234, %v2387
        %v2480 = vsub.f32 %v2238, %v2390
        %v2481 = vsub.f32 %v2240, %v2390
        %v2482 = vsub.f32 %v2242, %v2393
        %v2483 = vsub.f32 %v2244, %v2393
        %v2484 = vsub.f32 %v2248, %v2396
        %v2485 = vsub.f32 %v2250, %v2396
        %v2486 = vsub.f32 %v2252, %v2399
        %v2487 = vsub.f32 %v2254, %v2399
        %v2488 = vsub.f32 %v2258, %v2402
        %v2489 = vsub.f32 %v2260, %v2402
        %v2490 = vsub.f32 %v2262, %v2405
        %v2491 = vsub.f32 %v2264, %v2405
        %v2492 = vsub.f32 %v2268, %v2408
        %v2493 = vsub.f32 %v2270, %v2408
        %v2494 = vsub.f32 %v2272, %v2411
        %v2495 = vsub.f32 %v2274, %v2411
        %v2496 = vsub.f32 %v2278, %v2414
        %v2497 = vsub.f32 %v2280, %v2414
        %v2498 = vsub.f32 %v2282, %v2417
        %v2499 = vsub.f32 %v2284, %v2417
        %v2500 = vsub.f32 %v2288, %v2420
        %v2501 = vsub.f32 %v2290, %v2420
        %v2502 = vsub.f32 %v2292, %v2423
        %v2503 = vsub.f32 %v2294, %v2423
        %v2504 = vsub.f32 %v2298, %v2426
        %v2505 = vsub.f32 %v2300, %v2426
        %v2506 = vsub.f32 %v2302, %v2429
        %v2507 = vsub.f32 %v2304, %v2429
        %v2508 = vsub.f32 %v2308, %v2432
        %v2509 = vsub.f32 %v2310, %v2432
        %v2510 = vsub.f32 %v2312, %v2435
        %v2511 = vsub.f32 %v2314, %v2435
        %v2512 = vsub.f32 %v2318, %v2438
        %v2513 = vsub.f32 %v2320, %v2438
        %v2514 = vsub.f32 %v2322, %v2441
        %v2515 = vsub.f32 %v2324, %v2441
        %v2516 = vsub.f32 %v2328, %v2444
        %v2517 = vsub.f32 %v2330, %v2444
        %v2518 = vsub.f32 %v2332, %v2447
        %v2519 = vsub.f32 %v2334, %v2447
        %v2520 = vsub.f32 %v2338, %v2450
        %v2521 = vsub.f32 %v2340, %v2450
        %v2522 = vsub.f32 %v2342, %v2453
        %v2523 = vsub.f32 %v2344, %v2453
        %v2524 = vsub.f32 %v2348, %v2456
        %v2525 = vsub.f32 %v2350, %v2456
        %v2526 = vsub.f32 %v2352, %v2459
        %v2527 = vsub.f32 %v2354, %v2459
        %v2528 = vsub.f32 %v2358, %v2462
        %v2529 = vsub.f32 %v2360, %v2462
        %v2530 = vsub.f32 %v2362, %v2465
        %v2531 = vsub.f32 %v2364, %v2465
        %v2532 = vsub.f32 %v2368, %v2468
        %v2533 = vsub.f32 %v2370, %v2468
        %v2534 = vsub.f32 %v2372, %v2471
        %v2535 = vsub.f32 %v2374, %v2471
        %v2536 = vmul.f32 %v2472, 1.442695
        %v2537 = vpow.pop %v2536
        %v2538 = vmul.f32 %v2473, 1.442695
        %v2539 = vpow.pop %v2538
        %v2540 = vmul.f32 %v2474, 1.442695
        %v2541 = vpow.pop %v2540
        %v2542 = vmul.f32 %v2475, 1.442695
        %v2543 = vpow.pop %v2542
        %v2544 = vmul.f32 %v2476, 1.442695
        %v2545 = vpow.pop %v2544
        %v2546 = vmul.f32 %v2477, 1.442695
        %v2547 = vpow.pop %v2546
        %v2548 = vmul.f32 %v2478, 1.442695
        %v2549 = vpow.pop %v2548
        %v2550 = vmul.f32 %v2479, 1.442695
        %v2551 = vpow.pop %v2550
        %v2552 = vmul.f32 %v2480, 1.442695
        %v2553 = vpow.pop %v2552
        %v2554 = vmul.f32 %v2481, 1.442695
        %v2555 = vpow.pop %v2554
        %v2556 = vmul.f32 %v2482, 1.442695
        %v2557 = vpow.pop %v2556
        %v2558 = vmul.f32 %v2483, 1.442695
        %v2559 = vpow.pop %v2558
        %v2560 = vmul.f32 %v2484, 1.442695
        %v2561 = vpow.pop %v2560
        %v2562 = vmul.f32 %v2485, 1.442695
        %v2563 = vpow.pop %v2562
        %v2564 = vmul.f32 %v2486, 1.442695
        %v2565 = vpow.pop %v2564
        %v2566 = vmul.f32 %v2487, 1.442695
        %v2567 = vpow.pop %v2566
        %v2568 = vmul.f32 %v2488, 1.442695
        %v2569 = vpow.pop %v2568
        %v2570 = vmul.f32 %v2489, 1.442695
        %v2571 = vpow.pop %v2570
        %v2572 = vmul.f32 %v2490, 1.442695
        %v2573 = vpow.pop %v2572
        %v2574 = vmul.f32 %v2491, 1.442695
        %v2575 = vpow.pop %v2574
        %v2576 = vmul.f32 %v2492, 1.442695
        %v2577 = vpow.pop %v2576
        %v2578 = vmul.f32 %v2493, 1.442695
        %v2579 = vpow.pop %v2578
        %v2580 = vmul.f32 %v2494, 1.442695
        %v2581 = vpow.pop %v2580
        %v2582 = vmul.f32 %v2495, 1.442695
        %v2583 = vpow.pop %v2582
        %v2584 = vmul.f32 %v2496, 1.442695
        %v2585 = vpow.pop %v2584
        %v2586 = vmul.f32 %v2497, 1.442695
        %v2587 = vpow.pop %v2586
        %v2588 = vmul.f32 %v2498, 1.442695
        %v2589 = vpow.pop %v2588
        %v2590 = vmul.f32 %v2499, 1.442695
        %v2591 = vpow.pop %v2590
        %v2592 = vmul.f32 %v2500, 1.442695
        %v2593 = vpow.pop %v2592
        %v2594 = vmul.f32 %v2501, 1.442695
        %v2595 = vpow.pop %v2594
        %v2596 = vmul.f32 %v2502, 1.442695
        %v2597 = vpow.pop %v2596
        %v2598 = vmul.f32 %v2503, 1.442695
        %v2599 = vpow.pop %v2598
        %v2600 = vmul.f32 %v2504, 1.442695
        %v2601 = vpow.pop %v2600
        %v2602 = vmul.f32 %v2505, 1.442695
        %v2603 = vpow.pop %v2602
        %v2604 = vmul.f32 %v2506, 1.442695
        %v2605 = vpow.pop %v2604
        %v2606 = vmul.f32 %v2507, 1.442695
        %v2607 = vpow.pop %v2606
        %v2608 = vmul.f32 %v2508, 1.442695
        %v2609 = vpow.pop %v2608
        %v2610 = vmul.f32 %v2509, 1.442695
        %v2611 = vpow.pop %v2610
        %v2612 = vmul.f32 %v2510, 1.442695
        %v2613 = vpow.pop %v2612
        %v2614 = vmul.f32 %v2511, 1.442695
        %v2615 = vpow.pop %v2614
        %v2616 = vmul.f32 %v2512, 1.442695
        %v2617 = vpow.pop %v2616
        %v2618 = vmul.f32 %v2513, 1.442695
        %v2619 = vpow.pop %v2618
        %v2620 = vmul.f32 %v2514, 1.442695
        %v2621 = vpow.pop %v2620
        %v2622 = vmul.f32 %v2515, 1.442695
        %v2623 = vpow.pop %v2622
        %v2624 = vmul.f32 %v2516, 1.442695
        %v2625 = vpow.pop %v2624
        %v2626 = vmul.f32 %v2517, 1.442695
        %v2627 = vpow.pop %v2626
        %v2628 = vmul.f32 %v2518, 1.442695
        %v2629 = vpow.pop %v2628
        %v2630 = vmul.f32 %v2519, 1.442695
        %v2631 = vpow.pop %v2630
        %v2632 = vmul.f32 %v2520, 1.442695
        %v2633 = vpow.pop %v2632
        %v2634 = vmul.f32 %v2521, 1.442695
        %v2635 = vpow.pop %v2634
        %v2636 = vmul.f32 %v2522, 1.442695
        %v2637 = vpow.pop %v2636
        %v2638 = vmul.f32 %v2523, 1.442695
        %v2639 = vpow.pop %v2638
        %v2640 = vmul.f32 %v2524, 1.442695
        %v2641 = vpow.pop %v2640
        %v2642 = vmul.f32 %v2525, 1.442695
        %v2643 = vpow.pop %v2642
        %v2644 = vmul.f32 %v2526, 1.442695
        %v2645 = vpow.pop %v2644
        %v2646 = vmul.f32 %v2527, 1.442695
        %v2647 = vpow.pop %v2646
        %v2648 = vmul.f32 %v2528, 1.442695
        %v2649 = vpow.pop %v2648
        %v2650 = vmul.f32 %v2529, 1.442695
        %v2651 = vpow.pop %v2650
        %v2652 = vmul.f32 %v2530, 1.442695
        %v2653 = vpow.pop %v2652
        %v2654 = vmul.f32 %v2531, 1.442695
        %v2655 = vpow.pop %v2654
        %v2656 = vmul.f32 %v2532, 1.442695
        %v2657 = vpow.pop %v2656
        %v2658 = vmul.f32 %v2533, 1.442695
        %v2659 = vpow.pop %v2658
        %v2660 = vmul.f32 %v2534, 1.442695
        %v2661 = vpow.pop %v2660
        %v2662 = vmul.f32 %v2535, 1.442695
        %v2663 = vpow.pop %v2662
        %v2664 = vadd.f32 %v2537, %v2539
        %2665 = vadd.xlane.f32.xlu0 %v2664
        %v2666 = vpop.xlane.xlu0 %2665
        %v2667 = vadd.f32 %v2541, %v2543
        %2668 = vadd.xlane.f32.xlu0 %v2667
        %v2669 = vpop.xlane.xlu0 %2668
        %v2670 = vadd.f32 %v2545, %v2547
        %2671 = vadd.xlane.f32.xlu0 %v2670
        %v2672 = vpop.xlane.xlu0 %2671
        %v2673 = vadd.f32 %v2549, %v2551
        %2674 = vadd.xlane.f32.xlu0 %v2673
        %v2675 = vpop.xlane.xlu0 %2674
        %v2676 = vadd.f32 %v2553, %v2555
        %2677 = vadd.xlane.f32.xlu0 %v2676
        %v2678 = vpop.xlane.xlu0 %2677
        %v2679 = vadd.f32 %v2557, %v2559
        %2680 = vadd.xlane.f32.xlu0 %v2679
        %v2681 = vpop.xlane.xlu0 %2680
        %v2682 = vadd.f32 %v2561, %v2563
        %2683 = vadd.xlane.f32.xlu0 %v2682
        %v2684 = vpop.xlane.xlu0 %2683
        %v2685 = vadd.f32 %v2565, %v2567
        %2686 = vadd.xlane.f32.xlu0 %v2685
        %v2687 = vpop.xlane.xlu0 %2686
        %v2688 = vadd.f32 %v2569, %v2571
        %2689 = vadd.xlane.f32.xlu0 %v2688
        %v2690 = vpop.xlane.xlu0 %2689
        %v2691 = vadd.f32 %v2573, %v2575
        %2692 = vadd.xlane.f32.xlu0 %v2691
        %v2693 = vpop.xlane.xlu0 %2692
        %v2694 = vadd.f32 %v2577, %v2579
        %2695 = vadd.xlane.f32.xlu0 %v2694
        %v2696 = vpop.xlane.xlu0 %2695
        %v2697 = vadd.f32 %v2581, %v2583
        %2698 = vadd.xlane.f32.xlu0 %v2697
        %v2699 = vpop.xlane.xlu0 %2698
        %v2700 = vadd.f32 %v2585, %v2587
        %2701 = vadd.xlane.f32.xlu0 %v2700
        %v2702 = vpop.xlane.xlu0 %2701
        %v2703 = vadd.f32 %v2589, %v2591
        %2704 = vadd.xlane.f32.xlu0 %v2703
        %v2705 = vpop.xlane.xlu0 %2704
        %v2706 = vadd.f32 %v2593, %v2595
        %2707 = vadd.xlane.f32.xlu0 %v2706
        %v2708 = vpop.xlane.xlu0 %2707
        %v2709 = vadd.f32 %v2597, %v2599
        %2710 = vadd.xlane.f32.xlu0 %v2709
        %v2711 = vpop.xlane.xlu0 %2710
        %v2712 = vadd.f32 %v2601, %v2603
        %2713 = vadd.xlane.f32.xlu0 %v2712
        %v2714 = vpop.xlane.xlu0 %2713
        %v2715 = vadd.f32 %v2605, %v2607
        %2716 = vadd.xlane.f32.xlu0 %v2715
        %v2717 = vpop.xlane.xlu0 %2716
        %v2718 = vadd.f32 %v2609, %v2611
        %2719 = vadd.xlane.f32.xlu0 %v2718
        %v2720 = vpop.xlane.xlu0 %2719
        %v2721 = vadd.f32 %v2613, %v2615
        %2722 = vadd.xlane.f32.xlu0 %v2721
        %v2723 = vpop.xlane.xlu0 %2722
        %v2724 = vadd.f32 %v2617, %v2619
        %2725 = vadd.xlane.f32.xlu0 %v2724
        %v2726 = vpop.xlane.xlu0 %2725
        %v2727 = vadd.f32 %v2621, %v2623
        %2728 = vadd.xlane.f32.xlu0 %v2727
        %v2729 = vpop.xlane.xlu0 %2728
        %v2730 = vadd.f32 %v2625, %v2627
        %2731 = vadd.xlane.f32.xlu0 %v2730
        %v2732 = vpop.xlane.xlu0 %2731
        %v2733 = vadd.f32 %v2629, %v2631
        %2734 = vadd.xlane.f32.xlu0 %v2733
        %v2735 = vpop.xlane.xlu0 %2734
        %v2736 = vadd.f32 %v2633, %v2635
        %2737 = vadd.xlane.f32.xlu0 %v2736
        %v2738 = vpop.xlane.xlu0 %2737
        %v2739 = vadd.f32 %v2637, %v2639
        %2740 = vadd.xlane.f32.xlu0 %v2739
        %v2741 = vpop.xlane.xlu0 %2740
        %v2742 = vadd.f32 %v2641, %v2643
        %2743 = vadd.xlane.f32.xlu0 %v2742
        %v2744 = vpop.xlane.xlu0 %2743
        %v2745 = vadd.f32 %v2645, %v2647
        %2746 = vadd.xlane.f32.xlu0 %v2745
        %v2747 = vpop.xlane.xlu0 %2746
        %v2748 = vadd.f32 %v2649, %v2651
        %2749 = vadd.xlane.f32.xlu0 %v2748
        %v2750 = vpop.xlane.xlu0 %2749
        %v2751 = vadd.f32 %v2653, %v2655
        %2752 = vadd.xlane.f32.xlu0 %v2751
        %v2753 = vpop.xlane.xlu0 %2752
        %v2754 = vadd.f32 %v2657, %v2659
        %2755 = vadd.xlane.f32.xlu0 %v2754
        %v2756 = vpop.xlane.xlu0 %2755
        %v2757 = vadd.f32 %v2661, %v2663
        %2758 = vadd.xlane.f32.xlu0 %v2757
        %v2759 = vpop.xlane.xlu0 %2758
        %v2760 = vrcp.pop %v2666
        %v2761 = vrcp.pop %v2669
        %v2762 = vrcp.pop %v2672
        %v2763 = vrcp.pop %v2675
        %v2764 = vrcp.pop %v2678
        %v2765 = vrcp.pop %v2681
        %v2766 = vrcp.pop %v2684
        %v2767 = vrcp.pop %v2687
        %v2768 = vrcp.pop %v2690
        %v2769 = vrcp.pop %v2693
        %v2770 = vrcp.pop %v2696
        %v2771 = vrcp.pop %v2699
        %v2772 = vrcp.pop %v2702
        %v2773 = vrcp.pop %v2705
        %v2774 = vrcp.pop %v2708
        %v2775 = vrcp.pop %v2711
        %v2776 = vrcp.pop %v2714
        %v2777 = vrcp.pop %v2717
        %v2778 = vrcp.pop %v2720
        %v2779 = vrcp.pop %v2723
        %v2780 = vrcp.pop %v2726
        %v2781 = vrcp.pop %v2729
        %v2782 = vrcp.pop %v2732
        %v2783 = vrcp.pop %v2735
        %v2784 = vrcp.pop %v2738
        %v2785 = vrcp.pop %v2741
        %v2786 = vrcp.pop %v2744
        %v2787 = vrcp.pop %v2747
        %v2788 = vrcp.pop %v2750
        %v2789 = vrcp.pop %v2753
        %v2790 = vrcp.pop %v2756
        %v2791 = vrcp.pop %v2759
        %v2792 = vmul.f32 %v2537, %v2760
        %v2793 = vmul.f32 %v2539, %v2760
        %v2794 = vmul.f32 %v2541, %v2761
        %v2795 = vmul.f32 %v2543, %v2761
        %v2796 = vmul.f32 %v2545, %v2762
        %v2797 = vmul.f32 %v2547, %v2762
        %v2798 = vmul.f32 %v2549, %v2763
        %v2799 = vmul.f32 %v2551, %v2763
        %v2800 = vmul.f32 %v2553, %v2764
        %v2801 = vmul.f32 %v2555, %v2764
        %v2802 = vmul.f32 %v2557, %v2765
        %v2803 = vmul.f32 %v2559, %v2765
        %v2804 = vmul.f32 %v2561, %v2766
        %v2805 = vmul.f32 %v2563, %v2766
        %v2806 = vmul.f32 %v2565, %v2767
        %v2807 = vmul.f32 %v2567, %v2767
        %v2808 = vmul.f32 %v2569, %v2768
        %v2809 = vmul.f32 %v2571, %v2768
        %v2810 = vmul.f32 %v2573, %v2769
        %v2811 = vmul.f32 %v2575, %v2769
        %v2812 = vmul.f32 %v2577, %v2770
        %v2813 = vmul.f32 %v2579, %v2770
        %v2814 = vmul.f32 %v2581, %v2771
        %v2815 = vmul.f32 %v2583, %v2771
        %v2816 = vmul.f32 %v2585, %v2772
        %v2817 = vmul.f32 %v2587, %v2772
        %v2818 = vmul.f32 %v2589, %v2773
        %v2819 = vmul.f32 %v2591, %v2773
        %v2820 = vmul.f32 %v2593, %v2774
        %v2821 = vmul.f32 %v2595, %v2774
        %v2822 = vmul.f32 %v2597, %v2775
        %v2823 = vmul.f32 %v2599, %v2775
        %v2824 = vmul.f32 %v2601, %v2776
        %v2825 = vmul.f32 %v2603, %v2776
        %v2826 = vmul.f32 %v2605, %v2777
        %v2827 = vmul.f32 %v2607, %v2777
        %v2828 = vmul.f32 %v2609, %v2778
        %v2829 = vmul.f32 %v2611, %v2778
        %v2830 = vmul.f32 %v2613, %v2779
        %v2831 = vmul.f32 %v2615, %v2779
        %v2832 = vmul.f32 %v2617, %v2780
        %v2833 = vmul.f32 %v2619, %v2780
        %v2834 = vmul.f32 %v2621, %v2781
        %v2835 = vmul.f32 %v2623, %v2781
        %v2836 = vmul.f32 %v2625, %v2782
        %v2837 = vmul.f32 %v2627, %v2782
        %v2838 = vmul.f32 %v2629, %v2783
        %v2839 = vmul.f32 %v2631, %v2783
        %v2840 = vmul.f32 %v2633, %v2784
        %v2841 = vmul.f32 %v2635, %v2784
        %v2842 = vmul.f32 %v2637, %v2785
        %v2843 = vmul.f32 %v2639, %v2785
        %v2844 = vmul.f32 %v2641, %v2786
        %v2845 = vmul.f32 %v2643, %v2786
        %v2846 = vmul.f32 %v2645, %v2787
        %v2847 = vmul.f32 %v2647, %v2787
        %v2848 = vmul.f32 %v2649, %v2788
        %v2849 = vmul.f32 %v2651, %v2788
        %v2850 = vmul.f32 %v2653, %v2789
        %v2851 = vmul.f32 %v2655, %v2789
        %v2852 = vmul.f32 %v2657, %v2790
        %v2853 = vmul.f32 %v2659, %v2790
        %v2854 = vmul.f32 %v2661, %v2791
        %v2855 = vmul.f32 %v2663, %v2791
        %v2856 = vpack.c.bf16 %v2794, %v2792
        %v2857 = vpack.c.bf16 %v2795, %v2793
        %v2858 = vpack.c.bf16 %v2798, %v2796
        %v2859 = vpack.c.bf16 %v2799, %v2797
        %v2860 = vpack.c.bf16 %v2802, %v2800
        %v2861 = vpack.c.bf16 %v2803, %v2801
        %v2862 = vpack.c.bf16 %v2806, %v2804
        %v2863 = vpack.c.bf16 %v2807, %v2805
        %v2864 = vpack.c.bf16 %v2810, %v2808
        %v2865 = vpack.c.bf16 %v2811, %v2809
        %v2866 = vpack.c.bf16 %v2814, %v2812
        %v2867 = vpack.c.bf16 %v2815, %v2813
        %v2868 = vpack.c.bf16 %v2818, %v2816
        %v2869 = vpack.c.bf16 %v2819, %v2817
        %v2870 = vpack.c.bf16 %v2822, %v2820
        %v2871 = vpack.c.bf16 %v2823, %v2821
        %v2872 = vpack.c.bf16 %v2826, %v2824
        %v2873 = vpack.c.bf16 %v2827, %v2825
        %v2874 = vpack.c.bf16 %v2830, %v2828
        %v2875 = vpack.c.bf16 %v2831, %v2829
        %v2876 = vpack.c.bf16 %v2834, %v2832
        %v2877 = vpack.c.bf16 %v2835, %v2833
        %v2878 = vpack.c.bf16 %v2838, %v2836
        %v2879 = vpack.c.bf16 %v2839, %v2837
        %v2880 = vpack.c.bf16 %v2842, %v2840
        %v2881 = vpack.c.bf16 %v2843, %v2841
        %v2882 = vpack.c.bf16 %v2846, %v2844
        %v2883 = vpack.c.bf16 %v2847, %v2845
        %v2884 = vpack.c.bf16 %v2850, %v2848
        %v2885 = vpack.c.bf16 %v2851, %v2849
        %v2886 = vpack.c.bf16 %v2854, %v2852
        %v2887 = vpack.c.bf16 %v2855, %v2853
        %2904 = vrot.lane.b32.xlu0 %v2023, 64
        %v2905 = vpop.permute.xlu0 %2904
        %2906 = vrot.lane.b32.xlu0 %v2024, 64
        %v2907 = vpop.permute.xlu0 %2906
        %2908 = vrot.lane.b32.xlu0 %v2025, 64
        %v2909 = vpop.permute.xlu0 %2908
        %2910 = vrot.lane.b32.xlu0 %v2026, 64
        %v2911 = vpop.permute.xlu0 %2910
        %2912 = vrot.lane.b32.xlu0 %v2027, 64
        %v2913 = vpop.permute.xlu0 %2912
        %2914 = vrot.lane.b32.xlu0 %v2028, 64
        %v2915 = vpop.permute.xlu0 %2914
        %2916 = vrot.lane.b32.xlu0 %v2029, 64
        %v2917 = vpop.permute.xlu0 %2916
        %2918 = vrot.lane.b32.xlu0 %v2030, 64
        %v2919 = vpop.permute.xlu0 %2918
        %2920 = vrot.lane.b32.xlu0 %v2031, 64
        %v2921 = vpop.permute.xlu0 %2920
        %2922 = vrot.lane.b32.xlu0 %v2032, 64
        %v2923 = vpop.permute.xlu0 %2922
        %2924 = vrot.lane.b32.xlu0 %v2033, 64
        %v2925 = vpop.permute.xlu0 %2924
        %2926 = vrot.lane.b32.xlu0 %v2034, 64
        %v2927 = vpop.permute.xlu0 %2926
        %2928 = vrot.lane.b32.xlu0 %v2035, 64
        %v2929 = vpop.permute.xlu0 %2928
        %2930 = vrot.lane.b32.xlu0 %v2036, 64
        %v2931 = vpop.permute.xlu0 %2930
        %2932 = vrot.lane.b32.xlu0 %v2037, 64
        %v2933 = vpop.permute.xlu0 %2932
        %2934 = vrot.lane.b32.xlu0 %v2038, 64
        %v2935 = vpop.permute.xlu0 %2934
        %2952 = vmatprep.subr.bf16.mxu0 0
        %2953 = vmatpush1.bf16.msra.mxu0 %v2919
        %2954 = vmatprep.subr.bf16.mxu0 0
        %2955 = vmatpush1.bf16.msra.mxu0 %v2917
        %2956 = vmatprep.subr.bf16.mxu0 0
        %2957 = vmatpush1.bf16.msra.mxu0 %v2915
        %2958 = vmatprep.subr.bf16.mxu0 0
        %2959 = vmatpush1.bf16.msra.mxu0 %v2913
        %2960 = vmatprep.subr.bf16.mxu0 0
        %2961 = vmatpush1.bf16.msra.mxu0 %v2911
        %2962 = vmatprep.subr.bf16.mxu0 0
        %2963 = vmatpush1.bf16.msra.mxu0 %v2909
        %2964 = vmatprep.subr.bf16.mxu0 0
        %2965 = vmatpush1.bf16.msra.mxu0 %v2907
        %2966 = vmatprep.subr.bf16.mxu0 0
        %2967 = vmatpush1.bf16.msra.mxu0 %v2905
        %2968 = vmatprep.subr.bf16.mxu0 0
        %2969 = vmatpush2.bf16.msra.mxu0 %v2935
        %2970 = vmatprep.subr.bf16.mxu0 0
        %2971 = vmatpush2.bf16.msra.mxu0 %v2933
        %2972 = vmatprep.subr.bf16.mxu0 0
        %2973 = vmatpush2.bf16.msra.mxu0 %v2931
        %2974 = vmatprep.subr.bf16.mxu0 0
        %2975 = vmatpush2.bf16.msra.mxu0 %v2929
        %2976 = vmatprep.subr.bf16.mxu0 0
        %2977 = vmatpush2.bf16.msra.mxu0 %v2927
        %2978 = vmatprep.subr.bf16.mxu0 0
        %2979 = vmatpush2.bf16.msra.mxu0 %v2925
        %2980 = vmatprep.subr.bf16.mxu0 0
        %2981 = vmatpush2.bf16.msra.mxu0 %v2923
        %2982 = vmatprep.subr.bf16.mxu0 0
        %2983 = vmatpush2.bf16.msra.mxu0 %v2921
        %2984 = vmatprep.mubr.bf16.mxu0 %v2857
        %2985 = vmatmul.mubr.bf16.gmra.mxu0 %v2856
        %v2986 = vpop.f32.mrf.mxu0
        %v2987 = vadd.f32 0.0, %v2986
        %v2988 = vpop.f32.mrf.mxu0
        %v2989 = vpop.f32.mrf.mxu0
        %v2990 = vadd.f32 0.0, %v2989
        %v2991 = vpop.f32.mrf.mxu0
        %2992 = vmatprep.mubr.bf16.mxu0 %v2859
        %2993 = vmatmul.mubr.bf16.gmra.mxu0 %v2858
        %v2994 = vpop.f32.mrf.mxu0
        %v2995 = vadd.f32 0.0, %v2994
        %v2996 = vpop.f32.mrf.mxu0
        %v2997 = vpop.f32.mrf.mxu0
        %v2998 = vadd.f32 0.0, %v2997
        %v2999 = vpop.f32.mrf.mxu0
        %3000 = vmatprep.mubr.bf16.mxu0 %v2861
        %3001 = vmatmul.mubr.bf16.gmra.mxu0 %v2860
        %v3002 = vpop.f32.mrf.mxu0
        %v3003 = vadd.f32 0.0, %v3002
        %v3004 = vpop.f32.mrf.mxu0
        %v3005 = vpop.f32.mrf.mxu0
        %v3006 = vadd.f32 0.0, %v3005
        %v3007 = vpop.f32.mrf.mxu0
        %3008 = vmatprep.mubr.bf16.mxu0 %v2863
        %3009 = vmatmul.mubr.bf16.gmra.mxu0 %v2862
        %v3010 = vpop.f32.mrf.mxu0
        %v3011 = vadd.f32 0.0, %v3010
        %v3012 = vpop.f32.mrf.mxu0
        %v3013 = vpop.f32.mrf.mxu0
        %v3014 = vadd.f32 0.0, %v3013
        %v3015 = vpop.f32.mrf.mxu0
        %3016 = vmatprep.mubr.bf16.mxu0 %v2865
        %3017 = vmatmul.mubr.bf16.gmra.mxu0 %v2864
        %v3018 = vpop.f32.mrf.mxu0
        %v3019 = vadd.f32 0.0, %v3018
        %v3020 = vpop.f32.mrf.mxu0
        %v3021 = vpop.f32.mrf.mxu0
        %v3022 = vadd.f32 0.0, %v3021
        %v3023 = vpop.f32.mrf.mxu0
        %3024 = vmatprep.mubr.bf16.mxu0 %v2867
        %3025 = vmatmul.mubr.bf16.gmra.mxu0 %v2866
        %v3026 = vpop.f32.mrf.mxu0
        %v3027 = vadd.f32 0.0, %v3026
        %v3028 = vpop.f32.mrf.mxu0
        %v3029 = vpop.f32.mrf.mxu0
        %v3030 = vadd.f32 0.0, %v3029
        %v3031 = vpop.f32.mrf.mxu0
        %3032 = vmatprep.mubr.bf16.mxu0 %v2869
        %3033 = vmatmul.mubr.bf16.gmra.mxu0 %v2868
        %v3034 = vpop.f32.mrf.mxu0
        %v3035 = vadd.f32 0.0, %v3034
        %v3036 = vpop.f32.mrf.mxu0
        %v3037 = vpop.f32.mrf.mxu0
        %v3038 = vadd.f32 0.0, %v3037
        %v3039 = vpop.f32.mrf.mxu0
        %3040 = vmatprep.mubr.bf16.mxu0 %v2871
        %3041 = vmatmul.mubr.bf16.gmra.mxu0 %v2870
        %v3042 = vpop.f32.mrf.mxu0
        %v3043 = vadd.f32 0.0, %v3042
        %v3044 = vpop.f32.mrf.mxu0
        %v3045 = vpop.f32.mrf.mxu0
        %v3046 = vadd.f32 0.0, %v3045
        %v3047 = vpop.f32.mrf.mxu0
        %3048 = vmatprep.mubr.bf16.mxu0 %v2873
        %3049 = vmatmul.mubr.bf16.gmra.mxu0 %v2872
        %v3050 = vpop.f32.mrf.mxu0
        %v3051 = vadd.f32 0.0, %v3050
        %v3052 = vpop.f32.mrf.mxu0
        %v3053 = vpop.f32.mrf.mxu0
        %v3054 = vadd.f32 0.0, %v3053
        %v3055 = vpop.f32.mrf.mxu0
        %3056 = vmatprep.mubr.bf16.mxu0 %v2875
        %3057 = vmatmul.mubr.bf16.gmra.mxu0 %v2874
        %v3058 = vpop.f32.mrf.mxu0
        %v3059 = vadd.f32 0.0, %v3058
        %v3060 = vpop.f32.mrf.mxu0
        %v3061 = vpop.f32.mrf.mxu0
        %v3062 = vadd.f32 0.0, %v3061
        %v3063 = vpop.f32.mrf.mxu0
        %3064 = vmatprep.mubr.bf16.mxu0 %v2877
        %3065 = vmatmul.mubr.bf16.gmra.mxu0 %v2876
        %v3066 = vpop.f32.mrf.mxu0
        %v3067 = vadd.f32 0.0, %v3066
        %v3068 = vpop.f32.mrf.mxu0
        %v3069 = vpop.f32.mrf.mxu0
        %v3070 = vadd.f32 0.0, %v3069
        %v3071 = vpop.f32.mrf.mxu0
        %3072 = vmatprep.mubr.bf16.mxu0 %v2879
        %3073 = vmatmul.mubr.bf16.gmra.mxu0 %v2878
        %v3074 = vpop.f32.mrf.mxu0
        %v3075 = vadd.f32 0.0, %v3074
        %v3076 = vpop.f32.mrf.mxu0
        %v3077 = vpop.f32.mrf.mxu0
        %v3078 = vadd.f32 0.0, %v3077
        %v3079 = vpop.f32.mrf.mxu0
        %3080 = vmatprep.mubr.bf16.mxu0 %v2881
        %3081 = vmatmul.mubr.bf16.gmra.mxu0 %v2880
        %v3082 = vpop.f32.mrf.mxu0
        %v3083 = vadd.f32 0.0, %v3082
        %v3084 = vpop.f32.mrf.mxu0
        %v3085 = vpop.f32.mrf.mxu0
        %v3086 = vadd.f32 0.0, %v3085
        %v3087 = vpop.f32.mrf.mxu0
        %3088 = vmatprep.mubr.bf16.mxu0 %v2883
        %3089 = vmatmul.mubr.bf16.gmra.mxu0 %v2882
        %v3090 = vpop.f32.mrf.mxu0
        %v3091 = vadd.f32 0.0, %v3090
        %v3092 = vpop.f32.mrf.mxu0
        %v3093 = vpop.f32.mrf.mxu0
        %v3094 = vadd.f32 0.0, %v3093
        %v3095 = vpop.f32.mrf.mxu0
        %3096 = vmatprep.mubr.bf16.mxu0 %v2885
        %3097 = vmatmul.mubr.bf16.gmra.mxu0 %v2884
        %v3098 = vpop.f32.mrf.mxu0
        %v3099 = vadd.f32 0.0, %v3098
        %v3100 = vpop.f32.mrf.mxu0
        %v3101 = vpop.f32.mrf.mxu0
        %v3102 = vadd.f32 0.0, %v3101
        %v3103 = vpop.f32.mrf.mxu0
        %3104 = vmatprep.mubr.bf16.mxu0 %v2887
        %3105 = vmatmul.mubr.bf16.gmra.mxu0 %v2886
        %v3106 = vpop.f32.mrf.mxu0
        %v3107 = vadd.f32 0.0, %v3106
        %v3108 = vpop.f32.mrf.mxu0
        %v3109 = vpop.f32.mrf.mxu0
        %v3110 = vadd.f32 0.0, %v3109
        %v3111 = vpop.f32.mrf.mxu0
        %3112 = vdwg.mxu0
        %3145 = vrot.lane.b32.xlu0 %v2987, 64
        %v3146 = vpop.permute.xlu0 %3145
        %3147 = vrot.lane.b32.xlu0 %v2990, 64
        %v3148 = vpop.permute.xlu0 %3147
        %3149 = vrot.lane.b32.xlu0 %v2995, 64
        %v3150 = vpop.permute.xlu0 %3149
        %3151 = vrot.lane.b32.xlu0 %v2998, 64
        %v3152 = vpop.permute.xlu0 %3151
        %3153 = vrot.lane.b32.xlu0 %v3003, 64
        %v3154 = vpop.permute.xlu0 %3153
        %3155 = vrot.lane.b32.xlu0 %v3006, 64
        %v3156 = vpop.permute.xlu0 %3155
        %3157 = vrot.lane.b32.xlu0 %v3011, 64
        %v3158 = vpop.permute.xlu0 %3157
        %3159 = vrot.lane.b32.xlu0 %v3014, 64
        %v3160 = vpop.permute.xlu0 %3159
        %3161 = vrot.lane.b32.xlu0 %v3019, 64
        %v3162 = vpop.permute.xlu0 %3161
        %3163 = vrot.lane.b32.xlu0 %v3022, 64
        %v3164 = vpop.permute.xlu0 %3163
        %3165 = vrot.lane.b32.xlu0 %v3027, 64
        %v3166 = vpop.permute.xlu0 %3165
        %3167 = vrot.lane.b32.xlu0 %v3030, 64
        %v3168 = vpop.permute.xlu0 %3167
        %3169 = vrot.lane.b32.xlu0 %v3035, 64
        %v3170 = vpop.permute.xlu0 %3169
        %3171 = vrot.lane.b32.xlu0 %v3038, 64
        %v3172 = vpop.permute.xlu0 %3171
        %3173 = vrot.lane.b32.xlu0 %v3043, 64
        %v3174 = vpop.permute.xlu0 %3173
        %3175 = vrot.lane.b32.xlu0 %v3046, 64
        %v3176 = vpop.permute.xlu0 %3175
        %3177 = vrot.lane.b32.xlu0 %v3051, 64
        %v3178 = vpop.permute.xlu0 %3177
        %3179 = vrot.lane.b32.xlu0 %v3054, 64
        %v3180 = vpop.permute.xlu0 %3179
        %3181 = vrot.lane.b32.xlu0 %v3059, 64
        %v3182 = vpop.permute.xlu0 %3181
        %3183 = vrot.lane.b32.xlu0 %v3062, 64
        %v3184 = vpop.permute.xlu0 %3183
        %3185 = vrot.lane.b32.xlu0 %v3067, 64
        %v3186 = vpop.permute.xlu0 %3185
        %3187 = vrot.lane.b32.xlu0 %v3070, 64
        %v3188 = vpop.permute.xlu0 %3187
        %3189 = vrot.lane.b32.xlu0 %v3075, 64
        %v3190 = vpop.permute.xlu0 %3189
        %3191 = vrot.lane.b32.xlu0 %v3078, 64
        %v3192 = vpop.permute.xlu0 %3191
        %3193 = vrot.lane.b32.xlu0 %v3083, 64
        %v3194 = vpop.permute.xlu0 %3193
        %3195 = vrot.lane.b32.xlu0 %v3086, 64
        %v3196 = vpop.permute.xlu0 %3195
        %3197 = vrot.lane.b32.xlu0 %v3091, 64
        %v3198 = vpop.permute.xlu0 %3197
        %3199 = vrot.lane.b32.xlu0 %v3094, 64
        %v3200 = vpop.permute.xlu0 %3199
        %3201 = vrot.lane.b32.xlu0 %v3099, 64
        %v3202 = vpop.permute.xlu0 %3201
        %3203 = vrot.lane.b32.xlu0 %v3102, 64
        %v3204 = vpop.permute.xlu0 %3203
        %3205 = vrot.lane.b32.xlu0 %v3107, 64
        %v3206 = vpop.permute.xlu0 %3205
        %3207 = vrot.lane.b32.xlu0 %v3110, 64
        %v3208 = vpop.permute.xlu0 %3207
        %v3241 = vsel %vm964, %v1801, %v3146
        %v3242 = vsel %vm964, %v1804, %v3148
        %v3243 = vsel %vm964, %v1809, %v3150
        %v3244 = vsel %vm964, %v1812, %v3152
        %v3245 = vsel %vm964, %v1817, %v3154
        %v3246 = vsel %vm964, %v1820, %v3156
        %v3247 = vsel %vm964, %v1825, %v3158
        %v3248 = vsel %vm964, %v1828, %v3160
        %v3249 = vsel %vm964, %v1833, %v3162
        %v3250 = vsel %vm964, %v1836, %v3164
        %v3251 = vsel %vm964, %v1841, %v3166
        %v3252 = vsel %vm964, %v1844, %v3168
        %v3253 = vsel %vm964, %v1849, %v3170
        %v3254 = vsel %vm964, %v1852, %v3172
        %v3255 = vsel %vm964, %v1857, %v3174
        %v3256 = vsel %vm964, %v1860, %v3176
        %v3257 = vsel %vm964, %v1865, %v3178
        %v3258 = vsel %vm964, %v1868, %v3180
        %v3259 = vsel %vm964, %v1873, %v3182
        %v3260 = vsel %vm964, %v1876, %v3184
        %v3261 = vsel %vm964, %v1881, %v3186
        %v3262 = vsel %vm964, %v1884, %v3188
        %v3263 = vsel %vm964, %v1889, %v3190
        %v3264 = vsel %vm964, %v1892, %v3192
        %v3265 = vsel %vm964, %v1897, %v3194
        %v3266 = vsel %vm964, %v1900, %v3196
        %v3267 = vsel %vm964, %v1905, %v3198
        %v3268 = vsel %vm964, %v1908, %v3200
        %v3269 = vsel %vm964, %v1913, %v3202
        %v3270 = vsel %vm964, %v1916, %v3204
        %v3271 = vsel %vm964, %v1921, %v3206
        %v3272 = vsel %vm964, %v1924, %v3208
        %v3273 = vpack.c.bf16 %v3242, %v3241
        %v3274 = vpack.c.bf16 %v3244, %v3243
        %v3275 = vpack.c.bf16 %v3246, %v3245
        %v3276 = vpack.c.bf16 %v3248, %v3247
        %v3277 = vpack.c.bf16 %v3250, %v3249
        %v3278 = vpack.c.bf16 %v3252, %v3251
        %v3279 = vpack.c.bf16 %v3254, %v3253
        %v3280 = vpack.c.bf16 %v3256, %v3255
        %v3281 = vpack.c.bf16 %v3258, %v3257
        %v3282 = vpack.c.bf16 %v3260, %v3259
        %v3283 = vpack.c.bf16 %v3262, %v3261
        %v3284 = vpack.c.bf16 %v3264, %v3263
        %v3285 = vpack.c.bf16 %v3266, %v3265
        %v3286 = vpack.c.bf16 %v3268, %v3267
        %v3287 = vpack.c.bf16 %v3270, %v3269
        %v3288 = vpack.c.bf16 %v3272, %v3271
        %v3289 = vld [vmem:[#allocation7] sm:$0xf]
        %v3290 = vld [vmem:[#allocation7 + $0x4] sm:$0xf]
        %v3291 = vld [vmem:[#allocation7 + $0x8] sm:$0xf]
        %v3292 = vld [vmem:[#allocation7 + $0xc] sm:$0xf]
        %v3293 = vld [vmem:[#allocation7 + $0x10] sm:$0xf]
        %v3294 = vld [vmem:[#allocation7 + $0x14] sm:$0xf]
        %v3295 = vld [vmem:[#allocation7 + $0x18] sm:$0xf]
        %v3296 = vld [vmem:[#allocation7 + $0x1c] sm:$0xf]
        %v3297 = vld [vmem:[#allocation7 + $0x20] sm:$0xf]
        %v3298 = vld [vmem:[#allocation7 + $0x24] sm:$0xf]
        %v3299 = vld [vmem:[#allocation7 + $0x28] sm:$0xf]
        %v3300 = vld [vmem:[#allocation7 + $0x2c] sm:$0xf]
        %v3301 = vld [vmem:[#allocation7 + $0x30] sm:$0xf]
        %v3302 = vld [vmem:[#allocation7 + $0x34] sm:$0xf]
        %v3303 = vld [vmem:[#allocation7 + $0x38] sm:$0xf]
        %v3304 = vld [vmem:[#allocation7 + $0x3c] sm:$0xf]
        %v3305 = vld [vmem:[%s4] sm:$0x1]
        %v3307 = vlaneseq
        %v3308 = vshrl.u32 %v3307, 7
        %v3309 = vsub.s32 0, %v3308
        %v3310 = vrot.slane %v3305, %v3309
        %v3328 = vunpack.c.l.b16 %v3289
        %v3329 = vunpack.c.l.b16 %v3290
        %v3330 = vunpack.c.l.b16 %v3291
        %v3331 = vunpack.c.l.b16 %v3292
        %v3332 = vunpack.c.l.b16 %v3293
        %v3333 = vunpack.c.l.b16 %v3294
        %v3334 = vunpack.c.l.b16 %v3295
        %v3335 = vunpack.c.l.b16 %v3296
        %v3336 = vunpack.c.l.b16 %v3297
        %v3337 = vunpack.c.l.b16 %v3298
        %v3338 = vunpack.c.l.b16 %v3299
        %v3339 = vunpack.c.l.b16 %v3300
        %v3340 = vunpack.c.l.b16 %v3301
        %v3341 = vunpack.c.l.b16 %v3302
        %v3342 = vunpack.c.l.b16 %v3303
        %v3343 = vunpack.c.l.b16 %v3304
        %v3344 = vpack.c.b16 %v3329, %v3328
        %v3345 = vpack.c.b16 %v3331, %v3330
        %v3346 = vpack.c.b16 %v3333, %v3332
        %v3347 = vpack.c.b16 %v3335, %v3334
        %v3348 = vpack.c.b16 %v3337, %v3336
        %v3349 = vpack.c.b16 %v3339, %v3338
        %v3350 = vpack.c.b16 %v3341, %v3340
        %v3351 = vpack.c.b16 %v3343, %v3342
        %3360 = vmatprep.subr.bf16.mxu0 0
        %3361 = vmatpush1.bf16.msra.mxu0 %v3351
        %3362 = vmatprep.subr.bf16.mxu0 0
        %3363 = vmatpush1.bf16.msra.mxu0 %v3350
        %3364 = vmatprep.subr.bf16.mxu0 0
        %3365 = vmatpush1.bf16.msra.mxu0 %v3349
        %3366 = vmatprep.subr.bf16.mxu0 0
        %3367 = vmatpush1.bf16.msra.mxu0 %v3348
        %3368 = vmatprep.subr.bf16.mxu0 0
        %3369 = vmatpush1.bf16.msra.mxu0 %v3347
        %3370 = vmatprep.subr.bf16.mxu0 0
        %3371 = vmatpush1.bf16.msra.mxu0 %v3346
        %3372 = vmatprep.subr.bf16.mxu0 0
        %3373 = vmatpush1.bf16.msra.mxu0 %v3345
        %3374 = vmatprep.subr.bf16.mxu0 0
        %3375 = vmatpush1.bf16.msra.mxu0 %v3344
        %3376 = vmatprep.subr.bf16.mxu0 0
        %3377 = vmatpush2.bf16.msra.mxu0 0
        %3378 = vmatprep.subr.bf16.mxu0 0
        %3379 = vmatpush2.bf16.msra.mxu0 0
        %3380 = vmatprep.subr.bf16.mxu0 0
        %3381 = vmatpush2.bf16.msra.mxu0 0
        %3382 = vmatprep.subr.bf16.mxu0 0
        %3383 = vmatpush2.bf16.msra.mxu0 0
        %3384 = vmatprep.subr.bf16.mxu0 0
        %3385 = vmatpush2.bf16.msra.mxu0 0
        %3386 = vmatprep.subr.bf16.mxu0 0
        %3387 = vmatpush2.bf16.msra.mxu0 0
        %3388 = vmatprep.subr.bf16.mxu0 0
        %3389 = vmatpush2.bf16.msra.mxu0 0
        %3390 = vmatprep.subr.bf16.mxu0 0
        %3391 = vmatpush2.bf16.msra.mxu0 0
        %3392 = vmatprep.mubr.bf16.mxu0 0
        %3393 = vmatmul.mubr.bf16.gmra.mxu0 %v3273
        %v3394 = vpop.f32.mrf.mxu0
        %v3395 = vadd.f32 %v3310, %v3394
        %v3396 = vpop.f32.mrf.mxu0
        %v3397 = vpop.f32.mrf.mxu0
        %v3398 = vadd.f32 %v3310, %v3397
        %v3399 = vpop.f32.mrf.mxu0
        %3400 = vmatprep.mubr.bf16.mxu0 0
        %3401 = vmatmul.mubr.bf16.gmra.mxu0 %v3274
        %v3402 = vpop.f32.mrf.mxu0
        %v3403 = vadd.f32 %v3310, %v3402
        %v3404 = vpop.f32.mrf.mxu0
        %v3405 = vpop.f32.mrf.mxu0
        %v3406 = vadd.f32 %v3310, %v3405
        %v3407 = vpop.f32.mrf.mxu0
        %3408 = vmatprep.mubr.bf16.mxu0 0
        %3409 = vmatmul.mubr.bf16.gmra.mxu0 %v3275
        %v3410 = vpop.f32.mrf.mxu0
        %v3411 = vadd.f32 %v3310, %v3410
        %v3412 = vpop.f32.mrf.mxu0
        %v3413 = vpop.f32.mrf.mxu0
        %v3414 = vadd.f32 %v3310, %v3413
        %v3415 = vpop.f32.mrf.mxu0
        %3416 = vmatprep.mubr.bf16.mxu0 0
        %3417 = vmatmul.mubr.bf16.gmra.mxu0 %v3276
        %v3418 = vpop.f32.mrf.mxu0
        %v3419 = vadd.f32 %v3310, %v3418
        %v3420 = vpop.f32.mrf.mxu0
        %v3421 = vpop.f32.mrf.mxu0
        %v3422 = vadd.f32 %v3310, %v3421
        %v3423 = vpop.f32.mrf.mxu0
        %3424 = vmatprep.mubr.bf16.mxu0 0
        %3425 = vmatmul.mubr.bf16.gmra.mxu0 %v3277
        %v3426 = vpop.f32.mrf.mxu0
        %v3427 = vadd.f32 %v3310, %v3426
        %v3428 = vpop.f32.mrf.mxu0
        %v3429 = vpop.f32.mrf.mxu0
        %v3430 = vadd.f32 %v3310, %v3429
        %v3431 = vpop.f32.mrf.mxu0
        %3432 = vmatprep.mubr.bf16.mxu0 0
        %3433 = vmatmul.mubr.bf16.gmra.mxu0 %v3278
        %v3434 = vpop.f32.mrf.mxu0
        %v3435 = vadd.f32 %v3310, %v3434
        %v3436 = vpop.f32.mrf.mxu0
        %v3437 = vpop.f32.mrf.mxu0
        %v3438 = vadd.f32 %v3310, %v3437
        %v3439 = vpop.f32.mrf.mxu0
        %3440 = vmatprep.mubr.bf16.mxu0 0
        %3441 = vmatmul.mubr.bf16.gmra.mxu0 %v3279
        %v3442 = vpop.f32.mrf.mxu0
        %v3443 = vadd.f32 %v3310, %v3442
        %v3444 = vpop.f32.mrf.mxu0
        %v3445 = vpop.f32.mrf.mxu0
        %v3446 = vadd.f32 %v3310, %v3445
        %v3447 = vpop.f32.mrf.mxu0
        %3448 = vmatprep.mubr.bf16.mxu0 0
        %3449 = vmatmul.mubr.bf16.gmra.mxu0 %v3280
        %v3450 = vpop.f32.mrf.mxu0
        %v3451 = vadd.f32 %v3310, %v3450
        %v3452 = vpop.f32.mrf.mxu0
        %v3453 = vpop.f32.mrf.mxu0
        %v3454 = vadd.f32 %v3310, %v3453
        %v3455 = vpop.f32.mrf.mxu0
        %3456 = vmatprep.mubr.bf16.mxu0 0
        %3457 = vmatmul.mubr.bf16.gmra.mxu0 %v3281
        %v3458 = vpop.f32.mrf.mxu0
        %v3459 = vadd.f32 %v3310, %v3458
        %v3460 = vpop.f32.mrf.mxu0
        %v3461 = vpop.f32.mrf.mxu0
        %v3462 = vadd.f32 %v3310, %v3461
        %v3463 = vpop.f32.mrf.mxu0
        %3464 = vmatprep.mubr.bf16.mxu0 0
        %3465 = vmatmul.mubr.bf16.gmra.mxu0 %v3282
        %v3466 = vpop.f32.mrf.mxu0
        %v3467 = vadd.f32 %v3310, %v3466
        %v3468 = vpop.f32.mrf.mxu0
        %v3469 = vpop.f32.mrf.mxu0
        %v3470 = vadd.f32 %v3310, %v3469
        %v3471 = vpop.f32.mrf.mxu0
        %3472 = vmatprep.mubr.bf16.mxu0 0
        %3473 = vmatmul.mubr.bf16.gmra.mxu0 %v3283
        %v3474 = vpop.f32.mrf.mxu0
        %v3475 = vadd.f32 %v3310, %v3474
        %v3476 = vpop.f32.mrf.mxu0
        %v3477 = vpop.f32.mrf.mxu0
        %v3478 = vadd.f32 %v3310, %v3477
        %v3479 = vpop.f32.mrf.mxu0
        %3480 = vmatprep.mubr.bf16.mxu0 0
        %3481 = vmatmul.mubr.bf16.gmra.mxu0 %v3284
        %v3482 = vpop.f32.mrf.mxu0
        %v3483 = vadd.f32 %v3310, %v3482
        %v3484 = vpop.f32.mrf.mxu0
        %v3485 = vpop.f32.mrf.mxu0
        %v3486 = vadd.f32 %v3310, %v3485
        %v3487 = vpop.f32.mrf.mxu0
        %3488 = vmatprep.mubr.bf16.mxu0 0
        %3489 = vmatmul.mubr.bf16.gmra.mxu0 %v3285
        %v3490 = vpop.f32.mrf.mxu0
        %v3491 = vadd.f32 %v3310, %v3490
        %v3492 = vpop.f32.mrf.mxu0
        %v3493 = vpop.f32.mrf.mxu0
        %v3494 = vadd.f32 %v3310, %v3493
        %v3495 = vpop.f32.mrf.mxu0
        %3496 = vmatprep.mubr.bf16.mxu0 0
        %3497 = vmatmul.mubr.bf16.gmra.mxu0 %v3286
        %v3498 = vpop.f32.mrf.mxu0
        %v3499 = vadd.f32 %v3310, %v3498
        %v3500 = vpop.f32.mrf.mxu0
        %v3501 = vpop.f32.mrf.mxu0
        %v3502 = vadd.f32 %v3310, %v3501
        %v3503 = vpop.f32.mrf.mxu0
        %3504 = vmatprep.mubr.bf16.mxu0 0
        %3505 = vmatmul.mubr.bf16.gmra.mxu0 %v3287
        %v3506 = vpop.f32.mrf.mxu0
        %v3507 = vadd.f32 %v3310, %v3506
        %v3508 = vpop.f32.mrf.mxu0
        %v3509 = vpop.f32.mrf.mxu0
        %v3510 = vadd.f32 %v3310, %v3509
        %v3511 = vpop.f32.mrf.mxu0
        %3512 = vmatprep.mubr.bf16.mxu0 0
        %3513 = vmatmul.mubr.bf16.gmra.mxu0 %v3288
        %v3514 = vpop.f32.mrf.mxu0
        %v3515 = vadd.f32 %v3310, %v3514
        %v3516 = vpop.f32.mrf.mxu0
        %v3517 = vpop.f32.mrf.mxu0
        %v3518 = vadd.f32 %v3310, %v3517
        %v3519 = vpop.f32.mrf.mxu0
        %3520 = vdwg.mxu0
        %v3521 = vadd.f32 %v273, %v3395
        %v3522 = vadd.f32 %v274, %v3398
        %v3523 = vadd.f32 %v275, %v3403
        %v3524 = vadd.f32 %v276, %v3406
        %v3525 = vadd.f32 %v277, %v3411
        %v3526 = vadd.f32 %v278, %v3414
        %v3527 = vadd.f32 %v279, %v3419
        %v3528 = vadd.f32 %v280, %v3422
        %v3529 = vadd.f32 %v281, %v3427
        %v3530 = vadd.f32 %v282, %v3430
        %v3531 = vadd.f32 %v283, %v3435
        %v3532 = vadd.f32 %v284, %v3438
        %v3533 = vadd.f32 %v285, %v3443
        %v3534 = vadd.f32 %v286, %v3446
        %v3535 = vadd.f32 %v287, %v3451
        %v3536 = vadd.f32 %v288, %v3454
        %v3537 = vadd.f32 %v289, %v3459
        %v3538 = vadd.f32 %v290, %v3462
        %v3539 = vadd.f32 %v291, %v3467
        %v3540 = vadd.f32 %v292, %v3470
        %v3541 = vadd.f32 %v293, %v3475
        %v3542 = vadd.f32 %v294, %v3478
        %v3543 = vadd.f32 %v295, %v3483
        %v3544 = vadd.f32 %v296, %v3486
        %v3545 = vadd.f32 %v297, %v3491
        %v3546 = vadd.f32 %v298, %v3494
        %v3547 = vadd.f32 %v299, %v3499
        %v3548 = vadd.f32 %v300, %v3502
        %v3549 = vadd.f32 %v301, %v3507
        %v3550 = vadd.f32 %v302, %v3510
        %v3551 = vadd.f32 %v303, %v3515
        %v3552 = vadd.f32 %v304, %v3518
        %3553 = vst [vmem:[%s271] sm:$0xff] %v3521
        %3554 = vst [vmem:[%s271 + $0x8] sm:$0xff] %v3522
        %3555 = vst [vmem:[%s271 + $0x10] sm:$0xff] %v3523
        %3556 = vst [vmem:[%s271 + $0x18] sm:$0xff] %v3524
        %3557 = vst [vmem:[%s271 + $0x20] sm:$0xff] %v3525
        %3558 = vst [vmem:[%s271 + $0x28] sm:$0xff] %v3526
        %3559 = vst [vmem:[%s271 + $0x30] sm:$0xff] %v3527
        %3560 = vst [vmem:[%s271 + $0x38] sm:$0xff] %v3528
        %3561 = vst [vmem:[%s271 + $0x40] sm:$0xff] %v3529
        %3562 = vst [vmem:[%s271 + $0x48] sm:$0xff] %v3530
        %3563 = vst [vmem:[%s271 + $0x50] sm:$0xff] %v3531
        %3564 = vst [vmem:[%s271 + $0x58] sm:$0xff] %v3532
        %3565 = vst [vmem:[%s271 + $0x60] sm:$0xff] %v3533
        %3566 = vst [vmem:[%s271 + $0x68] sm:$0xff] %v3534
        %3567 = vst [vmem:[%s271 + $0x70] sm:$0xff] %v3535
        %3568 = vst [vmem:[%s271 + $0x78] sm:$0xff] %v3536
        %3569 = vst [vmem:[%s271 + $0x80] sm:$0xff] %v3537
        %3570 = vst [vmem:[%s271 + $0x88] sm:$0xff] %v3538
        %3571 = vst [vmem:[%s271 + $0x90] sm:$0xff] %v3539
        %3572 = vst [vmem:[%s271 + $0x98] sm:$0xff] %v3540
        %3573 = vst [vmem:[%s271 + $0xa0] sm:$0xff] %v3541
        %3574 = vst [vmem:[%s271 + $0xa8] sm:$0xff] %v3542
        %3575 = vst [vmem:[%s271 + $0xb0] sm:$0xff] %v3543
        %3576 = vst [vmem:[%s271 + $0xb8] sm:$0xff] %v3544
        %3577 = vst [vmem:[%s271 + $0xc0] sm:$0xff] %v3545
        %3578 = vst [vmem:[%s271 + $0xc8] sm:$0xff] %v3546
        %3579 = vst [vmem:[%s271 + $0xd0] sm:$0xff] %v3547
        %3580 = vst [vmem:[%s271 + $0xd8] sm:$0xff] %v3548
        %3581 = vst [vmem:[%s271 + $0xe0] sm:$0xff] %v3549
        %3582 = vst [vmem:[%s271 + $0xe8] sm:$0xff] %v3550
        %3583 = vst [vmem:[%s271 + $0xf0] sm:$0xff] %v3551
        %3584 = vst [vmem:[%s271 + $0xf8] sm:$0xff] %v3552
        %s3585 = sand.u32 %s141, 1
        %s3586 = scalar_lea.sflag [#allocation4], %s3585
        %s3587 = sand.u32 %s141, 1
        %s3588 = smul.addr %s3587, 256
        %s3589 = scalar_lea.vmem [#allocation8], %s3588
        // Predicated region
        $region53: #{_lambda_.1} parent=39 // pred_check
          %p3590 = pneg %p151
        $region54: #{_lambda_.1} parent=39 // pred_check_branch
          %3592 = sbr.rel (%p3590) target = $region56
        $region55: #{_lambda_.1} parent=39 // pred_region
          %s3594 = ssub.s32 4096, 4096
          %3595 = vsyncadd %s3586, %s3594
          %s3596 = smul.addr %s23, 32
          %s3597 = smul.addr %s3596, 128
          %s3598 = scalar_lea.hbm %s5, %s3597
          %s3599 = sshll.u32 %s3589, 4
          %s3600 = int_to_ptr.vmem [resolvable:$true] %s3599
          %3605 = dma.vmem_to_hbm [thread:$0]  %s3600, 4096, %s3598, %s3586, 128, 128, 8
        $region56: #{_lambda_.1} parent=39 // pred_fallthru
          _
      $region40: #{_lambda_.1} parent=5 // pred_fallthru
        _
      %p3606 = scmp.le.s32.totalorder 2, %s18
      // Predicated region
      $region57: #{_lambda_.1} parent=5 // pred_check
        %p3607 = pneg %p3606
      $region58: #{_lambda_.1} parent=5 // pred_check_branch
        %3609 = sbr.rel (%p3607) target = $region60
      $region59: #{_lambda_.1} parent=5 // pred_region
        %s3610 = ssub.s32 %s18, 2
        // Predicated region
        $region61: #{_lambda_.1} parent=59 // pred_check
          %p3611 = pneg %p157
        $region62: #{_lambda_.1} parent=59 // pred_check_branch
          %3613 = sbr.rel (%p3611) target = $region64
        $region63: #{_lambda_.1} parent=59 // pred_region
          %s3614 = sand.u32 %s142, 1
          %s3615 = scalar_lea.sflag [#allocation4], %s3614
          %s3616 = sand.u32 %s142, 1
          %s3617 = smul.addr %s3616, 256
          %s3618 = scalar_lea.vmem [#allocation8], %s3617
          %3619 = dma.done %s3615, 4096
        $region64: #{_lambda_.1} parent=59 // pred_fallthru
          _
      $region60: #{_lambda_.1} parent=5 // pred_fallthru
        _
    $region6: #{_lambda_.1} parent=1 // loop_footer
      %s22 = sadd.s32 1, %s18
    $region7: #{_lambda_.1} parent=1 // loop_footer_branch
      %17 = sbr.rel target = $region3
    $region8: #{_lambda_.1} parent=1 // loop_exit
      _
    %3620 = vsyncpa [#allocation3], 1
    %s3621 = scalar_lea.sflag [#allocation3], 1
    %3622 = vsyncpa %s3621, 1
    %3623 = vsyncpa [#allocation6], 1
    %3624 = vsyncpa [#allocation4], 1
    %s3625 = scalar_lea.sflag [#allocation4], 1
    %3626 = vsyncpa %s3625, 1

</llo_original>
